<compile_context>
chip_gen: v7x
topology: tpu7x:2x2x1
jax: 0.10.0
libtpu: 0.0.40
codegen_flags: <defaults>
</compile_context>

<pallas_src>
import jax
import jax.numpy as jnp
from jax.experimental import pallas as pl
from jax.experimental.pallas import tpu as pltpu

N, CIN, H, W = 1, 192, 14, 14
COUT, KH, KW = 48, 3, 3
PAD = 1
HP, WP = H + 2 * PAD, W + 2 * PAD      # 16, 16  (padded spatial grid)
HWP = HP * WP                          # 256     (lane-dense output width)
TAPS = KH * KW                         # 9
TAIL = (KH - 1) * WP + (KW - 1)        # 34: max lane offset of a tap slice
# Single-pad target: (CIN, ROWS_EXT, WP); after a free contiguous reshape this
# gives LANES >= HWP + TAIL zero-tailed lanes, so every tap is a static,
# in-bounds lane slice.  Tail reads (and row-wrapped reads) only ever feed
# output rows/cols >= 14 of the padded 16x16 grid, which the wrapper crops.
ROWS_EXT = -(-(HWP + TAIL) // WP)      # 19
LANES = ROWS_EXT * WP                  # 304
assert LANES >= HWP + TAIL

K_IM2COL = TAPS * CIN                  # 1728


def conv3x3_kernel(x_ref, w_ref, o_ref, col_ref):
    # x_ref:   (CIN, LANES)      bf16 zero-padded image, spatial dims on lanes
    # w_ref:   (COUT, TAPS*CIN)  bf16, w_ref[o, t*CIN + c] == W[o, c, kh, kw]
    # o_ref:   (COUT, HWP)       f32 conv output on the padded 16x16 grid
    # col_ref: (TAPS*CIN, HWP)   bf16 VMEM im2col scratch (~0.85 MB)
    #
    # Build the im2col matrix once (pay the unaligned lane shift one time per
    # tap, store immediately), then a single K=1728 MXU contraction with f32
    # accumulation — no per-tap matmul fill/drain, no VPU accumulation adds.
    for kh in range(KH):
        for kw in range(KW):
            t = kh * KW + kw
            off = kh * WP + kw                          # static lane offset
            col_ref[t * CIN:(t + 1) * CIN, :] = x_ref[:, off:off + HWP]
    o_ref[...] = jnp.dot(w_ref[...], col_ref[...],
                         preferred_element_type=jnp.float32)


def prepare_weight(weight_oihw):
    """(COUT, CIN, KH, KW) f32 -> (COUT, TAPS*CIN) bf16, tap-major.

    Done ONCE at parameter-prep time (hoisted out of the per-call path)."""
    w = jnp.transpose(weight_oihw, (0, 2, 3, 1))        # (COUT, KH, KW, CIN)
    return w.reshape(COUT, K_IM2COL).astype(jnp.bfloat16)


@jax.jit
def conv2d_3x3(x_nchw, w_taps):
    """x_nchw: (1, CIN, H, W) f32; w_taps: prepare_weight(weight), (48, 1728) bf16."""
    # ONE XLA pad: (192,14,14) -> (192,19,16); rows 16..18 are the zero tail.
    # The reshape to (192, 304) lanes is contiguous (free).
    x_pad = jnp.pad(x_nchw.reshape(CIN, H, W).astype(jnp.bfloat16),
                    ((0, 0), (PAD, ROWS_EXT - H - PAD), (PAD, PAD)))
    x_wide = x_pad.reshape(CIN, LANES)

    out_pad = pl.pallas_call(
        conv3x3_kernel,
        out_shape=jax.ShapeDtypeStruct((COUT, HWP), jnp.float32),
        in_specs=[
            pl.BlockSpec(memory_space=pltpu.MemorySpace.VMEM),
            pl.BlockSpec(memory_space=pltpu.MemorySpace.VMEM),
        ],
        out_specs=pl.BlockSpec(memory_space=pltpu.MemorySpace.VMEM),
        scratch_shapes=[pltpu.VMEM((K_IM2COL, HWP), jnp.bfloat16)],
        cost_estimate=pl.CostEstimate(
            flops=2 * COUT * K_IM2COL * HWP,
            transcendentals=0,
            bytes_accessed=(CIN * LANES * 2            # x_wide (bf16)
                            + COUT * K_IM2COL * 2      # w_taps (bf16)
                            + COUT * HWP * 4),         # out (f32)
        ),
    )(x_wide, w_taps)

    # Lane-dense (48, 256) -> crop the padded 16x16 grid back to 14x14.
    # NOTE: this crop is exactly what makes the TAIL / row-wrap trick correct —
    # every output element that read tail or row-wrapped lanes is discarded.
    return out_pad.reshape(COUT, HP, WP)[:, :H, :W].reshape(N, COUT, H, W)


if __name__ == "__main__":
    key = jax.random.PRNGKey(0)
    kx, kw = jax.random.split(key)
    # Deterministic synthetic input & weights (shapes from the module).
    x = jax.random.normal(kx, (N, CIN, H, W), dtype=jnp.float32)
    weight = jax.random.normal(kw, (COUT, CIN, KH, KW), dtype=jnp.float32) * 0.05

    # Parameter prep happens once, outside the per-call path.
    w_taps = jax.block_until_ready(prepare_weight(weight))

    y = conv2d_3x3(x, w_taps)
    jax.block_until_ready(y)

    # Sanity check against XLA's conv in full f32 (same semantics as
    # nn.Conv2d(192, 48, 3, stride=1, padding=1, bias=False)).  Tolerance is
    # sized for bf16 inputs with f32 accumulation over K=1728.
    y_ref = jax.lax.conv_general_dilated(
        x, weight, window_strides=(1, 1), padding=((PAD, PAD), (PAD, PAD)),
        dimension_numbers=("NCHW", "OIHW", "NCHW"),
        precision=jax.lax.Precision.HIGHEST)
    assert y.shape == (N, COUT, H, W)
    err = float(jnp.max(jnp.abs(y - y_ref)))
    assert err < 6e-2, f"max abs err {err}"
    print("KERNEL_OK")
</pallas_src>

<mosaic_0001>
module attributes {stable_mosaic.version = 11 : i64} {
  func.func @conv3x3_kernel(%arg0: memref<192x304xbf16, #tpu.memory_space<vmem>>, %arg1: memref<48x1728xbf16, #tpu.memory_space<vmem>>, %arg2: memref<48x256xf32, #tpu.memory_space<vmem>>, %arg3: memref<1728x256xbf16, #tpu.memory_space<vmem>>) attributes {dimension_semantics = [], scalar_prefetch = 0 : i64, scratch_operands = 1 : i64, tpu.core_type = #tpu.core_type<tc>} {
    %c0 = arith.constant 0 : index
    %c0_0 = arith.constant 0 : index
    %0 = vector.load %arg0[%c0, %c0_0] : memref<192x304xbf16, #tpu.memory_space<vmem>>, vector<192x256xbf16>
    %c0_1 = arith.constant 0 : index
    %c0_2 = arith.constant 0 : index
    %1 = vector.load %arg3[%c0_1, %c0_2] : memref<1728x256xbf16, #tpu.memory_space<vmem>>, vector<192x256xbf16>
    tpu.vector_store %arg3[%c0_1, %c0_2], %0 {strides = array<i32>} : memref<1728x256xbf16, #tpu.memory_space<vmem>>, vector<192x256xbf16>,
    %c0_3 = arith.constant 0 : index
    %c1 = arith.constant 1 : index
    %2 = vector.load %arg0[%c0_3, %c1] : memref<192x304xbf16, #tpu.memory_space<vmem>>, vector<192x256xbf16>
    %c192 = arith.constant 192 : index
    %c0_4 = arith.constant 0 : index
    %3 = vector.load %arg3[%c192, %c0_4] : memref<1728x256xbf16, #tpu.memory_space<vmem>>, vector<192x256xbf16>
    tpu.vector_store %arg3[%c192, %c0_4], %2 {strides = array<i32>} : memref<1728x256xbf16, #tpu.memory_space<vmem>>, vector<192x256xbf16>,
    %c0_5 = arith.constant 0 : index
    %c2 = arith.constant 2 : index
    %4 = vector.load %arg0[%c0_5, %c2] : memref<192x304xbf16, #tpu.memory_space<vmem>>, vector<192x256xbf16>
    %c384 = arith.constant 384 : index
    %c0_6 = arith.constant 0 : index
    %5 = vector.load %arg3[%c384, %c0_6] : memref<1728x256xbf16, #tpu.memory_space<vmem>>, vector<192x256xbf16>
    tpu.vector_store %arg3[%c384, %c0_6], %4 {strides = array<i32>} : memref<1728x256xbf16, #tpu.memory_space<vmem>>, vector<192x256xbf16>,
    %c0_7 = arith.constant 0 : index
    %c16 = arith.constant 16 : index
    %6 = vector.load %arg0[%c0_7, %c16] : memref<192x304xbf16, #tpu.memory_space<vmem>>, vector<192x256xbf16>
    %c576 = arith.constant 576 : index
    %c0_8 = arith.constant 0 : index
    %7 = vector.load %arg3[%c576, %c0_8] : memref<1728x256xbf16, #tpu.memory_space<vmem>>, vector<192x256xbf16>
    tpu.vector_store %arg3[%c576, %c0_8], %6 {strides = array<i32>} : memref<1728x256xbf16, #tpu.memory_space<vmem>>, vector<192x256xbf16>,
    %c0_9 = arith.constant 0 : index
    %c17 = arith.constant 17 : index
    %8 = vector.load %arg0[%c0_9, %c17] : memref<192x304xbf16, #tpu.memory_space<vmem>>, vector<192x256xbf16>
    %c768 = arith.constant 768 : index
    %c0_10 = arith.constant 0 : index
    %9 = vector.load %arg3[%c768, %c0_10] : memref<1728x256xbf16, #tpu.memory_space<vmem>>, vector<192x256xbf16>
    tpu.vector_store %arg3[%c768, %c0_10], %8 {strides = array<i32>} : memref<1728x256xbf16, #tpu.memory_space<vmem>>, vector<192x256xbf16>,
    %c0_11 = arith.constant 0 : index
    %c18 = arith.constant 18 : index
    %10 = vector.load %arg0[%c0_11, %c18] : memref<192x304xbf16, #tpu.memory_space<vmem>>, vector<192x256xbf16>
    %c960 = arith.constant 960 : index
    %c0_12 = arith.constant 0 : index
    %11 = vector.load %arg3[%c960, %c0_12] : memref<1728x256xbf16, #tpu.memory_space<vmem>>, vector<192x256xbf16>
    tpu.vector_store %arg3[%c960, %c0_12], %10 {strides = array<i32>} : memref<1728x256xbf16, #tpu.memory_space<vmem>>, vector<192x256xbf16>,
    %c0_13 = arith.constant 0 : index
    %c32 = arith.constant 32 : index
    %12 = vector.load %arg0[%c0_13, %c32] : memref<192x304xbf16, #tpu.memory_space<vmem>>, vector<192x256xbf16>
    %c1152 = arith.constant 1152 : index
    %c0_14 = arith.constant 0 : index
    %13 = vector.load %arg3[%c1152, %c0_14] : memref<1728x256xbf16, #tpu.memory_space<vmem>>, vector<192x256xbf16>
    tpu.vector_store %arg3[%c1152, %c0_14], %12 {strides = array<i32>} : memref<1728x256xbf16, #tpu.memory_space<vmem>>, vector<192x256xbf16>,
    %c0_15 = arith.constant 0 : index
    %c33 = arith.constant 33 : index
    %14 = vector.load %arg0[%c0_15, %c33] : memref<192x304xbf16, #tpu.memory_space<vmem>>, vector<192x256xbf16>
    %c1344 = arith.constant 1344 : index
    %c0_16 = arith.constant 0 : index
    %15 = vector.load %arg3[%c1344, %c0_16] : memref<1728x256xbf16, #tpu.memory_space<vmem>>, vector<192x256xbf16>
    tpu.vector_store %arg3[%c1344, %c0_16], %14 {strides = array<i32>} : memref<1728x256xbf16, #tpu.memory_space<vmem>>, vector<192x256xbf16>,
    %c0_17 = arith.constant 0 : index
    %c34 = arith.constant 34 : index
    %16 = vector.load %arg0[%c0_17, %c34] : memref<192x304xbf16, #tpu.memory_space<vmem>>, vector<192x256xbf16>
    %c1536 = arith.constant 1536 : index
    %c0_18 = arith.constant 0 : index
    %17 = vector.load %arg3[%c1536, %c0_18] : memref<1728x256xbf16, #tpu.memory_space<vmem>>, vector<192x256xbf16>
    tpu.vector_store %arg3[%c1536, %c0_18], %16 {strides = array<i32>} : memref<1728x256xbf16, #tpu.memory_space<vmem>>, vector<192x256xbf16>,
    %c0_19 = arith.constant 0 : index
    %c0_20 = arith.constant 0 : index
    %18 = vector.load %arg1[%c0_19, %c0_20] : memref<48x1728xbf16, #tpu.memory_space<vmem>>, vector<48x1728xbf16>
    %c0_21 = arith.constant 0 : index
    %c0_22 = arith.constant 0 : index
    %19 = vector.load %arg3[%c0_21, %c0_22] : memref<1728x256xbf16, #tpu.memory_space<vmem>>, vector<1728x256xbf16>
    %cst = arith.constant dense<0.000000e+00> : vector<48x256xf32>
    %20 = tpu.matmul %18, %19, %cst {dimension_numbers = #tpu.dot_dimension_numbers<[1], [0], [0], [1], [0, 0, 1, 1], [], []>} : vector<48x1728xbf16>, vector<1728x256xbf16>, vector<48x256xf32> -> vector<48x256xf32>
    %c0_23 = arith.constant 0 : index
    %c0_24 = arith.constant 0 : index
    %21 = vector.load %arg2[%c0_23, %c0_24] : memref<48x256xf32, #tpu.memory_space<vmem>>, vector<48x256xf32>
    tpu.vector_store %arg2[%c0_23, %c0_24], %20 {strides = array<i32>} : memref<48x256xf32, #tpu.memory_space<vmem>>, vector<48x256xf32>,
    return
  }
}

</mosaic_0001>

<llo_original>
// kernel: conv2d_3x3.1
$region0: #{conv2d_3x3.1}
  #allocation0 [shape = 'u32[]', space=smem, size = 0x4, offset = 0x4, fixed_abs, tag = 'smem constant byte address 0x4 - core index']
  #allocation1 [shape = 'u32[144,128]{1,0:T(1,128)}', space=vmem, size = 0x12000, scoped, tag = 'internal scratch']
  #allocation2 [shape = 'bf16[1728,256]{1,0:T(16,128)(2,1)}', space=vmem, size = 0xd8000, scoped, tag = 'scratch operand']
  %s0 = inlined_call_operand.vmem [shape: bf16[192,304], index: 0, kind: input, shape index: {}]
  %s1 = inlined_call_operand.vmem [shape: bf16[48,1728], index: 1, kind: input, shape index: {}]
  %s2 = inlined_call_operand.vmem [shape: f32[48,256], index: 2, kind: output, shape index: {}]
  %s3 = sld [smem:[#allocation0]]
  $region18: #{conv2d_3x3.1} parent=0
    _
  %s5 = ssub.s32 1, %s3
  %s6 = scalar_select 0, %s5, %s3
  // Predicated region
  $region2: #{conv2d_3x3.1} parent=0 // pred_check
    _
  $region3: #{conv2d_3x3.1} parent=0 // pred_check_branch
    %8 = sbr.rel (0) target = $region5
  $region4: #{conv2d_3x3.1} parent=0 // pred_region
    _
  $region5: #{conv2d_3x3.1} parent=0 // pred_fallthru
    _
  // Predicated region
  $region6: #{conv2d_3x3.1} parent=0 // pred_check
    _
  $region7: #{conv2d_3x3.1} parent=0 // pred_check_branch
    %10 = sbr.rel (0) target = $region9
  $region8: #{conv2d_3x3.1} parent=0 // pred_region
    _
  $region9: #{conv2d_3x3.1} parent=0 // pred_fallthru
    _
  %v12 = vld [vmem:[%s0] sm:$0xff]
  %v13 = vld [vmem:[%s0 + $0xc] sm:$0xff]
  %v14 = vld [vmem:[%s0 + $0x18] sm:$0xff]
  %v15 = vld [vmem:[%s0 + $0x24] sm:$0xff]
  %v16 = vld [vmem:[%s0 + $0x30] sm:$0xff]
  %v17 = vld [vmem:[%s0 + $0x3c] sm:$0xff]
  %v18 = vld [vmem:[%s0 + $0x48] sm:$0xff]
  %v19 = vld [vmem:[%s0 + $0x54] sm:$0xff]
  %v20 = vld [vmem:[%s0 + $0x60] sm:$0xff]
  %v21 = vld [vmem:[%s0 + $0x6c] sm:$0xff]
  %v22 = vld [vmem:[%s0 + $0x78] sm:$0xff]
  %v23 = vld [vmem:[%s0 + $0x84] sm:$0xff]
  %v24 = vld [vmem:[%s0 + $0x90] sm:$0xff]
  %v25 = vld [vmem:[%s0 + $0x9c] sm:$0xff]
  %v26 = vld [vmem:[%s0 + $0xa8] sm:$0xff]
  %v27 = vld [vmem:[%s0 + $0xb4] sm:$0xff]
  %v28 = vld [vmem:[%s0 + $0xc0] sm:$0xff]
  %v29 = vld [vmem:[%s0 + $0xcc] sm:$0xff]
  %v30 = vld [vmem:[%s0 + $0xd8] sm:$0xff]
  %v31 = vld [vmem:[%s0 + $0xe4] sm:$0xff]
  %v32 = vld [vmem:[%s0 + $0xf0] sm:$0xff]
  %v33 = vld [vmem:[%s0 + $0xfc] sm:$0xff]
  %v34 = vld [vmem:[%s0 + $0x108] sm:$0xff]
  %v35 = vld [vmem:[%s0 + $0x114] sm:$0xff]
  %v60 = vunpack.c.l.b16 %v12
  %v61 = vunpack.c.h.b16 %v12
  %v62 = vunpack.c.l.b16 %v13
  %v63 = vunpack.c.h.b16 %v13
  %v64 = vunpack.c.l.b16 %v14
  %v65 = vunpack.c.h.b16 %v14
  %v66 = vunpack.c.l.b16 %v15
  %v67 = vunpack.c.h.b16 %v15
  %v68 = vunpack.c.l.b16 %v16
  %v69 = vunpack.c.h.b16 %v16
  %v70 = vunpack.c.l.b16 %v17
  %v71 = vunpack.c.h.b16 %v17
  %v72 = vunpack.c.l.b16 %v18
  %v73 = vunpack.c.h.b16 %v18
  %v74 = vunpack.c.l.b16 %v19
  %v75 = vunpack.c.h.b16 %v19
  %v76 = vunpack.c.l.b16 %v20
  %v77 = vunpack.c.h.b16 %v20
  %v78 = vunpack.c.l.b16 %v21
  %v79 = vunpack.c.h.b16 %v21
  %v80 = vunpack.c.l.b16 %v22
  %v81 = vunpack.c.h.b16 %v22
  %v82 = vunpack.c.l.b16 %v23
  %v83 = vunpack.c.h.b16 %v23
  %v84 = vunpack.c.l.b16 %v24
  %v85 = vunpack.c.h.b16 %v24
  %v86 = vunpack.c.l.b16 %v25
  %v87 = vunpack.c.h.b16 %v25
  %v88 = vunpack.c.l.b16 %v26
  %v89 = vunpack.c.h.b16 %v26
  %v90 = vunpack.c.l.b16 %v27
  %v91 = vunpack.c.h.b16 %v27
  %v92 = vunpack.c.l.b16 %v28
  %v93 = vunpack.c.h.b16 %v28
  %v94 = vunpack.c.l.b16 %v29
  %v95 = vunpack.c.h.b16 %v29
  %v96 = vunpack.c.l.b16 %v30
  %v97 = vunpack.c.h.b16 %v30
  %v98 = vunpack.c.l.b16 %v31
  %v99 = vunpack.c.h.b16 %v31
  %v100 = vunpack.c.l.b16 %v32
  %v101 = vunpack.c.h.b16 %v32
  %v102 = vunpack.c.l.b16 %v33
  %v103 = vunpack.c.h.b16 %v33
  %v104 = vunpack.c.l.b16 %v34
  %v105 = vunpack.c.h.b16 %v34
  %v106 = vunpack.c.l.b16 %v35
  %v107 = vunpack.c.h.b16 %v35
  %v108 = vpack.c.b16 %v62, %v60
  %v109 = vpack.c.b16 %v63, %v61
  %v110 = vpack.c.b16 %v66, %v64
  %v111 = vpack.c.b16 %v67, %v65
  %v112 = vpack.c.b16 %v70, %v68
  %v113 = vpack.c.b16 %v71, %v69
  %v114 = vpack.c.b16 %v74, %v72
  %v115 = vpack.c.b16 %v75, %v73
  %v116 = vpack.c.b16 %v78, %v76
  %v117 = vpack.c.b16 %v79, %v77
  %v118 = vpack.c.b16 %v82, %v80
  %v119 = vpack.c.b16 %v83, %v81
  %v120 = vpack.c.b16 %v86, %v84
  %v121 = vpack.c.b16 %v87, %v85
  %v122 = vpack.c.b16 %v90, %v88
  %v123 = vpack.c.b16 %v91, %v89
  %v124 = vpack.c.b16 %v94, %v92
  %v125 = vpack.c.b16 %v95, %v93
  %v126 = vpack.c.b16 %v98, %v96
  %v127 = vpack.c.b16 %v99, %v97
  %v128 = vpack.c.b16 %v102, %v100
  %v129 = vpack.c.b16 %v103, %v101
  %v130 = vpack.c.b16 %v106, %v104
  %v131 = vpack.c.b16 %v107, %v105
  %156 = vst [vmem:[#allocation2] sm:$0xff] %v108
  %157 = vst [vmem:[#allocation2 + $0x8] sm:$0xff] %v109
  %158 = vst [vmem:[#allocation2 + $0x10] sm:$0xff] %v110
  %159 = vst [vmem:[#allocation2 + $0x18] sm:$0xff] %v111
  %160 = vst [vmem:[#allocation2 + $0x20] sm:$0xff] %v112
  %161 = vst [vmem:[#allocation2 + $0x28] sm:$0xff] %v113
  %162 = vst [vmem:[#allocation2 + $0x30] sm:$0xff] %v114
  %163 = vst [vmem:[#allocation2 + $0x38] sm:$0xff] %v115
  %164 = vst [vmem:[#allocation2 + $0x40] sm:$0xff] %v116
  %165 = vst [vmem:[#allocation2 + $0x48] sm:$0xff] %v117
  %166 = vst [vmem:[#allocation2 + $0x50] sm:$0xff] %v118
  %167 = vst [vmem:[#allocation2 + $0x58] sm:$0xff] %v119
  %168 = vst [vmem:[#allocation2 + $0x60] sm:$0xff] %v120
  %169 = vst [vmem:[#allocation2 + $0x68] sm:$0xff] %v121
  %170 = vst [vmem:[#allocation2 + $0x70] sm:$0xff] %v122
  %171 = vst [vmem:[#allocation2 + $0x78] sm:$0xff] %v123
  %172 = vst [vmem:[#allocation2 + $0x80] sm:$0xff] %v124
  %173 = vst [vmem:[#allocation2 + $0x88] sm:$0xff] %v125
  %174 = vst [vmem:[#allocation2 + $0x90] sm:$0xff] %v126
  %175 = vst [vmem:[#allocation2 + $0x98] sm:$0xff] %v127
  %176 = vst [vmem:[#allocation2 + $0xa0] sm:$0xff] %v128
  %177 = vst [vmem:[#allocation2 + $0xa8] sm:$0xff] %v129
  %178 = vst [vmem:[#allocation2 + $0xb0] sm:$0xff] %v130
  %179 = vst [vmem:[#allocation2 + $0xb8] sm:$0xff] %v131
  %v180 = vld [vmem:[%s0] sm:$0xff]
  %v181 = vld [vmem:[%s0 + $0x8] sm:$0xf]
  %v182 = vld [vmem:[%s0 + $0xc] sm:$0xff]
  %v183 = vld [vmem:[%s0 + $0x14] sm:$0xf]
  %v184 = vld [vmem:[%s0 + $0x18] sm:$0xff]
  %v185 = vld [vmem:[%s0 + $0x20] sm:$0xf]
  %v186 = vld [vmem:[%s0 + $0x24] sm:$0xff]
  %v187 = vld [vmem:[%s0 + $0x2c] sm:$0xf]
  %v188 = vld [vmem:[%s0 + $0x30] sm:$0xff]
  %v189 = vld [vmem:[%s0 + $0x38] sm:$0xf]
  %v190 = vld [vmem:[%s0 + $0x3c] sm:$0xff]
  %v191 = vld [vmem:[%s0 + $0x44] sm:$0xf]
  %v192 = vld [vmem:[%s0 + $0x48] sm:$0xff]
  %v193 = vld [vmem:[%s0 + $0x50] sm:$0xf]
  %v194 = vld [vmem:[%s0 + $0x54] sm:$0xff]
  %v195 = vld [vmem:[%s0 + $0x5c] sm:$0xf]
  %v196 = vld [vmem:[%s0 + $0x60] sm:$0xff]
  %v197 = vld [vmem:[%s0 + $0x68] sm:$0xf]
  %v198 = vld [vmem:[%s0 + $0x6c] sm:$0xff]
  %v199 = vld [vmem:[%s0 + $0x74] sm:$0xf]
  %v200 = vld [vmem:[%s0 + $0x78] sm:$0xff]
  %v201 = vld [vmem:[%s0 + $0x80] sm:$0xf]
  %v202 = vld [vmem:[%s0 + $0x84] sm:$0xff]
  %v203 = vld [vmem:[%s0 + $0x8c] sm:$0xf]
  %v204 = vld [vmem:[%s0 + $0x90] sm:$0xff]
  %v205 = vld [vmem:[%s0 + $0x98] sm:$0xf]
  %v206 = vld [vmem:[%s0 + $0x9c] sm:$0xff]
  %v207 = vld [vmem:[%s0 + $0xa4] sm:$0xf]
  %v208 = vld [vmem:[%s0 + $0xa8] sm:$0xff]
  %v209 = vld [vmem:[%s0 + $0xb0] sm:$0xf]
  %v210 = vld [vmem:[%s0 + $0xb4] sm:$0xff]
  %v211 = vld [vmem:[%s0 + $0xbc] sm:$0xf]
  %v212 = vld [vmem:[%s0 + $0xc0] sm:$0xff]
  %v213 = vld [vmem:[%s0 + $0xc8] sm:$0xf]
  %v214 = vld [vmem:[%s0 + $0xcc] sm:$0xff]
  %v215 = vld [vmem:[%s0 + $0xd4] sm:$0xf]
  %v216 = vld [vmem:[%s0 + $0xd8] sm:$0xff]
  %v217 = vld [vmem:[%s0 + $0xe0] sm:$0xf]
  %v218 = vld [vmem:[%s0 + $0xe4] sm:$0xff]
  %v219 = vld [vmem:[%s0 + $0xec] sm:$0xf]
  %v220 = vld [vmem:[%s0 + $0xf0] sm:$0xff]
  %v221 = vld [vmem:[%s0 + $0xf8] sm:$0xf]
  %v222 = vld [vmem:[%s0 + $0xfc] sm:$0xff]
  %v223 = vld [vmem:[%s0 + $0x104] sm:$0xf]
  %v224 = vld [vmem:[%s0 + $0x108] sm:$0xff]
  %v225 = vld [vmem:[%s0 + $0x110] sm:$0xf]
  %v226 = vld [vmem:[%s0 + $0x114] sm:$0xff]
  %v227 = vld [vmem:[%s0 + $0x11c] sm:$0xf]
  %v276 = vunpack.c.l.b16 %v180
  %v277 = vunpack.c.h.b16 %v180
  %v278 = vunpack.c.l.b16 %v181
  %v279 = vunpack.c.l.b16 %v182
  %v280 = vunpack.c.h.b16 %v182
  %v281 = vunpack.c.l.b16 %v183
  %v282 = vunpack.c.l.b16 %v184
  %v283 = vunpack.c.h.b16 %v184
  %v284 = vunpack.c.l.b16 %v185
  %v285 = vunpack.c.l.b16 %v186
  %v286 = vunpack.c.h.b16 %v186
  %v287 = vunpack.c.l.b16 %v187
  %v288 = vunpack.c.l.b16 %v188
  %v289 = vunpack.c.h.b16 %v188
  %v290 = vunpack.c.l.b16 %v189
  %v291 = vunpack.c.l.b16 %v190
  %v292 = vunpack.c.h.b16 %v190
  %v293 = vunpack.c.l.b16 %v191
  %v294 = vunpack.c.l.b16 %v192
  %v295 = vunpack.c.h.b16 %v192
  %v296 = vunpack.c.l.b16 %v193
  %v297 = vunpack.c.l.b16 %v194
  %v298 = vunpack.c.h.b16 %v194
  %v299 = vunpack.c.l.b16 %v195
  %v300 = vunpack.c.l.b16 %v196
  %v301 = vunpack.c.h.b16 %v196
  %v302 = vunpack.c.l.b16 %v197
  %v303 = vunpack.c.l.b16 %v198
  %v304 = vunpack.c.h.b16 %v198
  %v305 = vunpack.c.l.b16 %v199
  %v306 = vunpack.c.l.b16 %v200
  %v307 = vunpack.c.h.b16 %v200
  %v308 = vunpack.c.l.b16 %v201
  %v309 = vunpack.c.l.b16 %v202
  %v310 = vunpack.c.h.b16 %v202
  %v311 = vunpack.c.l.b16 %v203
  %v312 = vunpack.c.l.b16 %v204
  %v313 = vunpack.c.h.b16 %v204
  %v314 = vunpack.c.l.b16 %v205
  %v315 = vunpack.c.l.b16 %v206
  %v316 = vunpack.c.h.b16 %v206
  %v317 = vunpack.c.l.b16 %v207
  %v318 = vunpack.c.l.b16 %v208
  %v319 = vunpack.c.h.b16 %v208
  %v320 = vunpack.c.l.b16 %v209
  %v321 = vunpack.c.l.b16 %v210
  %v322 = vunpack.c.h.b16 %v210
  %v323 = vunpack.c.l.b16 %v211
  %v324 = vunpack.c.l.b16 %v212
  %v325 = vunpack.c.h.b16 %v212
  %v326 = vunpack.c.l.b16 %v213
  %v327 = vunpack.c.l.b16 %v214
  %v328 = vunpack.c.h.b16 %v214
  %v329 = vunpack.c.l.b16 %v215
  %v330 = vunpack.c.l.b16 %v216
  %v331 = vunpack.c.h.b16 %v216
  %v332 = vunpack.c.l.b16 %v217
  %v333 = vunpack.c.l.b16 %v218
  %v334 = vunpack.c.h.b16 %v218
  %v335 = vunpack.c.l.b16 %v219
  %v336 = vunpack.c.l.b16 %v220
  %v337 = vunpack.c.h.b16 %v220
  %v338 = vunpack.c.l.b16 %v221
  %v339 = vunpack.c.l.b16 %v222
  %v340 = vunpack.c.h.b16 %v222
  %v341 = vunpack.c.l.b16 %v223
  %v342 = vunpack.c.l.b16 %v224
  %v343 = vunpack.c.h.b16 %v224
  %v344 = vunpack.c.l.b16 %v225
  %v345 = vunpack.c.l.b16 %v226
  %v346 = vunpack.c.h.b16 %v226
  %v347 = vunpack.c.l.b16 %v227
  %v348 = vpack.c.b16 %v279, %v276
  %v349 = vpack.c.b16 %v280, %v277
  %v350 = vpack.c.b16 %v281, %v278
  %v351 = vpack.c.b16 %v285, %v282
  %v352 = vpack.c.b16 %v286, %v283
  %v353 = vpack.c.b16 %v287, %v284
  %v354 = vpack.c.b16 %v291, %v288
  %v355 = vpack.c.b16 %v292, %v289
  %v356 = vpack.c.b16 %v293, %v290
  %v357 = vpack.c.b16 %v297, %v294
  %v358 = vpack.c.b16 %v298, %v295
  %v359 = vpack.c.b16 %v299, %v296
  %v360 = vpack.c.b16 %v303, %v300
  %v361 = vpack.c.b16 %v304, %v301
  %v362 = vpack.c.b16 %v305, %v302
  %v363 = vpack.c.b16 %v309, %v306
  %v364 = vpack.c.b16 %v310, %v307
  %v365 = vpack.c.b16 %v311, %v308
  %v366 = vpack.c.b16 %v315, %v312
  %v367 = vpack.c.b16 %v316, %v313
  %v368 = vpack.c.b16 %v317, %v314
  %v369 = vpack.c.b16 %v321, %v318
  %v370 = vpack.c.b16 %v322, %v319
  %v371 = vpack.c.b16 %v323, %v320
  %v372 = vpack.c.b16 %v327, %v324
  %v373 = vpack.c.b16 %v328, %v325
  %v374 = vpack.c.b16 %v329, %v326
  %v375 = vpack.c.b16 %v333, %v330
  %v376 = vpack.c.b16 %v334, %v331
  %v377 = vpack.c.b16 %v335, %v332
  %v378 = vpack.c.b16 %v339, %v336
  %v379 = vpack.c.b16 %v340, %v337
  %v380 = vpack.c.b16 %v341, %v338
  %v381 = vpack.c.b16 %v345, %v342
  %v382 = vpack.c.b16 %v346, %v343
  %v383 = vpack.c.b16 %v347, %v344
  %384 = vrot.lane.b32.xlu0 %v348, 127
  %v385 = vpop.permute.xlu0 %384
  %386 = vrot.lane.b32.xlu0 %v349, 127
  %v387 = vpop.permute.xlu0 %386
  %388 = vrot.lane.b32.xlu0 %v350, 127
  %v389 = vpop.permute.xlu0 %388
  %390 = vrot.lane.b32.xlu0 %v351, 127
  %v391 = vpop.permute.xlu0 %390
  %392 = vrot.lane.b32.xlu0 %v352, 127
  %v393 = vpop.permute.xlu0 %392
  %394 = vrot.lane.b32.xlu0 %v353, 127
  %v395 = vpop.permute.xlu0 %394
  %396 = vrot.lane.b32.xlu0 %v354, 127
  %v397 = vpop.permute.xlu0 %396
  %398 = vrot.lane.b32.xlu0 %v355, 127
  %v399 = vpop.permute.xlu0 %398
  %400 = vrot.lane.b32.xlu0 %v356, 127
  %v401 = vpop.permute.xlu0 %400
  %402 = vrot.lane.b32.xlu0 %v357, 127
  %v403 = vpop.permute.xlu0 %402
  %404 = vrot.lane.b32.xlu0 %v358, 127
  %v405 = vpop.permute.xlu0 %404
  %406 = vrot.lane.b32.xlu0 %v359, 127
  %v407 = vpop.permute.xlu0 %406
  %408 = vrot.lane.b32.xlu0 %v360, 127
  %v409 = vpop.permute.xlu0 %408
  %410 = vrot.lane.b32.xlu0 %v361, 127
  %v411 = vpop.permute.xlu0 %410
  %412 = vrot.lane.b32.xlu0 %v362, 127
  %v413 = vpop.permute.xlu0 %412
  %414 = vrot.lane.b32.xlu0 %v363, 127
  %v415 = vpop.permute.xlu0 %414
  %416 = vrot.lane.b32.xlu0 %v364, 127
  %v417 = vpop.permute.xlu0 %416
  %418 = vrot.lane.b32.xlu0 %v365, 127
  %v419 = vpop.permute.xlu0 %418
  %420 = vrot.lane.b32.xlu0 %v366, 127
  %v421 = vpop.permute.xlu0 %420
  %422 = vrot.lane.b32.xlu0 %v367, 127
  %v423 = vpop.permute.xlu0 %422
  %424 = vrot.lane.b32.xlu0 %v368, 127
  %v425 = vpop.permute.xlu0 %424
  %426 = vrot.lane.b32.xlu0 %v369, 127
  %v427 = vpop.permute.xlu0 %426
  %428 = vrot.lane.b32.xlu0 %v370, 127
  %v429 = vpop.permute.xlu0 %428
  %430 = vrot.lane.b32.xlu0 %v371, 127
  %v431 = vpop.permute.xlu0 %430
  %432 = vrot.lane.b32.xlu0 %v372, 127
  %v433 = vpop.permute.xlu0 %432
  %434 = vrot.lane.b32.xlu0 %v373, 127
  %v435 = vpop.permute.xlu0 %434
  %436 = vrot.lane.b32.xlu0 %v374, 127
  %v437 = vpop.permute.xlu0 %436
  %438 = vrot.lane.b32.xlu0 %v375, 127
  %v439 = vpop.permute.xlu0 %438
  %440 = vrot.lane.b32.xlu0 %v376, 127
  %v441 = vpop.permute.xlu0 %440
  %442 = vrot.lane.b32.xlu0 %v377, 127
  %v443 = vpop.permute.xlu0 %442
  %444 = vrot.lane.b32.xlu0 %v378, 127
  %v445 = vpop.permute.xlu0 %444
  %446 = vrot.lane.b32.xlu0 %v379, 127
  %v447 = vpop.permute.xlu0 %446
  %448 = vrot.lane.b32.xlu0 %v380, 127
  %v449 = vpop.permute.xlu0 %448
  %450 = vrot.lane.b32.xlu0 %v381, 127
  %v451 = vpop.permute.xlu0 %450
  %452 = vrot.lane.b32.xlu0 %v382, 127
  %v453 = vpop.permute.xlu0 %452
  %454 = vrot.lane.b32.xlu0 %v383, 127
  %v455 = vpop.permute.xlu0 %454
  %vm456 = vcmask 1039360
  %v457 = vsel %vm456, %v385, %v387
  %v458 = vsel %vm456, %v387, %v389
  %v459 = vsel %vm456, %v391, %v393
  %v460 = vsel %vm456, %v393, %v395
  %v461 = vsel %vm456, %v397, %v399
  %v462 = vsel %vm456, %v399, %v401
  %v463 = vsel %vm456, %v403, %v405
  %v464 = vsel %vm456, %v405, %v407
  %v465 = vsel %vm456, %v409, %v411
  %v466 = vsel %vm456, %v411, %v413
  %v467 = vsel %vm456, %v415, %v417
  %v468 = vsel %vm456, %v417, %v419
  %v469 = vsel %vm456, %v421, %v423
  %v470 = vsel %vm456, %v423, %v425
  %v471 = vsel %vm456, %v427, %v429
  %v472 = vsel %vm456, %v429, %v431
  %v473 = vsel %vm456, %v433, %v435
  %v474 = vsel %vm456, %v435, %v437
  %v475 = vsel %vm456, %v439, %v441
  %v476 = vsel %vm456, %v441, %v443
  %v477 = vsel %vm456, %v445, %v447
  %v478 = vsel %vm456, %v447, %v449
  %v479 = vsel %vm456, %v451, %v453
  %v480 = vsel %vm456, %v453, %v455
  %505 = vst [vmem:[#allocation2 + $0xc0] sm:$0xff] %v457
  %506 = vst [vmem:[#allocation2 + $0xc8] sm:$0xff] %v458
  %507 = vst [vmem:[#allocation2 + $0xd0] sm:$0xff] %v459
  %508 = vst [vmem:[#allocation2 + $0xd8] sm:$0xff] %v460
  %509 = vst [vmem:[#allocation2 + $0xe0] sm:$0xff] %v461
  %510 = vst [vmem:[#allocation2 + $0xe8] sm:$0xff] %v462
  %511 = vst [vmem:[#allocation2 + $0xf0] sm:$0xff] %v463
  %512 = vst [vmem:[#allocation2 + $0xf8] sm:$0xff] %v464
  %513 = vst [vmem:[#allocation2 + $0x100] sm:$0xff] %v465
  %514 = vst [vmem:[#allocation2 + $0x108] sm:$0xff] %v466
  %515 = vst [vmem:[#allocation2 + $0x110] sm:$0xff] %v467
  %516 = vst [vmem:[#allocation2 + $0x118] sm:$0xff] %v468
  %517 = vst [vmem:[#allocation2 + $0x120] sm:$0xff] %v469
  %518 = vst [vmem:[#allocation2 + $0x128] sm:$0xff] %v470
  %519 = vst [vmem:[#allocation2 + $0x130] sm:$0xff] %v471
  %520 = vst [vmem:[#allocation2 + $0x138] sm:$0xff] %v472
  %521 = vst [vmem:[#allocation2 + $0x140] sm:$0xff] %v473
  %522 = vst [vmem:[#allocation2 + $0x148] sm:$0xff] %v474
  %523 = vst [vmem:[#allocation2 + $0x150] sm:$0xff] %v475
  %524 = vst [vmem:[#allocation2 + $0x158] sm:$0xff] %v476
  %525 = vst [vmem:[#allocation2 + $0x160] sm:$0xff] %v477
  %526 = vst [vmem:[#allocation2 + $0x168] sm:$0xff] %v478
  %527 = vst [vmem:[#allocation2 + $0x170] sm:$0xff] %v479
  %528 = vst [vmem:[#allocation2 + $0x178] sm:$0xff] %v480
  %v529 = vld [vmem:[%s0] sm:$0xff]
  %v530 = vld [vmem:[%s0 + $0x8] sm:$0xf]
  %v531 = vld [vmem:[%s0 + $0xc] sm:$0xff]
  %v532 = vld [vmem:[%s0 + $0x14] sm:$0xf]
  %v533 = vld [vmem:[%s0 + $0x18] sm:$0xff]
  %v534 = vld [vmem:[%s0 + $0x20] sm:$0xf]
  %v535 = vld [vmem:[%s0 + $0x24] sm:$0xff]
  %v536 = vld [vmem:[%s0 + $0x2c] sm:$0xf]
  %v537 = vld [vmem:[%s0 + $0x30] sm:$0xff]
  %v538 = vld [vmem:[%s0 + $0x38] sm:$0xf]
  %v539 = vld [vmem:[%s0 + $0x3c] sm:$0xff]
  %v540 = vld [vmem:[%s0 + $0x44] sm:$0xf]
  %v541 = vld [vmem:[%s0 + $0x48] sm:$0xff]
  %v542 = vld [vmem:[%s0 + $0x50] sm:$0xf]
  %v543 = vld [vmem:[%s0 + $0x54] sm:$0xff]
  %v544 = vld [vmem:[%s0 + $0x5c] sm:$0xf]
  %v545 = vld [vmem:[%s0 + $0x60] sm:$0xff]
  %v546 = vld [vmem:[%s0 + $0x68] sm:$0xf]
  %v547 = vld [vmem:[%s0 + $0x6c] sm:$0xff]
  %v548 = vld [vmem:[%s0 + $0x74] sm:$0xf]
  %v549 = vld [vmem:[%s0 + $0x78] sm:$0xff]
  %v550 = vld [vmem:[%s0 + $0x80] sm:$0xf]
  %v551 = vld [vmem:[%s0 + $0x84] sm:$0xff]
  %v552 = vld [vmem:[%s0 + $0x8c] sm:$0xf]
  %v553 = vld [vmem:[%s0 + $0x90] sm:$0xff]
  %v554 = vld [vmem:[%s0 + $0x98] sm:$0xf]
  %v555 = vld [vmem:[%s0 + $0x9c] sm:$0xff]
  %v556 = vld [vmem:[%s0 + $0xa4] sm:$0xf]
  %v557 = vld [vmem:[%s0 + $0xa8] sm:$0xff]
  %v558 = vld [vmem:[%s0 + $0xb0] sm:$0xf]
  %v559 = vld [vmem:[%s0 + $0xb4] sm:$0xff]
  %v560 = vld [vmem:[%s0 + $0xbc] sm:$0xf]
  %v561 = vld [vmem:[%s0 + $0xc0] sm:$0xff]
  %v562 = vld [vmem:[%s0 + $0xc8] sm:$0xf]
  %v563 = vld [vmem:[%s0 + $0xcc] sm:$0xff]
  %v564 = vld [vmem:[%s0 + $0xd4] sm:$0xf]
  %v565 = vld [vmem:[%s0 + $0xd8] sm:$0xff]
  %v566 = vld [vmem:[%s0 + $0xe0] sm:$0xf]
  %v567 = vld [vmem:[%s0 + $0xe4] sm:$0xff]
  %v568 = vld [vmem:[%s0 + $0xec] sm:$0xf]
  %v569 = vld [vmem:[%s0 + $0xf0] sm:$0xff]
  %v570 = vld [vmem:[%s0 + $0xf8] sm:$0xf]
  %v571 = vld [vmem:[%s0 + $0xfc] sm:$0xff]
  %v572 = vld [vmem:[%s0 + $0x104] sm:$0xf]
  %v573 = vld [vmem:[%s0 + $0x108] sm:$0xff]
  %v574 = vld [vmem:[%s0 + $0x110] sm:$0xf]
  %v575 = vld [vmem:[%s0 + $0x114] sm:$0xff]
  %v576 = vld [vmem:[%s0 + $0x11c] sm:$0xf]
  %v625 = vunpack.c.l.b16 %v529
  %v626 = vunpack.c.h.b16 %v529
  %v627 = vunpack.c.l.b16 %v530
  %v628 = vunpack.c.l.b16 %v531
  %v629 = vunpack.c.h.b16 %v531
  %v630 = vunpack.c.l.b16 %v532
  %v631 = vunpack.c.l.b16 %v533
  %v632 = vunpack.c.h.b16 %v533
  %v633 = vunpack.c.l.b16 %v534
  %v634 = vunpack.c.l.b16 %v535
  %v635 = vunpack.c.h.b16 %v535
  %v636 = vunpack.c.l.b16 %v536
  %v637 = vunpack.c.l.b16 %v537
  %v638 = vunpack.c.h.b16 %v537
  %v639 = vunpack.c.l.b16 %v538
  %v640 = vunpack.c.l.b16 %v539
  %v641 = vunpack.c.h.b16 %v539
  %v642 = vunpack.c.l.b16 %v540
  %v643 = vunpack.c.l.b16 %v541
  %v644 = vunpack.c.h.b16 %v541
  %v645 = vunpack.c.l.b16 %v542
  %v646 = vunpack.c.l.b16 %v543
  %v647 = vunpack.c.h.b16 %v543
  %v648 = vunpack.c.l.b16 %v544
  %v649 = vunpack.c.l.b16 %v545
  %v650 = vunpack.c.h.b16 %v545
  %v651 = vunpack.c.l.b16 %v546
  %v652 = vunpack.c.l.b16 %v547
  %v653 = vunpack.c.h.b16 %v547
  %v654 = vunpack.c.l.b16 %v548
  %v655 = vunpack.c.l.b16 %v549
  %v656 = vunpack.c.h.b16 %v549
  %v657 = vunpack.c.l.b16 %v550
  %v658 = vunpack.c.l.b16 %v551
  %v659 = vunpack.c.h.b16 %v551
  %v660 = vunpack.c.l.b16 %v552
  %v661 = vunpack.c.l.b16 %v553
  %v662 = vunpack.c.h.b16 %v553
  %v663 = vunpack.c.l.b16 %v554
  %v664 = vunpack.c.l.b16 %v555
  %v665 = vunpack.c.h.b16 %v555
  %v666 = vunpack.c.l.b16 %v556
  %v667 = vunpack.c.l.b16 %v557
  %v668 = vunpack.c.h.b16 %v557
  %v669 = vunpack.c.l.b16 %v558
  %v670 = vunpack.c.l.b16 %v559
  %v671 = vunpack.c.h.b16 %v559
  %v672 = vunpack.c.l.b16 %v560
  %v673 = vunpack.c.l.b16 %v561
  %v674 = vunpack.c.h.b16 %v561
  %v675 = vunpack.c.l.b16 %v562
  %v676 = vunpack.c.l.b16 %v563
  %v677 = vunpack.c.h.b16 %v563
  %v678 = vunpack.c.l.b16 %v564
  %v679 = vunpack.c.l.b16 %v565
  %v680 = vunpack.c.h.b16 %v565
  %v681 = vunpack.c.l.b16 %v566
  %v682 = vunpack.c.l.b16 %v567
  %v683 = vunpack.c.h.b16 %v567
  %v684 = vunpack.c.l.b16 %v568
  %v685 = vunpack.c.l.b16 %v569
  %v686 = vunpack.c.h.b16 %v569
  %v687 = vunpack.c.l.b16 %v570
  %v688 = vunpack.c.l.b16 %v571
  %v689 = vunpack.c.h.b16 %v571
  %v690 = vunpack.c.l.b16 %v572
  %v691 = vunpack.c.l.b16 %v573
  %v692 = vunpack.c.h.b16 %v573
  %v693 = vunpack.c.l.b16 %v574
  %v694 = vunpack.c.l.b16 %v575
  %v695 = vunpack.c.h.b16 %v575
  %v696 = vunpack.c.l.b16 %v576
  %v697 = vpack.c.b16 %v628, %v625
  %v698 = vpack.c.b16 %v629, %v626
  %v699 = vpack.c.b16 %v630, %v627
  %v700 = vpack.c.b16 %v634, %v631
  %v701 = vpack.c.b16 %v635, %v632
  %v702 = vpack.c.b16 %v636, %v633
  %v703 = vpack.c.b16 %v640, %v637
  %v704 = vpack.c.b16 %v641, %v638
  %v705 = vpack.c.b16 %v642, %v639
  %v706 = vpack.c.b16 %v646, %v643
  %v707 = vpack.c.b16 %v647, %v644
  %v708 = vpack.c.b16 %v648, %v645
  %v709 = vpack.c.b16 %v652, %v649
  %v710 = vpack.c.b16 %v653, %v650
  %v711 = vpack.c.b16 %v654, %v651
  %v712 = vpack.c.b16 %v658, %v655
  %v713 = vpack.c.b16 %v659, %v656
  %v714 = vpack.c.b16 %v660, %v657
  %v715 = vpack.c.b16 %v664, %v661
  %v716 = vpack.c.b16 %v665, %v662
  %v717 = vpack.c.b16 %v666, %v663
  %v718 = vpack.c.b16 %v670, %v667
  %v719 = vpack.c.b16 %v671, %v668
  %v720 = vpack.c.b16 %v672, %v669
  %v721 = vpack.c.b16 %v676, %v673
  %v722 = vpack.c.b16 %v677, %v674
  %v723 = vpack.c.b16 %v678, %v675
  %v724 = vpack.c.b16 %v682, %v679
  %v725 = vpack.c.b16 %v683, %v680
  %v726 = vpack.c.b16 %v684, %v681
  %v727 = vpack.c.b16 %v688, %v685
  %v728 = vpack.c.b16 %v689, %v686
  %v729 = vpack.c.b16 %v690, %v687
  %v730 = vpack.c.b16 %v694, %v691
  %v731 = vpack.c.b16 %v695, %v692
  %v732 = vpack.c.b16 %v696, %v693
  %733 = vrot.lane.b32.xlu0 %v697, 126
  %v734 = vpop.permute.xlu0 %733
  %735 = vrot.lane.b32.xlu0 %v698, 126
  %v736 = vpop.permute.xlu0 %735
  %737 = vrot.lane.b32.xlu0 %v699, 126
  %v738 = vpop.permute.xlu0 %737
  %739 = vrot.lane.b32.xlu0 %v700, 126
  %v740 = vpop.permute.xlu0 %739
  %741 = vrot.lane.b32.xlu0 %v701, 126
  %v742 = vpop.permute.xlu0 %741
  %743 = vrot.lane.b32.xlu0 %v702, 126
  %v744 = vpop.permute.xlu0 %743
  %745 = vrot.lane.b32.xlu0 %v703, 126
  %v746 = vpop.permute.xlu0 %745
  %747 = vrot.lane.b32.xlu0 %v704, 126
  %v748 = vpop.permute.xlu0 %747
  %749 = vrot.lane.b32.xlu0 %v705, 126
  %v750 = vpop.permute.xlu0 %749
  %751 = vrot.lane.b32.xlu0 %v706, 126
  %v752 = vpop.permute.xlu0 %751
  %753 = vrot.lane.b32.xlu0 %v707, 126
  %v754 = vpop.permute.xlu0 %753
  %755 = vrot.lane.b32.xlu0 %v708, 126
  %v756 = vpop.permute.xlu0 %755
  %757 = vrot.lane.b32.xlu0 %v709, 126
  %v758 = vpop.permute.xlu0 %757
  %759 = vrot.lane.b32.xlu0 %v710, 126
  %v760 = vpop.permute.xlu0 %759
  %761 = vrot.lane.b32.xlu0 %v711, 126
  %v762 = vpop.permute.xlu0 %761
  %763 = vrot.lane.b32.xlu0 %v712, 126
  %v764 = vpop.permute.xlu0 %763
  %765 = vrot.lane.b32.xlu0 %v713, 126
  %v766 = vpop.permute.xlu0 %765
  %767 = vrot.lane.b32.xlu0 %v714, 126
  %v768 = vpop.permute.xlu0 %767
  %769 = vrot.lane.b32.xlu0 %v715, 126
  %v770 = vpop.permute.xlu0 %769
  %771 = vrot.lane.b32.xlu0 %v716, 126
  %v772 = vpop.permute.xlu0 %771
  %773 = vrot.lane.b32.xlu0 %v717, 126
  %v774 = vpop.permute.xlu0 %773
  %775 = vrot.lane.b32.xlu0 %v718, 126
  %v776 = vpop.permute.xlu0 %775
  %777 = vrot.lane.b32.xlu0 %v719, 126
  %v778 = vpop.permute.xlu0 %777
  %779 = vrot.lane.b32.xlu0 %v720, 126
  %v780 = vpop.permute.xlu0 %779
  %781 = vrot.lane.b32.xlu0 %v721, 126
  %v782 = vpop.permute.xlu0 %781
  %783 = vrot.lane.b32.xlu0 %v722, 126
  %v784 = vpop.permute.xlu0 %783
  %785 = vrot.lane.b32.xlu0 %v723, 126
  %v786 = vpop.permute.xlu0 %785
  %787 = vrot.lane.b32.xlu0 %v724, 126
  %v788 = vpop.permute.xlu0 %787
  %789 = vrot.lane.b32.xlu0 %v725, 126
  %v790 = vpop.permute.xlu0 %789
  %791 = vrot.lane.b32.xlu0 %v726, 126
  %v792 = vpop.permute.xlu0 %791
  %793 = vrot.lane.b32.xlu0 %v727, 126
  %v794 = vpop.permute.xlu0 %793
  %795 = vrot.lane.b32.xlu0 %v728, 126
  %v796 = vpop.permute.xlu0 %795
  %797 = vrot.lane.b32.xlu0 %v729, 126
  %v798 = vpop.permute.xlu0 %797
  %799 = vrot.lane.b32.xlu0 %v730, 126
  %v800 = vpop.permute.xlu0 %799
  %801 = vrot.lane.b32.xlu0 %v731, 126
  %v802 = vpop.permute.xlu0 %801
  %803 = vrot.lane.b32.xlu0 %v732, 126
  %v804 = vpop.permute.xlu0 %803
  %vm805 = vcmask 1031168
  %v806 = vsel %vm805, %v734, %v736
  %v807 = vsel %vm805, %v736, %v738
  %v808 = vsel %vm805, %v740, %v742
  %v809 = vsel %vm805, %v742, %v744
  %v810 = vsel %vm805, %v746, %v748
  %v811 = vsel %vm805, %v748, %v750
  %v812 = vsel %vm805, %v752, %v754
  %v813 = vsel %vm805, %v754, %v756
  %v814 = vsel %vm805, %v758, %v760
  %v815 = vsel %vm805, %v760, %v762
  %v816 = vsel %vm805, %v764, %v766
  %v817 = vsel %vm805, %v766, %v768
  %v818 = vsel %vm805, %v770, %v772
  %v819 = vsel %vm805, %v772, %v774
  %v820 = vsel %vm805, %v776, %v778
  %v821 = vsel %vm805, %v778, %v780
  %v822 = vsel %vm805, %v782, %v784
  %v823 = vsel %vm805, %v784, %v786
  %v824 = vsel %vm805, %v788, %v790
  %v825 = vsel %vm805, %v790, %v792
  %v826 = vsel %vm805, %v794, %v796
  %v827 = vsel %vm805, %v796, %v798
  %v828 = vsel %vm805, %v800, %v802
  %v829 = vsel %vm805, %v802, %v804
  %854 = vst [vmem:[#allocation2 + $0x180] sm:$0xff] %v806
  %855 = vst [vmem:[#allocation2 + $0x188] sm:$0xff] %v807
  %856 = vst [vmem:[#allocation2 + $0x190] sm:$0xff] %v808
  %857 = vst [vmem:[#allocation2 + $0x198] sm:$0xff] %v809
  %858 = vst [vmem:[#allocation2 + $0x1a0] sm:$0xff] %v810
  %859 = vst [vmem:[#allocation2 + $0x1a8] sm:$0xff] %v811
  %860 = vst [vmem:[#allocation2 + $0x1b0] sm:$0xff] %v812
  %861 = vst [vmem:[#allocation2 + $0x1b8] sm:$0xff] %v813
  %862 = vst [vmem:[#allocation2 + $0x1c0] sm:$0xff] %v814
  %863 = vst [vmem:[#allocation2 + $0x1c8] sm:$0xff] %v815
  %864 = vst [vmem:[#allocation2 + $0x1d0] sm:$0xff] %v816
  %865 = vst [vmem:[#allocation2 + $0x1d8] sm:$0xff] %v817
  %866 = vst [vmem:[#allocation2 + $0x1e0] sm:$0xff] %v818
  %867 = vst [vmem:[#allocation2 + $0x1e8] sm:$0xff] %v819
  %868 = vst [vmem:[#allocation2 + $0x1f0] sm:$0xff] %v820
  %869 = vst [vmem:[#allocation2 + $0x1f8] sm:$0xff] %v821
  %870 = vst [vmem:[#allocation2 + $0x200] sm:$0xff] %v822
  %871 = vst [vmem:[#allocation2 + $0x208] sm:$0xff] %v823
  %872 = vst [vmem:[#allocation2 + $0x210] sm:$0xff] %v824
  %873 = vst [vmem:[#allocation2 + $0x218] sm:$0xff] %v825
  %874 = vst [vmem:[#allocation2 + $0x220] sm:$0xff] %v826
  %875 = vst [vmem:[#allocation2 + $0x228] sm:$0xff] %v827
  %876 = vst [vmem:[#allocation2 + $0x230] sm:$0xff] %v828
  %877 = vst [vmem:[#allocation2 + $0x238] sm:$0xff] %v829
  %v878 = vld [vmem:[%s0] sm:$0xff]
  %v879 = vld [vmem:[%s0 + $0x8] sm:$0xf]
  %v880 = vld [vmem:[%s0 + $0xc] sm:$0xff]
  %v881 = vld [vmem:[%s0 + $0x14] sm:$0xf]
  %v882 = vld [vmem:[%s0 + $0x18] sm:$0xff]
  %v883 = vld [vmem:[%s0 + $0x20] sm:$0xf]
  %v884 = vld [vmem:[%s0 + $0x24] sm:$0xff]
  %v885 = vld [vmem:[%s0 + $0x2c] sm:$0xf]
  %v886 = vld [vmem:[%s0 + $0x30] sm:$0xff]
  %v887 = vld [vmem:[%s0 + $0x38] sm:$0xf]
  %v888 = vld [vmem:[%s0 + $0x3c] sm:$0xff]
  %v889 = vld [vmem:[%s0 + $0x44] sm:$0xf]
  %v890 = vld [vmem:[%s0 + $0x48] sm:$0xff]
  %v891 = vld [vmem:[%s0 + $0x50] sm:$0xf]
  %v892 = vld [vmem:[%s0 + $0x54] sm:$0xff]
  %v893 = vld [vmem:[%s0 + $0x5c] sm:$0xf]
  %v894 = vld [vmem:[%s0 + $0x60] sm:$0xff]
  %v895 = vld [vmem:[%s0 + $0x68] sm:$0xf]
  %v896 = vld [vmem:[%s0 + $0x6c] sm:$0xff]
  %v897 = vld [vmem:[%s0 + $0x74] sm:$0xf]
  %v898 = vld [vmem:[%s0 + $0x78] sm:$0xff]
  %v899 = vld [vmem:[%s0 + $0x80] sm:$0xf]
  %v900 = vld [vmem:[%s0 + $0x84] sm:$0xff]
  %v901 = vld [vmem:[%s0 + $0x8c] sm:$0xf]
  %v902 = vld [vmem:[%s0 + $0x90] sm:$0xff]
  %v903 = vld [vmem:[%s0 + $0x98] sm:$0xf]
  %v904 = vld [vmem:[%s0 + $0x9c] sm:$0xff]
  %v905 = vld [vmem:[%s0 + $0xa4] sm:$0xf]
  %v906 = vld [vmem:[%s0 + $0xa8] sm:$0xff]
  %v907 = vld [vmem:[%s0 + $0xb0] sm:$0xf]
  %v908 = vld [vmem:[%s0 + $0xb4] sm:$0xff]
  %v909 = vld [vmem:[%s0 + $0xbc] sm:$0xf]
  %v910 = vld [vmem:[%s0 + $0xc0] sm:$0xff]
  %v911 = vld [vmem:[%s0 + $0xc8] sm:$0xf]
  %v912 = vld [vmem:[%s0 + $0xcc] sm:$0xff]
  %v913 = vld [vmem:[%s0 + $0xd4] sm:$0xf]
  %v914 = vld [vmem:[%s0 + $0xd8] sm:$0xff]
  %v915 = vld [vmem:[%s0 + $0xe0] sm:$0xf]
  %v916 = vld [vmem:[%s0 + $0xe4] sm:$0xff]
  %v917 = vld [vmem:[%s0 + $0xec] sm:$0xf]
  %v918 = vld [vmem:[%s0 + $0xf0] sm:$0xff]
  %v919 = vld [vmem:[%s0 + $0xf8] sm:$0xf]
  %v920 = vld [vmem:[%s0 + $0xfc] sm:$0xff]
  %v921 = vld [vmem:[%s0 + $0x104] sm:$0xf]
  %v922 = vld [vmem:[%s0 + $0x108] sm:$0xff]
  %v923 = vld [vmem:[%s0 + $0x110] sm:$0xf]
  %v924 = vld [vmem:[%s0 + $0x114] sm:$0xff]
  %v925 = vld [vmem:[%s0 + $0x11c] sm:$0xf]
  %v974 = vunpack.c.l.b16 %v878
  %v975 = vunpack.c.h.b16 %v878
  %v976 = vunpack.c.l.b16 %v879
  %v977 = vunpack.c.l.b16 %v880
  %v978 = vunpack.c.h.b16 %v880
  %v979 = vunpack.c.l.b16 %v881
  %v980 = vunpack.c.l.b16 %v882
  %v981 = vunpack.c.h.b16 %v882
  %v982 = vunpack.c.l.b16 %v883
  %v983 = vunpack.c.l.b16 %v884
  %v984 = vunpack.c.h.b16 %v884
  %v985 = vunpack.c.l.b16 %v885
  %v986 = vunpack.c.l.b16 %v886
  %v987 = vunpack.c.h.b16 %v886
  %v988 = vunpack.c.l.b16 %v887
  %v989 = vunpack.c.l.b16 %v888
  %v990 = vunpack.c.h.b16 %v888
  %v991 = vunpack.c.l.b16 %v889
  %v992 = vunpack.c.l.b16 %v890
  %v993 = vunpack.c.h.b16 %v890
  %v994 = vunpack.c.l.b16 %v891
  %v995 = vunpack.c.l.b16 %v892
  %v996 = vunpack.c.h.b16 %v892
  %v997 = vunpack.c.l.b16 %v893
  %v998 = vunpack.c.l.b16 %v894
  %v999 = vunpack.c.h.b16 %v894
  %v1000 = vunpack.c.l.b16 %v895
  %v1001 = vunpack.c.l.b16 %v896
  %v1002 = vunpack.c.h.b16 %v896
  %v1003 = vunpack.c.l.b16 %v897
  %v1004 = vunpack.c.l.b16 %v898
  %v1005 = vunpack.c.h.b16 %v898
  %v1006 = vunpack.c.l.b16 %v899
  %v1007 = vunpack.c.l.b16 %v900
  %v1008 = vunpack.c.h.b16 %v900
  %v1009 = vunpack.c.l.b16 %v901
  %v1010 = vunpack.c.l.b16 %v902
  %v1011 = vunpack.c.h.b16 %v902
  %v1012 = vunpack.c.l.b16 %v903
  %v1013 = vunpack.c.l.b16 %v904
  %v1014 = vunpack.c.h.b16 %v904
  %v1015 = vunpack.c.l.b16 %v905
  %v1016 = vunpack.c.l.b16 %v906
  %v1017 = vunpack.c.h.b16 %v906
  %v1018 = vunpack.c.l.b16 %v907
  %v1019 = vunpack.c.l.b16 %v908
  %v1020 = vunpack.c.h.b16 %v908
  %v1021 = vunpack.c.l.b16 %v909
  %v1022 = vunpack.c.l.b16 %v910
  %v1023 = vunpack.c.h.b16 %v910
  %v1024 = vunpack.c.l.b16 %v911
  %v1025 = vunpack.c.l.b16 %v912
  %v1026 = vunpack.c.h.b16 %v912
  %v1027 = vunpack.c.l.b16 %v913
  %v1028 = vunpack.c.l.b16 %v914
  %v1029 = vunpack.c.h.b16 %v914
  %v1030 = vunpack.c.l.b16 %v915
  %v1031 = vunpack.c.l.b16 %v916
  %v1032 = vunpack.c.h.b16 %v916
  %v1033 = vunpack.c.l.b16 %v917
  %v1034 = vunpack.c.l.b16 %v918
  %v1035 = vunpack.c.h.b16 %v918
  %v1036 = vunpack.c.l.b16 %v919
  %v1037 = vunpack.c.l.b16 %v920
  %v1038 = vunpack.c.h.b16 %v920
  %v1039 = vunpack.c.l.b16 %v921
  %v1040 = vunpack.c.l.b16 %v922
  %v1041 = vunpack.c.h.b16 %v922
  %v1042 = vunpack.c.l.b16 %v923
  %v1043 = vunpack.c.l.b16 %v924
  %v1044 = vunpack.c.h.b16 %v924
  %v1045 = vunpack.c.l.b16 %v925
  %v1046 = vpack.c.b16 %v977, %v974
  %v1047 = vpack.c.b16 %v978, %v975
  %v1048 = vpack.c.b16 %v979, %v976
  %v1049 = vpack.c.b16 %v983, %v980
  %v1050 = vpack.c.b16 %v984, %v981
  %v1051 = vpack.c.b16 %v985, %v982
  %v1052 = vpack.c.b16 %v989, %v986
  %v1053 = vpack.c.b16 %v990, %v987
  %v1054 = vpack.c.b16 %v991, %v988
  %v1055 = vpack.c.b16 %v995, %v992
  %v1056 = vpack.c.b16 %v996, %v993
  %v1057 = vpack.c.b16 %v997, %v994
  %v1058 = vpack.c.b16 %v1001, %v998
  %v1059 = vpack.c.b16 %v1002, %v999
  %v1060 = vpack.c.b16 %v1003, %v1000
  %v1061 = vpack.c.b16 %v1007, %v1004
  %v1062 = vpack.c.b16 %v1008, %v1005
  %v1063 = vpack.c.b16 %v1009, %v1006
  %v1064 = vpack.c.b16 %v1013, %v1010
  %v1065 = vpack.c.b16 %v1014, %v1011
  %v1066 = vpack.c.b16 %v1015, %v1012
  %v1067 = vpack.c.b16 %v1019, %v1016
  %v1068 = vpack.c.b16 %v1020, %v1017
  %v1069 = vpack.c.b16 %v1021, %v1018
  %v1070 = vpack.c.b16 %v1025, %v1022
  %v1071 = vpack.c.b16 %v1026, %v1023
  %v1072 = vpack.c.b16 %v1027, %v1024
  %v1073 = vpack.c.b16 %v1031, %v1028
  %v1074 = vpack.c.b16 %v1032, %v1029
  %v1075 = vpack.c.b16 %v1033, %v1030
  %v1076 = vpack.c.b16 %v1037, %v1034
  %v1077 = vpack.c.b16 %v1038, %v1035
  %v1078 = vpack.c.b16 %v1039, %v1036
  %v1079 = vpack.c.b16 %v1043, %v1040
  %v1080 = vpack.c.b16 %v1044, %v1041
  %v1081 = vpack.c.b16 %v1045, %v1042
  %1082 = vrot.lane.b32.xlu0 %v1046, 112
  %v1083 = vpop.permute.xlu0 %1082
  %1084 = vrot.lane.b32.xlu0 %v1047, 112
  %v1085 = vpop.permute.xlu0 %1084
  %1086 = vrot.lane.b32.xlu0 %v1048, 112
  %v1087 = vpop.permute.xlu0 %1086
  %1088 = vrot.lane.b32.xlu0 %v1049, 112
  %v1089 = vpop.permute.xlu0 %1088
  %1090 = vrot.lane.b32.xlu0 %v1050, 112
  %v1091 = vpop.permute.xlu0 %1090
  %1092 = vrot.lane.b32.xlu0 %v1051, 112
  %v1093 = vpop.permute.xlu0 %1092
  %1094 = vrot.lane.b32.xlu0 %v1052, 112
  %v1095 = vpop.permute.xlu0 %1094
  %1096 = vrot.lane.b32.xlu0 %v1053, 112
  %v1097 = vpop.permute.xlu0 %1096
  %1098 = vrot.lane.b32.xlu0 %v1054, 112
  %v1099 = vpop.permute.xlu0 %1098
  %1100 = vrot.lane.b32.xlu0 %v1055, 112
  %v1101 = vpop.permute.xlu0 %1100
  %1102 = vrot.lane.b32.xlu0 %v1056, 112
  %v1103 = vpop.permute.xlu0 %1102
  %1104 = vrot.lane.b32.xlu0 %v1057, 112
  %v1105 = vpop.permute.xlu0 %1104
  %1106 = vrot.lane.b32.xlu0 %v1058, 112
  %v1107 = vpop.permute.xlu0 %1106
  %1108 = vrot.lane.b32.xlu0 %v1059, 112
  %v1109 = vpop.permute.xlu0 %1108
  %1110 = vrot.lane.b32.xlu0 %v1060, 112
  %v1111 = vpop.permute.xlu0 %1110
  %1112 = vrot.lane.b32.xlu0 %v1061, 112
  %v1113 = vpop.permute.xlu0 %1112
  %1114 = vrot.lane.b32.xlu0 %v1062, 112
  %v1115 = vpop.permute.xlu0 %1114
  %1116 = vrot.lane.b32.xlu0 %v1063, 112
  %v1117 = vpop.permute.xlu0 %1116
  %1118 = vrot.lane.b32.xlu0 %v1064, 112
  %v1119 = vpop.permute.xlu0 %1118
  %1120 = vrot.lane.b32.xlu0 %v1065, 112
  %v1121 = vpop.permute.xlu0 %1120
  %1122 = vrot.lane.b32.xlu0 %v1066, 112
  %v1123 = vpop.permute.xlu0 %1122
  %1124 = vrot.lane.b32.xlu0 %v1067, 112
  %v1125 = vpop.permute.xlu0 %1124
  %1126 = vrot.lane.b32.xlu0 %v1068, 112
  %v1127 = vpop.permute.xlu0 %1126
  %1128 = vrot.lane.b32.xlu0 %v1069, 112
  %v1129 = vpop.permute.xlu0 %1128
  %1130 = vrot.lane.b32.xlu0 %v1070, 112
  %v1131 = vpop.permute.xlu0 %1130
  %1132 = vrot.lane.b32.xlu0 %v1071, 112
  %v1133 = vpop.permute.xlu0 %1132
  %1134 = vrot.lane.b32.xlu0 %v1072, 112
  %v1135 = vpop.permute.xlu0 %1134
  %1136 = vrot.lane.b32.xlu0 %v1073, 112
  %v1137 = vpop.permute.xlu0 %1136
  %1138 = vrot.lane.b32.xlu0 %v1074, 112
  %v1139 = vpop.permute.xlu0 %1138
  %1140 = vrot.lane.b32.xlu0 %v1075, 112
  %v1141 = vpop.permute.xlu0 %1140
  %1142 = vrot.lane.b32.xlu0 %v1076, 112
  %v1143 = vpop.permute.xlu0 %1142
  %1144 = vrot.lane.b32.xlu0 %v1077, 112
  %v1145 = vpop.permute.xlu0 %1144
  %1146 = vrot.lane.b32.xlu0 %v1078, 112
  %v1147 = vpop.permute.xlu0 %1146
  %1148 = vrot.lane.b32.xlu0 %v1079, 112
  %v1149 = vpop.permute.xlu0 %1148
  %1150 = vrot.lane.b32.xlu0 %v1080, 112
  %v1151 = vpop.permute.xlu0 %1150
  %1152 = vrot.lane.b32.xlu0 %v1081, 112
  %v1153 = vpop.permute.xlu0 %1152
  %vm1154 = vcmask 916480
  %v1155 = vsel %vm1154, %v1083, %v1085
  %v1156 = vsel %vm1154, %v1085, %v1087
  %v1157 = vsel %vm1154, %v1089, %v1091
  %v1158 = vsel %vm1154, %v1091, %v1093
  %v1159 = vsel %vm1154, %v1095, %v1097
  %v1160 = vsel %vm1154, %v1097, %v1099
  %v1161 = vsel %vm1154, %v1101, %v1103
  %v1162 = vsel %vm1154, %v1103, %v1105
  %v1163 = vsel %vm1154, %v1107, %v1109
  %v1164 = vsel %vm1154, %v1109, %v1111
  %v1165 = vsel %vm1154, %v1113, %v1115
  %v1166 = vsel %vm1154, %v1115, %v1117
  %v1167 = vsel %vm1154, %v1119, %v1121
  %v1168 = vsel %vm1154, %v1121, %v1123
  %v1169 = vsel %vm1154, %v1125, %v1127
  %v1170 = vsel %vm1154, %v1127, %v1129
  %v1171 = vsel %vm1154, %v1131, %v1133
  %v1172 = vsel %vm1154, %v1133, %v1135
  %v1173 = vsel %vm1154, %v1137, %v1139
  %v1174 = vsel %vm1154, %v1139, %v1141
  %v1175 = vsel %vm1154, %v1143, %v1145
  %v1176 = vsel %vm1154, %v1145, %v1147
  %v1177 = vsel %vm1154, %v1149, %v1151
  %v1178 = vsel %vm1154, %v1151, %v1153
  %1203 = vst [vmem:[#allocation2 + $0x240] sm:$0xff] %v1155
  %1204 = vst [vmem:[#allocation2 + $0x248] sm:$0xff] %v1156
  %1205 = vst [vmem:[#allocation2 + $0x250] sm:$0xff] %v1157
  %1206 = vst [vmem:[#allocation2 + $0x258] sm:$0xff] %v1158
  %1207 = vst [vmem:[#allocation2 + $0x260] sm:$0xff] %v1159
  %1208 = vst [vmem:[#allocation2 + $0x268] sm:$0xff] %v1160
  %1209 = vst [vmem:[#allocation2 + $0x270] sm:$0xff] %v1161
  %1210 = vst [vmem:[#allocation2 + $0x278] sm:$0xff] %v1162
  %1211 = vst [vmem:[#allocation2 + $0x280] sm:$0xff] %v1163
  %1212 = vst [vmem:[#allocation2 + $0x288] sm:$0xff] %v1164
  %1213 = vst [vmem:[#allocation2 + $0x290] sm:$0xff] %v1165
  %1214 = vst [vmem:[#allocation2 + $0x298] sm:$0xff] %v1166
  %1215 = vst [vmem:[#allocation2 + $0x2a0] sm:$0xff] %v1167
  %1216 = vst [vmem:[#allocation2 + $0x2a8] sm:$0xff] %v1168
  %1217 = vst [vmem:[#allocation2 + $0x2b0] sm:$0xff] %v1169
  %1218 = vst [vmem:[#allocation2 + $0x2b8] sm:$0xff] %v1170
  %1219 = vst [vmem:[#allocation2 + $0x2c0] sm:$0xff] %v1171
  %1220 = vst [vmem:[#allocation2 + $0x2c8] sm:$0xff] %v1172
  %1221 = vst [vmem:[#allocation2 + $0x2d0] sm:$0xff] %v1173
  %1222 = vst [vmem:[#allocation2 + $0x2d8] sm:$0xff] %v1174
  %1223 = vst [vmem:[#allocation2 + $0x2e0] sm:$0xff] %v1175
  %1224 = vst [vmem:[#allocation2 + $0x2e8] sm:$0xff] %v1176
  %1225 = vst [vmem:[#allocation2 + $0x2f0] sm:$0xff] %v1177
  %1226 = vst [vmem:[#allocation2 + $0x2f8] sm:$0xff] %v1178
  %v1227 = vld [vmem:[%s0] sm:$0xff]
  %v1228 = vld [vmem:[%s0 + $0x8] sm:$0xf]
  %v1229 = vld [vmem:[%s0 + $0xc] sm:$0xff]
  %v1230 = vld [vmem:[%s0 + $0x14] sm:$0xf]
  %v1231 = vld [vmem:[%s0 + $0x18] sm:$0xff]
  %v1232 = vld [vmem:[%s0 + $0x20] sm:$0xf]
  %v1233 = vld [vmem:[%s0 + $0x24] sm:$0xff]
  %v1234 = vld [vmem:[%s0 + $0x2c] sm:$0xf]
  %v1235 = vld [vmem:[%s0 + $0x30] sm:$0xff]
  %v1236 = vld [vmem:[%s0 + $0x38] sm:$0xf]
  %v1237 = vld [vmem:[%s0 + $0x3c] sm:$0xff]
  %v1238 = vld [vmem:[%s0 + $0x44] sm:$0xf]
  %v1239 = vld [vmem:[%s0 + $0x48] sm:$0xff]
  %v1240 = vld [vmem:[%s0 + $0x50] sm:$0xf]
  %v1241 = vld [vmem:[%s0 + $0x54] sm:$0xff]
  %v1242 = vld [vmem:[%s0 + $0x5c] sm:$0xf]
  %v1243 = vld [vmem:[%s0 + $0x60] sm:$0xff]
  %v1244 = vld [vmem:[%s0 + $0x68] sm:$0xf]
  %v1245 = vld [vmem:[%s0 + $0x6c] sm:$0xff]
  %v1246 = vld [vmem:[%s0 + $0x74] sm:$0xf]
  %v1247 = vld [vmem:[%s0 + $0x78] sm:$0xff]
  %v1248 = vld [vmem:[%s0 + $0x80] sm:$0xf]
  %v1249 = vld [vmem:[%s0 + $0x84] sm:$0xff]
  %v1250 = vld [vmem:[%s0 + $0x8c] sm:$0xf]
  %v1251 = vld [vmem:[%s0 + $0x90] sm:$0xff]
  %v1252 = vld [vmem:[%s0 + $0x98] sm:$0xf]
  %v1253 = vld [vmem:[%s0 + $0x9c] sm:$0xff]
  %v1254 = vld [vmem:[%s0 + $0xa4] sm:$0xf]
  %v1255 = vld [vmem:[%s0 + $0xa8] sm:$0xff]
  %v1256 = vld [vmem:[%s0 + $0xb0] sm:$0xf]
  %v1257 = vld [vmem:[%s0 + $0xb4] sm:$0xff]
  %v1258 = vld [vmem:[%s0 + $0xbc] sm:$0xf]
  %v1259 = vld [vmem:[%s0 + $0xc0] sm:$0xff]
  %v1260 = vld [vmem:[%s0 + $0xc8] sm:$0xf]
  %v1261 = vld [vmem:[%s0 + $0xcc] sm:$0xff]
  %v1262 = vld [vmem:[%s0 + $0xd4] sm:$0xf]
  %v1263 = vld [vmem:[%s0 + $0xd8] sm:$0xff]
  %v1264 = vld [vmem:[%s0 + $0xe0] sm:$0xf]
  %v1265 = vld [vmem:[%s0 + $0xe4] sm:$0xff]
  %v1266 = vld [vmem:[%s0 + $0xec] sm:$0xf]
  %v1267 = vld [vmem:[%s0 + $0xf0] sm:$0xff]
  %v1268 = vld [vmem:[%s0 + $0xf8] sm:$0xf]
  %v1269 = vld [vmem:[%s0 + $0xfc] sm:$0xff]
  %v1270 = vld [vmem:[%s0 + $0x104] sm:$0xf]
  %v1271 = vld [vmem:[%s0 + $0x108] sm:$0xff]
  %v1272 = vld [vmem:[%s0 + $0x110] sm:$0xf]
  %v1273 = vld [vmem:[%s0 + $0x114] sm:$0xff]
  %v1274 = vld [vmem:[%s0 + $0x11c] sm:$0xf]
  %v1323 = vunpack.c.l.b16 %v1227
  %v1324 = vunpack.c.h.b16 %v1227
  %v1325 = vunpack.c.l.b16 %v1228
  %v1326 = vunpack.c.l.b16 %v1229
  %v1327 = vunpack.c.h.b16 %v1229
  %v1328 = vunpack.c.l.b16 %v1230
  %v1329 = vunpack.c.l.b16 %v1231
  %v1330 = vunpack.c.h.b16 %v1231
  %v1331 = vunpack.c.l.b16 %v1232
  %v1332 = vunpack.c.l.b16 %v1233
  %v1333 = vunpack.c.h.b16 %v1233
  %v1334 = vunpack.c.l.b16 %v1234
  %v1335 = vunpack.c.l.b16 %v1235
  %v1336 = vunpack.c.h.b16 %v1235
  %v1337 = vunpack.c.l.b16 %v1236
  %v1338 = vunpack.c.l.b16 %v1237
  %v1339 = vunpack.c.h.b16 %v1237
  %v1340 = vunpack.c.l.b16 %v1238
  %v1341 = vunpack.c.l.b16 %v1239
  %v1342 = vunpack.c.h.b16 %v1239
  %v1343 = vunpack.c.l.b16 %v1240
  %v1344 = vunpack.c.l.b16 %v1241
  %v1345 = vunpack.c.h.b16 %v1241
  %v1346 = vunpack.c.l.b16 %v1242
  %v1347 = vunpack.c.l.b16 %v1243
  %v1348 = vunpack.c.h.b16 %v1243
  %v1349 = vunpack.c.l.b16 %v1244
  %v1350 = vunpack.c.l.b16 %v1245
  %v1351 = vunpack.c.h.b16 %v1245
  %v1352 = vunpack.c.l.b16 %v1246
  %v1353 = vunpack.c.l.b16 %v1247
  %v1354 = vunpack.c.h.b16 %v1247
  %v1355 = vunpack.c.l.b16 %v1248
  %v1356 = vunpack.c.l.b16 %v1249
  %v1357 = vunpack.c.h.b16 %v1249
  %v1358 = vunpack.c.l.b16 %v1250
  %v1359 = vunpack.c.l.b16 %v1251
  %v1360 = vunpack.c.h.b16 %v1251
  %v1361 = vunpack.c.l.b16 %v1252
  %v1362 = vunpack.c.l.b16 %v1253
  %v1363 = vunpack.c.h.b16 %v1253
  %v1364 = vunpack.c.l.b16 %v1254
  %v1365 = vunpack.c.l.b16 %v1255
  %v1366 = vunpack.c.h.b16 %v1255
  %v1367 = vunpack.c.l.b16 %v1256
  %v1368 = vunpack.c.l.b16 %v1257
  %v1369 = vunpack.c.h.b16 %v1257
  %v1370 = vunpack.c.l.b16 %v1258
  %v1371 = vunpack.c.l.b16 %v1259
  %v1372 = vunpack.c.h.b16 %v1259
  %v1373 = vunpack.c.l.b16 %v1260
  %v1374 = vunpack.c.l.b16 %v1261
  %v1375 = vunpack.c.h.b16 %v1261
  %v1376 = vunpack.c.l.b16 %v1262
  %v1377 = vunpack.c.l.b16 %v1263
  %v1378 = vunpack.c.h.b16 %v1263
  %v1379 = vunpack.c.l.b16 %v1264
  %v1380 = vunpack.c.l.b16 %v1265
  %v1381 = vunpack.c.h.b16 %v1265
  %v1382 = vunpack.c.l.b16 %v1266
  %v1383 = vunpack.c.l.b16 %v1267
  %v1384 = vunpack.c.h.b16 %v1267
  %v1385 = vunpack.c.l.b16 %v1268
  %v1386 = vunpack.c.l.b16 %v1269
  %v1387 = vunpack.c.h.b16 %v1269
  %v1388 = vunpack.c.l.b16 %v1270
  %v1389 = vunpack.c.l.b16 %v1271
  %v1390 = vunpack.c.h.b16 %v1271
  %v1391 = vunpack.c.l.b16 %v1272
  %v1392 = vunpack.c.l.b16 %v1273
  %v1393 = vunpack.c.h.b16 %v1273
  %v1394 = vunpack.c.l.b16 %v1274
  %v1395 = vpack.c.b16 %v1326, %v1323
  %v1396 = vpack.c.b16 %v1327, %v1324
  %v1397 = vpack.c.b16 %v1328, %v1325
  %v1398 = vpack.c.b16 %v1332, %v1329
  %v1399 = vpack.c.b16 %v1333, %v1330
  %v1400 = vpack.c.b16 %v1334, %v1331
  %v1401 = vpack.c.b16 %v1338, %v1335
  %v1402 = vpack.c.b16 %v1339, %v1336
  %v1403 = vpack.c.b16 %v1340, %v1337
  %v1404 = vpack.c.b16 %v1344, %v1341
  %v1405 = vpack.c.b16 %v1345, %v1342
  %v1406 = vpack.c.b16 %v1346, %v1343
  %v1407 = vpack.c.b16 %v1350, %v1347
  %v1408 = vpack.c.b16 %v1351, %v1348
  %v1409 = vpack.c.b16 %v1352, %v1349
  %v1410 = vpack.c.b16 %v1356, %v1353
  %v1411 = vpack.c.b16 %v1357, %v1354
  %v1412 = vpack.c.b16 %v1358, %v1355
  %v1413 = vpack.c.b16 %v1362, %v1359
  %v1414 = vpack.c.b16 %v1363, %v1360
  %v1415 = vpack.c.b16 %v1364, %v1361
  %v1416 = vpack.c.b16 %v1368, %v1365
  %v1417 = vpack.c.b16 %v1369, %v1366
  %v1418 = vpack.c.b16 %v1370, %v1367
  %v1419 = vpack.c.b16 %v1374, %v1371
  %v1420 = vpack.c.b16 %v1375, %v1372
  %v1421 = vpack.c.b16 %v1376, %v1373
  %v1422 = vpack.c.b16 %v1380, %v1377
  %v1423 = vpack.c.b16 %v1381, %v1378
  %v1424 = vpack.c.b16 %v1382, %v1379
  %v1425 = vpack.c.b16 %v1386, %v1383
  %v1426 = vpack.c.b16 %v1387, %v1384
  %v1427 = vpack.c.b16 %v1388, %v1385
  %v1428 = vpack.c.b16 %v1392, %v1389
  %v1429 = vpack.c.b16 %v1393, %v1390
  %v1430 = vpack.c.b16 %v1394, %v1391
  %1431 = vrot.lane.b32.xlu0 %v1395, 111
  %v1432 = vpop.permute.xlu0 %1431
  %1433 = vrot.lane.b32.xlu0 %v1396, 111
  %v1434 = vpop.permute.xlu0 %1433
  %1435 = vrot.lane.b32.xlu0 %v1397, 111
  %v1436 = vpop.permute.xlu0 %1435
  %1437 = vrot.lane.b32.xlu0 %v1398, 111
  %v1438 = vpop.permute.xlu0 %1437
  %1439 = vrot.lane.b32.xlu0 %v1399, 111
  %v1440 = vpop.permute.xlu0 %1439
  %1441 = vrot.lane.b32.xlu0 %v1400, 111
  %v1442 = vpop.permute.xlu0 %1441
  %1443 = vrot.lane.b32.xlu0 %v1401, 111
  %v1444 = vpop.permute.xlu0 %1443
  %1445 = vrot.lane.b32.xlu0 %v1402, 111
  %v1446 = vpop.permute.xlu0 %1445
  %1447 = vrot.lane.b32.xlu0 %v1403, 111
  %v1448 = vpop.permute.xlu0 %1447
  %1449 = vrot.lane.b32.xlu0 %v1404, 111
  %v1450 = vpop.permute.xlu0 %1449
  %1451 = vrot.lane.b32.xlu0 %v1405, 111
  %v1452 = vpop.permute.xlu0 %1451
  %1453 = vrot.lane.b32.xlu0 %v1406, 111
  %v1454 = vpop.permute.xlu0 %1453
  %1455 = vrot.lane.b32.xlu0 %v1407, 111
  %v1456 = vpop.permute.xlu0 %1455
  %1457 = vrot.lane.b32.xlu0 %v1408, 111
  %v1458 = vpop.permute.xlu0 %1457
  %1459 = vrot.lane.b32.xlu0 %v1409, 111
  %v1460 = vpop.permute.xlu0 %1459
  %1461 = vrot.lane.b32.xlu0 %v1410, 111
  %v1462 = vpop.permute.xlu0 %1461
  %1463 = vrot.lane.b32.xlu0 %v1411, 111
  %v1464 = vpop.permute.xlu0 %1463
  %1465 = vrot.lane.b32.xlu0 %v1412, 111
  %v1466 = vpop.permute.xlu0 %1465
  %1467 = vrot.lane.b32.xlu0 %v1413, 111
  %v1468 = vpop.permute.xlu0 %1467
  %1469 = vrot.lane.b32.xlu0 %v1414, 111
  %v1470 = vpop.permute.xlu0 %1469
  %1471 = vrot.lane.b32.xlu0 %v1415, 111
  %v1472 = vpop.permute.xlu0 %1471
  %1473 = vrot.lane.b32.xlu0 %v1416, 111
  %v1474 = vpop.permute.xlu0 %1473
  %1475 = vrot.lane.b32.xlu0 %v1417, 111
  %v1476 = vpop.permute.xlu0 %1475
  %1477 = vrot.lane.b32.xlu0 %v1418, 111
  %v1478 = vpop.permute.xlu0 %1477
  %1479 = vrot.lane.b32.xlu0 %v1419, 111
  %v1480 = vpop.permute.xlu0 %1479
  %1481 = vrot.lane.b32.xlu0 %v1420, 111
  %v1482 = vpop.permute.xlu0 %1481
  %1483 = vrot.lane.b32.xlu0 %v1421, 111
  %v1484 = vpop.permute.xlu0 %1483
  %1485 = vrot.lane.b32.xlu0 %v1422, 111
  %v1486 = vpop.permute.xlu0 %1485
  %1487 = vrot.lane.b32.xlu0 %v1423, 111
  %v1488 = vpop.permute.xlu0 %1487
  %1489 = vrot.lane.b32.xlu0 %v1424, 111
  %v1490 = vpop.permute.xlu0 %1489
  %1491 = vrot.lane.b32.xlu0 %v1425, 111
  %v1492 = vpop.permute.xlu0 %1491
  %1493 = vrot.lane.b32.xlu0 %v1426, 111
  %v1494 = vpop.permute.xlu0 %1493
  %1495 = vrot.lane.b32.xlu0 %v1427, 111
  %v1496 = vpop.permute.xlu0 %1495
  %1497 = vrot.lane.b32.xlu0 %v1428, 111
  %v1498 = vpop.permute.xlu0 %1497
  %1499 = vrot.lane.b32.xlu0 %v1429, 111
  %v1500 = vpop.permute.xlu0 %1499
  %1501 = vrot.lane.b32.xlu0 %v1430, 111
  %v1502 = vpop.permute.xlu0 %1501
  %vm1503 = vcmask 908288
  %v1504 = vsel %vm1503, %v1432, %v1434
  %v1505 = vsel %vm1503, %v1434, %v1436
  %v1506 = vsel %vm1503, %v1438, %v1440
  %v1507 = vsel %vm1503, %v1440, %v1442
  %v1508 = vsel %vm1503, %v1444, %v1446
  %v1509 = vsel %vm1503, %v1446, %v1448
  %v1510 = vsel %vm1503, %v1450, %v1452
  %v1511 = vsel %vm1503, %v1452, %v1454
  %v1512 = vsel %vm1503, %v1456, %v1458
  %v1513 = vsel %vm1503, %v1458, %v1460
  %v1514 = vsel %vm1503, %v1462, %v1464
  %v1515 = vsel %vm1503, %v1464, %v1466
  %v1516 = vsel %vm1503, %v1468, %v1470
  %v1517 = vsel %vm1503, %v1470, %v1472
  %v1518 = vsel %vm1503, %v1474, %v1476
  %v1519 = vsel %vm1503, %v1476, %v1478
  %v1520 = vsel %vm1503, %v1480, %v1482
  %v1521 = vsel %vm1503, %v1482, %v1484
  %v1522 = vsel %vm1503, %v1486, %v1488
  %v1523 = vsel %vm1503, %v1488, %v1490
  %v1524 = vsel %vm1503, %v1492, %v1494
  %v1525 = vsel %vm1503, %v1494, %v1496
  %v1526 = vsel %vm1503, %v1498, %v1500
  %v1527 = vsel %vm1503, %v1500, %v1502
  %1552 = vst [vmem:[#allocation2 + $0x300] sm:$0xff] %v1504
  %1553 = vst [vmem:[#allocation2 + $0x308] sm:$0xff] %v1505
  %1554 = vst [vmem:[#allocation2 + $0x310] sm:$0xff] %v1506
  %1555 = vst [vmem:[#allocation2 + $0x318] sm:$0xff] %v1507
  %1556 = vst [vmem:[#allocation2 + $0x320] sm:$0xff] %v1508
  %1557 = vst [vmem:[#allocation2 + $0x328] sm:$0xff] %v1509
  %1558 = vst [vmem:[#allocation2 + $0x330] sm:$0xff] %v1510
  %1559 = vst [vmem:[#allocation2 + $0x338] sm:$0xff] %v1511
  %1560 = vst [vmem:[#allocation2 + $0x340] sm:$0xff] %v1512
  %1561 = vst [vmem:[#allocation2 + $0x348] sm:$0xff] %v1513
  %1562 = vst [vmem:[#allocation2 + $0x350] sm:$0xff] %v1514
  %1563 = vst [vmem:[#allocation2 + $0x358] sm:$0xff] %v1515
  %1564 = vst [vmem:[#allocation2 + $0x360] sm:$0xff] %v1516
  %1565 = vst [vmem:[#allocation2 + $0x368] sm:$0xff] %v1517
  %1566 = vst [vmem:[#allocation2 + $0x370] sm:$0xff] %v1518
  %1567 = vst [vmem:[#allocation2 + $0x378] sm:$0xff] %v1519
  %1568 = vst [vmem:[#allocation2 + $0x380] sm:$0xff] %v1520
  %1569 = vst [vmem:[#allocation2 + $0x388] sm:$0xff] %v1521
  %1570 = vst [vmem:[#allocation2 + $0x390] sm:$0xff] %v1522
  %1571 = vst [vmem:[#allocation2 + $0x398] sm:$0xff] %v1523
  %1572 = vst [vmem:[#allocation2 + $0x3a0] sm:$0xff] %v1524
  %1573 = vst [vmem:[#allocation2 + $0x3a8] sm:$0xff] %v1525
  %1574 = vst [vmem:[#allocation2 + $0x3b0] sm:$0xff] %v1526
  %1575 = vst [vmem:[#allocation2 + $0x3b8] sm:$0xff] %v1527
  %v1576 = vld [vmem:[%s0] sm:$0xff]
  %v1577 = vld [vmem:[%s0 + $0x8] sm:$0xf]
  %v1578 = vld [vmem:[%s0 + $0xc] sm:$0xff]
  %v1579 = vld [vmem:[%s0 + $0x14] sm:$0xf]
  %v1580 = vld [vmem:[%s0 + $0x18] sm:$0xff]
  %v1581 = vld [vmem:[%s0 + $0x20] sm:$0xf]
  %v1582 = vld [vmem:[%s0 + $0x24] sm:$0xff]
  %v1583 = vld [vmem:[%s0 + $0x2c] sm:$0xf]
  %v1584 = vld [vmem:[%s0 + $0x30] sm:$0xff]
  %v1585 = vld [vmem:[%s0 + $0x38] sm:$0xf]
  %v1586 = vld [vmem:[%s0 + $0x3c] sm:$0xff]
  %v1587 = vld [vmem:[%s0 + $0x44] sm:$0xf]
  %v1588 = vld [vmem:[%s0 + $0x48] sm:$0xff]
  %v1589 = vld [vmem:[%s0 + $0x50] sm:$0xf]
  %v1590 = vld [vmem:[%s0 + $0x54] sm:$0xff]
  %v1591 = vld [vmem:[%s0 + $0x5c] sm:$0xf]
  %v1592 = vld [vmem:[%s0 + $0x60] sm:$0xff]
  %v1593 = vld [vmem:[%s0 + $0x68] sm:$0xf]
  %v1594 = vld [vmem:[%s0 + $0x6c] sm:$0xff]
  %v1595 = vld [vmem:[%s0 + $0x74] sm:$0xf]
  %v1596 = vld [vmem:[%s0 + $0x78] sm:$0xff]
  %v1597 = vld [vmem:[%s0 + $0x80] sm:$0xf]
  %v1598 = vld [vmem:[%s0 + $0x84] sm:$0xff]
  %v1599 = vld [vmem:[%s0 + $0x8c] sm:$0xf]
  %v1600 = vld [vmem:[%s0 + $0x90] sm:$0xff]
  %v1601 = vld [vmem:[%s0 + $0x98] sm:$0xf]
  %v1602 = vld [vmem:[%s0 + $0x9c] sm:$0xff]
  %v1603 = vld [vmem:[%s0 + $0xa4] sm:$0xf]
  %v1604 = vld [vmem:[%s0 + $0xa8] sm:$0xff]
  %v1605 = vld [vmem:[%s0 + $0xb0] sm:$0xf]
  %v1606 = vld [vmem:[%s0 + $0xb4] sm:$0xff]
  %v1607 = vld [vmem:[%s0 + $0xbc] sm:$0xf]
  %v1608 = vld [vmem:[%s0 + $0xc0] sm:$0xff]
  %v1609 = vld [vmem:[%s0 + $0xc8] sm:$0xf]
  %v1610 = vld [vmem:[%s0 + $0xcc] sm:$0xff]
  %v1611 = vld [vmem:[%s0 + $0xd4] sm:$0xf]
  %v1612 = vld [vmem:[%s0 + $0xd8] sm:$0xff]
  %v1613 = vld [vmem:[%s0 + $0xe0] sm:$0xf]
  %v1614 = vld [vmem:[%s0 + $0xe4] sm:$0xff]
  %v1615 = vld [vmem:[%s0 + $0xec] sm:$0xf]
  %v1616 = vld [vmem:[%s0 + $0xf0] sm:$0xff]
  %v1617 = vld [vmem:[%s0 + $0xf8] sm:$0xf]
  %v1618 = vld [vmem:[%s0 + $0xfc] sm:$0xff]
  %v1619 = vld [vmem:[%s0 + $0x104] sm:$0xf]
  %v1620 = vld [vmem:[%s0 + $0x108] sm:$0xff]
  %v1621 = vld [vmem:[%s0 + $0x110] sm:$0xf]
  %v1622 = vld [vmem:[%s0 + $0x114] sm:$0xff]
  %v1623 = vld [vmem:[%s0 + $0x11c] sm:$0xf]
  %v1672 = vunpack.c.l.b16 %v1576
  %v1673 = vunpack.c.h.b16 %v1576
  %v1674 = vunpack.c.l.b16 %v1577
  %v1675 = vunpack.c.l.b16 %v1578
  %v1676 = vunpack.c.h.b16 %v1578
  %v1677 = vunpack.c.l.b16 %v1579
  %v1678 = vunpack.c.l.b16 %v1580
  %v1679 = vunpack.c.h.b16 %v1580
  %v1680 = vunpack.c.l.b16 %v1581
  %v1681 = vunpack.c.l.b16 %v1582
  %v1682 = vunpack.c.h.b16 %v1582
  %v1683 = vunpack.c.l.b16 %v1583
  %v1684 = vunpack.c.l.b16 %v1584
  %v1685 = vunpack.c.h.b16 %v1584
  %v1686 = vunpack.c.l.b16 %v1585
  %v1687 = vunpack.c.l.b16 %v1586
  %v1688 = vunpack.c.h.b16 %v1586
  %v1689 = vunpack.c.l.b16 %v1587
  %v1690 = vunpack.c.l.b16 %v1588
  %v1691 = vunpack.c.h.b16 %v1588
  %v1692 = vunpack.c.l.b16 %v1589
  %v1693 = vunpack.c.l.b16 %v1590
  %v1694 = vunpack.c.h.b16 %v1590
  %v1695 = vunpack.c.l.b16 %v1591
  %v1696 = vunpack.c.l.b16 %v1592
  %v1697 = vunpack.c.h.b16 %v1592
  %v1698 = vunpack.c.l.b16 %v1593
  %v1699 = vunpack.c.l.b16 %v1594
  %v1700 = vunpack.c.h.b16 %v1594
  %v1701 = vunpack.c.l.b16 %v1595
  %v1702 = vunpack.c.l.b16 %v1596
  %v1703 = vunpack.c.h.b16 %v1596
  %v1704 = vunpack.c.l.b16 %v1597
  %v1705 = vunpack.c.l.b16 %v1598
  %v1706 = vunpack.c.h.b16 %v1598
  %v1707 = vunpack.c.l.b16 %v1599
  %v1708 = vunpack.c.l.b16 %v1600
  %v1709 = vunpack.c.h.b16 %v1600
  %v1710 = vunpack.c.l.b16 %v1601
  %v1711 = vunpack.c.l.b16 %v1602
  %v1712 = vunpack.c.h.b16 %v1602
  %v1713 = vunpack.c.l.b16 %v1603
  %v1714 = vunpack.c.l.b16 %v1604
  %v1715 = vunpack.c.h.b16 %v1604
  %v1716 = vunpack.c.l.b16 %v1605
  %v1717 = vunpack.c.l.b16 %v1606
  %v1718 = vunpack.c.h.b16 %v1606
  %v1719 = vunpack.c.l.b16 %v1607
  %v1720 = vunpack.c.l.b16 %v1608
  %v1721 = vunpack.c.h.b16 %v1608
  %v1722 = vunpack.c.l.b16 %v1609
  %v1723 = vunpack.c.l.b16 %v1610
  %v1724 = vunpack.c.h.b16 %v1610
  %v1725 = vunpack.c.l.b16 %v1611
  %v1726 = vunpack.c.l.b16 %v1612
  %v1727 = vunpack.c.h.b16 %v1612
  %v1728 = vunpack.c.l.b16 %v1613
  %v1729 = vunpack.c.l.b16 %v1614
  %v1730 = vunpack.c.h.b16 %v1614
  %v1731 = vunpack.c.l.b16 %v1615
  %v1732 = vunpack.c.l.b16 %v1616
  %v1733 = vunpack.c.h.b16 %v1616
  %v1734 = vunpack.c.l.b16 %v1617
  %v1735 = vunpack.c.l.b16 %v1618
  %v1736 = vunpack.c.h.b16 %v1618
  %v1737 = vunpack.c.l.b16 %v1619
  %v1738 = vunpack.c.l.b16 %v1620
  %v1739 = vunpack.c.h.b16 %v1620
  %v1740 = vunpack.c.l.b16 %v1621
  %v1741 = vunpack.c.l.b16 %v1622
  %v1742 = vunpack.c.h.b16 %v1622
  %v1743 = vunpack.c.l.b16 %v1623
  %v1744 = vpack.c.b16 %v1675, %v1672
  %v1745 = vpack.c.b16 %v1676, %v1673
  %v1746 = vpack.c.b16 %v1677, %v1674
  %v1747 = vpack.c.b16 %v1681, %v1678
  %v1748 = vpack.c.b16 %v1682, %v1679
  %v1749 = vpack.c.b16 %v1683, %v1680
  %v1750 = vpack.c.b16 %v1687, %v1684
  %v1751 = vpack.c.b16 %v1688, %v1685
  %v1752 = vpack.c.b16 %v1689, %v1686
  %v1753 = vpack.c.b16 %v1693, %v1690
  %v1754 = vpack.c.b16 %v1694, %v1691
  %v1755 = vpack.c.b16 %v1695, %v1692
  %v1756 = vpack.c.b16 %v1699, %v1696
  %v1757 = vpack.c.b16 %v1700, %v1697
  %v1758 = vpack.c.b16 %v1701, %v1698
  %v1759 = vpack.c.b16 %v1705, %v1702
  %v1760 = vpack.c.b16 %v1706, %v1703
  %v1761 = vpack.c.b16 %v1707, %v1704
  %v1762 = vpack.c.b16 %v1711, %v1708
  %v1763 = vpack.c.b16 %v1712, %v1709
  %v1764 = vpack.c.b16 %v1713, %v1710
  %v1765 = vpack.c.b16 %v1717, %v1714
  %v1766 = vpack.c.b16 %v1718, %v1715
  %v1767 = vpack.c.b16 %v1719, %v1716
  %v1768 = vpack.c.b16 %v1723, %v1720
  %v1769 = vpack.c.b16 %v1724, %v1721
  %v1770 = vpack.c.b16 %v1725, %v1722
  %v1771 = vpack.c.b16 %v1729, %v1726
  %v1772 = vpack.c.b16 %v1730, %v1727
  %v1773 = vpack.c.b16 %v1731, %v1728
  %v1774 = vpack.c.b16 %v1735, %v1732
  %v1775 = vpack.c.b16 %v1736, %v1733
  %v1776 = vpack.c.b16 %v1737, %v1734
  %v1777 = vpack.c.b16 %v1741, %v1738
  %v1778 = vpack.c.b16 %v1742, %v1739
  %v1779 = vpack.c.b16 %v1743, %v1740
  %1780 = vrot.lane.b32.xlu0 %v1744, 110
  %v1781 = vpop.permute.xlu0 %1780
  %1782 = vrot.lane.b32.xlu0 %v1745, 110
  %v1783 = vpop.permute.xlu0 %1782
  %1784 = vrot.lane.b32.xlu0 %v1746, 110
  %v1785 = vpop.permute.xlu0 %1784
  %1786 = vrot.lane.b32.xlu0 %v1747, 110
  %v1787 = vpop.permute.xlu0 %1786
  %1788 = vrot.lane.b32.xlu0 %v1748, 110
  %v1789 = vpop.permute.xlu0 %1788
  %1790 = vrot.lane.b32.xlu0 %v1749, 110
  %v1791 = vpop.permute.xlu0 %1790
  %1792 = vrot.lane.b32.xlu0 %v1750, 110
  %v1793 = vpop.permute.xlu0 %1792
  %1794 = vrot.lane.b32.xlu0 %v1751, 110
  %v1795 = vpop.permute.xlu0 %1794
  %1796 = vrot.lane.b32.xlu0 %v1752, 110
  %v1797 = vpop.permute.xlu0 %1796
  %1798 = vrot.lane.b32.xlu0 %v1753, 110
  %v1799 = vpop.permute.xlu0 %1798
  %1800 = vrot.lane.b32.xlu0 %v1754, 110
  %v1801 = vpop.permute.xlu0 %1800
  %1802 = vrot.lane.b32.xlu0 %v1755, 110
  %v1803 = vpop.permute.xlu0 %1802
  %1804 = vrot.lane.b32.xlu0 %v1756, 110
  %v1805 = vpop.permute.xlu0 %1804
  %1806 = vrot.lane.b32.xlu0 %v1757, 110
  %v1807 = vpop.permute.xlu0 %1806
  %1808 = vrot.lane.b32.xlu0 %v1758, 110
  %v1809 = vpop.permute.xlu0 %1808
  %1810 = vrot.lane.b32.xlu0 %v1759, 110
  %v1811 = vpop.permute.xlu0 %1810
  %1812 = vrot.lane.b32.xlu0 %v1760, 110
  %v1813 = vpop.permute.xlu0 %1812
  %1814 = vrot.lane.b32.xlu0 %v1761, 110
  %v1815 = vpop.permute.xlu0 %1814
  %1816 = vrot.lane.b32.xlu0 %v1762, 110
  %v1817 = vpop.permute.xlu0 %1816
  %1818 = vrot.lane.b32.xlu0 %v1763, 110
  %v1819 = vpop.permute.xlu0 %1818
  %1820 = vrot.lane.b32.xlu0 %v1764, 110
  %v1821 = vpop.permute.xlu0 %1820
  %1822 = vrot.lane.b32.xlu0 %v1765, 110
  %v1823 = vpop.permute.xlu0 %1822
  %1824 = vrot.lane.b32.xlu0 %v1766, 110
  %v1825 = vpop.permute.xlu0 %1824
  %1826 = vrot.lane.b32.xlu0 %v1767, 110
  %v1827 = vpop.permute.xlu0 %1826
  %1828 = vrot.lane.b32.xlu0 %v1768, 110
  %v1829 = vpop.permute.xlu0 %1828
  %1830 = vrot.lane.b32.xlu0 %v1769, 110
  %v1831 = vpop.permute.xlu0 %1830
  %1832 = vrot.lane.b32.xlu0 %v1770, 110
  %v1833 = vpop.permute.xlu0 %1832
  %1834 = vrot.lane.b32.xlu0 %v1771, 110
  %v1835 = vpop.permute.xlu0 %1834
  %1836 = vrot.lane.b32.xlu0 %v1772, 110
  %v1837 = vpop.permute.xlu0 %1836
  %1838 = vrot.lane.b32.xlu0 %v1773, 110
  %v1839 = vpop.permute.xlu0 %1838
  %1840 = vrot.lane.b32.xlu0 %v1774, 110
  %v1841 = vpop.permute.xlu0 %1840
  %1842 = vrot.lane.b32.xlu0 %v1775, 110
  %v1843 = vpop.permute.xlu0 %1842
  %1844 = vrot.lane.b32.xlu0 %v1776, 110
  %v1845 = vpop.permute.xlu0 %1844
  %1846 = vrot.lane.b32.xlu0 %v1777, 110
  %v1847 = vpop.permute.xlu0 %1846
  %1848 = vrot.lane.b32.xlu0 %v1778, 110
  %v1849 = vpop.permute.xlu0 %1848
  %1850 = vrot.lane.b32.xlu0 %v1779, 110
  %v1851 = vpop.permute.xlu0 %1850
  %vm1852 = vcmask 900096
  %v1853 = vsel %vm1852, %v1781, %v1783
  %v1854 = vsel %vm1852, %v1783, %v1785
  %v1855 = vsel %vm1852, %v1787, %v1789
  %v1856 = vsel %vm1852, %v1789, %v1791
  %v1857 = vsel %vm1852, %v1793, %v1795
  %v1858 = vsel %vm1852, %v1795, %v1797
  %v1859 = vsel %vm1852, %v1799, %v1801
  %v1860 = vsel %vm1852, %v1801, %v1803
  %v1861 = vsel %vm1852, %v1805, %v1807
  %v1862 = vsel %vm1852, %v1807, %v1809
  %v1863 = vsel %vm1852, %v1811, %v1813
  %v1864 = vsel %vm1852, %v1813, %v1815
  %v1865 = vsel %vm1852, %v1817, %v1819
  %v1866 = vsel %vm1852, %v1819, %v1821
  %v1867 = vsel %vm1852, %v1823, %v1825
  %v1868 = vsel %vm1852, %v1825, %v1827
  %v1869 = vsel %vm1852, %v1829, %v1831
  %v1870 = vsel %vm1852, %v1831, %v1833
  %v1871 = vsel %vm1852, %v1835, %v1837
  %v1872 = vsel %vm1852, %v1837, %v1839
  %v1873 = vsel %vm1852, %v1841, %v1843
  %v1874 = vsel %vm1852, %v1843, %v1845
  %v1875 = vsel %vm1852, %v1847, %v1849
  %v1876 = vsel %vm1852, %v1849, %v1851
  %1901 = vst [vmem:[#allocation2 + $0x3c0] sm:$0xff] %v1853
  %1902 = vst [vmem:[#allocation2 + $0x3c8] sm:$0xff] %v1854
  %1903 = vst [vmem:[#allocation2 + $0x3d0] sm:$0xff] %v1855
  %1904 = vst [vmem:[#allocation2 + $0x3d8] sm:$0xff] %v1856
  %1905 = vst [vmem:[#allocation2 + $0x3e0] sm:$0xff] %v1857
  %1906 = vst [vmem:[#allocation2 + $0x3e8] sm:$0xff] %v1858
  %1907 = vst [vmem:[#allocation2 + $0x3f0] sm:$0xff] %v1859
  %1908 = vst [vmem:[#allocation2 + $0x3f8] sm:$0xff] %v1860
  %1909 = vst [vmem:[#allocation2 + $0x400] sm:$0xff] %v1861
  %1910 = vst [vmem:[#allocation2 + $0x408] sm:$0xff] %v1862
  %1911 = vst [vmem:[#allocation2 + $0x410] sm:$0xff] %v1863
  %1912 = vst [vmem:[#allocation2 + $0x418] sm:$0xff] %v1864
  %1913 = vst [vmem:[#allocation2 + $0x420] sm:$0xff] %v1865
  %1914 = vst [vmem:[#allocation2 + $0x428] sm:$0xff] %v1866
  %1915 = vst [vmem:[#allocation2 + $0x430] sm:$0xff] %v1867
  %1916 = vst [vmem:[#allocation2 + $0x438] sm:$0xff] %v1868
  %1917 = vst [vmem:[#allocation2 + $0x440] sm:$0xff] %v1869
  %1918 = vst [vmem:[#allocation2 + $0x448] sm:$0xff] %v1870
  %1919 = vst [vmem:[#allocation2 + $0x450] sm:$0xff] %v1871
  %1920 = vst [vmem:[#allocation2 + $0x458] sm:$0xff] %v1872
  %1921 = vst [vmem:[#allocation2 + $0x460] sm:$0xff] %v1873
  %1922 = vst [vmem:[#allocation2 + $0x468] sm:$0xff] %v1874
  %1923 = vst [vmem:[#allocation2 + $0x470] sm:$0xff] %v1875
  %1924 = vst [vmem:[#allocation2 + $0x478] sm:$0xff] %v1876
  %v1925 = vld [vmem:[%s0] sm:$0xff]
  %v1926 = vld [vmem:[%s0 + $0x8] sm:$0xf]
  %v1927 = vld [vmem:[%s0 + $0xc] sm:$0xff]
  %v1928 = vld [vmem:[%s0 + $0x14] sm:$0xf]
  %v1929 = vld [vmem:[%s0 + $0x18] sm:$0xff]
  %v1930 = vld [vmem:[%s0 + $0x20] sm:$0xf]
  %v1931 = vld [vmem:[%s0 + $0x24] sm:$0xff]
  %v1932 = vld [vmem:[%s0 + $0x2c] sm:$0xf]
  %v1933 = vld [vmem:[%s0 + $0x30] sm:$0xff]
  %v1934 = vld [vmem:[%s0 + $0x38] sm:$0xf]
  %v1935 = vld [vmem:[%s0 + $0x3c] sm:$0xff]
  %v1936 = vld [vmem:[%s0 + $0x44] sm:$0xf]
  %v1937 = vld [vmem:[%s0 + $0x48] sm:$0xff]
  %v1938 = vld [vmem:[%s0 + $0x50] sm:$0xf]
  %v1939 = vld [vmem:[%s0 + $0x54] sm:$0xff]
  %v1940 = vld [vmem:[%s0 + $0x5c] sm:$0xf]
  %v1941 = vld [vmem:[%s0 + $0x60] sm:$0xff]
  %v1942 = vld [vmem:[%s0 + $0x68] sm:$0xf]
  %v1943 = vld [vmem:[%s0 + $0x6c] sm:$0xff]
  %v1944 = vld [vmem:[%s0 + $0x74] sm:$0xf]
  %v1945 = vld [vmem:[%s0 + $0x78] sm:$0xff]
  %v1946 = vld [vmem:[%s0 + $0x80] sm:$0xf]
  %v1947 = vld [vmem:[%s0 + $0x84] sm:$0xff]
  %v1948 = vld [vmem:[%s0 + $0x8c] sm:$0xf]
  %v1949 = vld [vmem:[%s0 + $0x90] sm:$0xff]
  %v1950 = vld [vmem:[%s0 + $0x98] sm:$0xf]
  %v1951 = vld [vmem:[%s0 + $0x9c] sm:$0xff]
  %v1952 = vld [vmem:[%s0 + $0xa4] sm:$0xf]
  %v1953 = vld [vmem:[%s0 + $0xa8] sm:$0xff]
  %v1954 = vld [vmem:[%s0 + $0xb0] sm:$0xf]
  %v1955 = vld [vmem:[%s0 + $0xb4] sm:$0xff]
  %v1956 = vld [vmem:[%s0 + $0xbc] sm:$0xf]
  %v1957 = vld [vmem:[%s0 + $0xc0] sm:$0xff]
  %v1958 = vld [vmem:[%s0 + $0xc8] sm:$0xf]
  %v1959 = vld [vmem:[%s0 + $0xcc] sm:$0xff]
  %v1960 = vld [vmem:[%s0 + $0xd4] sm:$0xf]
  %v1961 = vld [vmem:[%s0 + $0xd8] sm:$0xff]
  %v1962 = vld [vmem:[%s0 + $0xe0] sm:$0xf]
  %v1963 = vld [vmem:[%s0 + $0xe4] sm:$0xff]
  %v1964 = vld [vmem:[%s0 + $0xec] sm:$0xf]
  %v1965 = vld [vmem:[%s0 + $0xf0] sm:$0xff]
  %v1966 = vld [vmem:[%s0 + $0xf8] sm:$0xf]
  %v1967 = vld [vmem:[%s0 + $0xfc] sm:$0xff]
  %v1968 = vld [vmem:[%s0 + $0x104] sm:$0xf]
  %v1969 = vld [vmem:[%s0 + $0x108] sm:$0xff]
  %v1970 = vld [vmem:[%s0 + $0x110] sm:$0xf]
  %v1971 = vld [vmem:[%s0 + $0x114] sm:$0xff]
  %v1972 = vld [vmem:[%s0 + $0x11c] sm:$0xf]
  %v2021 = vunpack.c.l.b16 %v1925
  %v2022 = vunpack.c.h.b16 %v1925
  %v2023 = vunpack.c.l.b16 %v1926
  %v2024 = vunpack.c.l.b16 %v1927
  %v2025 = vunpack.c.h.b16 %v1927
  %v2026 = vunpack.c.l.b16 %v1928
  %v2027 = vunpack.c.l.b16 %v1929
  %v2028 = vunpack.c.h.b16 %v1929
  %v2029 = vunpack.c.l.b16 %v1930
  %v2030 = vunpack.c.l.b16 %v1931
  %v2031 = vunpack.c.h.b16 %v1931
  %v2032 = vunpack.c.l.b16 %v1932
  %v2033 = vunpack.c.l.b16 %v1933
  %v2034 = vunpack.c.h.b16 %v1933
  %v2035 = vunpack.c.l.b16 %v1934
  %v2036 = vunpack.c.l.b16 %v1935
  %v2037 = vunpack.c.h.b16 %v1935
  %v2038 = vunpack.c.l.b16 %v1936
  %v2039 = vunpack.c.l.b16 %v1937
  %v2040 = vunpack.c.h.b16 %v1937
  %v2041 = vunpack.c.l.b16 %v1938
  %v2042 = vunpack.c.l.b16 %v1939
  %v2043 = vunpack.c.h.b16 %v1939
  %v2044 = vunpack.c.l.b16 %v1940
  %v2045 = vunpack.c.l.b16 %v1941
  %v2046 = vunpack.c.h.b16 %v1941
  %v2047 = vunpack.c.l.b16 %v1942
  %v2048 = vunpack.c.l.b16 %v1943
  %v2049 = vunpack.c.h.b16 %v1943
  %v2050 = vunpack.c.l.b16 %v1944
  %v2051 = vunpack.c.l.b16 %v1945
  %v2052 = vunpack.c.h.b16 %v1945
  %v2053 = vunpack.c.l.b16 %v1946
  %v2054 = vunpack.c.l.b16 %v1947
  %v2055 = vunpack.c.h.b16 %v1947
  %v2056 = vunpack.c.l.b16 %v1948
  %v2057 = vunpack.c.l.b16 %v1949
  %v2058 = vunpack.c.h.b16 %v1949
  %v2059 = vunpack.c.l.b16 %v1950
  %v2060 = vunpack.c.l.b16 %v1951
  %v2061 = vunpack.c.h.b16 %v1951
  %v2062 = vunpack.c.l.b16 %v1952
  %v2063 = vunpack.c.l.b16 %v1953
  %v2064 = vunpack.c.h.b16 %v1953
  %v2065 = vunpack.c.l.b16 %v1954
  %v2066 = vunpack.c.l.b16 %v1955
  %v2067 = vunpack.c.h.b16 %v1955
  %v2068 = vunpack.c.l.b16 %v1956
  %v2069 = vunpack.c.l.b16 %v1957
  %v2070 = vunpack.c.h.b16 %v1957
  %v2071 = vunpack.c.l.b16 %v1958
  %v2072 = vunpack.c.l.b16 %v1959
  %v2073 = vunpack.c.h.b16 %v1959
  %v2074 = vunpack.c.l.b16 %v1960
  %v2075 = vunpack.c.l.b16 %v1961
  %v2076 = vunpack.c.h.b16 %v1961
  %v2077 = vunpack.c.l.b16 %v1962
  %v2078 = vunpack.c.l.b16 %v1963
  %v2079 = vunpack.c.h.b16 %v1963
  %v2080 = vunpack.c.l.b16 %v1964
  %v2081 = vunpack.c.l.b16 %v1965
  %v2082 = vunpack.c.h.b16 %v1965
  %v2083 = vunpack.c.l.b16 %v1966
  %v2084 = vunpack.c.l.b16 %v1967
  %v2085 = vunpack.c.h.b16 %v1967
  %v2086 = vunpack.c.l.b16 %v1968
  %v2087 = vunpack.c.l.b16 %v1969
  %v2088 = vunpack.c.h.b16 %v1969
  %v2089 = vunpack.c.l.b16 %v1970
  %v2090 = vunpack.c.l.b16 %v1971
  %v2091 = vunpack.c.h.b16 %v1971
  %v2092 = vunpack.c.l.b16 %v1972
  %v2093 = vpack.c.b16 %v2024, %v2021
  %v2094 = vpack.c.b16 %v2025, %v2022
  %v2095 = vpack.c.b16 %v2026, %v2023
  %v2096 = vpack.c.b16 %v2030, %v2027
  %v2097 = vpack.c.b16 %v2031, %v2028
  %v2098 = vpack.c.b16 %v2032, %v2029
  %v2099 = vpack.c.b16 %v2036, %v2033
  %v2100 = vpack.c.b16 %v2037, %v2034
  %v2101 = vpack.c.b16 %v2038, %v2035
  %v2102 = vpack.c.b16 %v2042, %v2039
  %v2103 = vpack.c.b16 %v2043, %v2040
  %v2104 = vpack.c.b16 %v2044, %v2041
  %v2105 = vpack.c.b16 %v2048, %v2045
  %v2106 = vpack.c.b16 %v2049, %v2046
  %v2107 = vpack.c.b16 %v2050, %v2047
  %v2108 = vpack.c.b16 %v2054, %v2051
  %v2109 = vpack.c.b16 %v2055, %v2052
  %v2110 = vpack.c.b16 %v2056, %v2053
  %v2111 = vpack.c.b16 %v2060, %v2057
  %v2112 = vpack.c.b16 %v2061, %v2058
  %v2113 = vpack.c.b16 %v2062, %v2059
  %v2114 = vpack.c.b16 %v2066, %v2063
  %v2115 = vpack.c.b16 %v2067, %v2064
  %v2116 = vpack.c.b16 %v2068, %v2065
  %v2117 = vpack.c.b16 %v2072, %v2069
  %v2118 = vpack.c.b16 %v2073, %v2070
  %v2119 = vpack.c.b16 %v2074, %v2071
  %v2120 = vpack.c.b16 %v2078, %v2075
  %v2121 = vpack.c.b16 %v2079, %v2076
  %v2122 = vpack.c.b16 %v2080, %v2077
  %v2123 = vpack.c.b16 %v2084, %v2081
  %v2124 = vpack.c.b16 %v2085, %v2082
  %v2125 = vpack.c.b16 %v2086, %v2083
  %v2126 = vpack.c.b16 %v2090, %v2087
  %v2127 = vpack.c.b16 %v2091, %v2088
  %v2128 = vpack.c.b16 %v2092, %v2089
  %2129 = vrot.lane.b32.xlu0 %v2093, 96
  %v2130 = vpop.permute.xlu0 %2129
  %2131 = vrot.lane.b32.xlu0 %v2094, 96
  %v2132 = vpop.permute.xlu0 %2131
  %2133 = vrot.lane.b32.xlu0 %v2095, 96
  %v2134 = vpop.permute.xlu0 %2133
  %2135 = vrot.lane.b32.xlu0 %v2096, 96
  %v2136 = vpop.permute.xlu0 %2135
  %2137 = vrot.lane.b32.xlu0 %v2097, 96
  %v2138 = vpop.permute.xlu0 %2137
  %2139 = vrot.lane.b32.xlu0 %v2098, 96
  %v2140 = vpop.permute.xlu0 %2139
  %2141 = vrot.lane.b32.xlu0 %v2099, 96
  %v2142 = vpop.permute.xlu0 %2141
  %2143 = vrot.lane.b32.xlu0 %v2100, 96
  %v2144 = vpop.permute.xlu0 %2143
  %2145 = vrot.lane.b32.xlu0 %v2101, 96
  %v2146 = vpop.permute.xlu0 %2145
  %2147 = vrot.lane.b32.xlu0 %v2102, 96
  %v2148 = vpop.permute.xlu0 %2147
  %2149 = vrot.lane.b32.xlu0 %v2103, 96
  %v2150 = vpop.permute.xlu0 %2149
  %2151 = vrot.lane.b32.xlu0 %v2104, 96
  %v2152 = vpop.permute.xlu0 %2151
  %2153 = vrot.lane.b32.xlu0 %v2105, 96
  %v2154 = vpop.permute.xlu0 %2153
  %2155 = vrot.lane.b32.xlu0 %v2106, 96
  %v2156 = vpop.permute.xlu0 %2155
  %2157 = vrot.lane.b32.xlu0 %v2107, 96
  %v2158 = vpop.permute.xlu0 %2157
  %2159 = vrot.lane.b32.xlu0 %v2108, 96
  %v2160 = vpop.permute.xlu0 %2159
  %2161 = vrot.lane.b32.xlu0 %v2109, 96
  %v2162 = vpop.permute.xlu0 %2161
  %2163 = vrot.lane.b32.xlu0 %v2110, 96
  %v2164 = vpop.permute.xlu0 %2163
  %2165 = vrot.lane.b32.xlu0 %v2111, 96
  %v2166 = vpop.permute.xlu0 %2165
  %2167 = vrot.lane.b32.xlu0 %v2112, 96
  %v2168 = vpop.permute.xlu0 %2167
  %2169 = vrot.lane.b32.xlu0 %v2113, 96
  %v2170 = vpop.permute.xlu0 %2169
  %2171 = vrot.lane.b32.xlu0 %v2114, 96
  %v2172 = vpop.permute.xlu0 %2171
  %2173 = vrot.lane.b32.xlu0 %v2115, 96
  %v2174 = vpop.permute.xlu0 %2173
  %2175 = vrot.lane.b32.xlu0 %v2116, 96
  %v2176 = vpop.permute.xlu0 %2175
  %2177 = vrot.lane.b32.xlu0 %v2117, 96
  %v2178 = vpop.permute.xlu0 %2177
  %2179 = vrot.lane.b32.xlu0 %v2118, 96
  %v2180 = vpop.permute.xlu0 %2179
  %2181 = vrot.lane.b32.xlu0 %v2119, 96
  %v2182 = vpop.permute.xlu0 %2181
  %2183 = vrot.lane.b32.xlu0 %v2120, 96
  %v2184 = vpop.permute.xlu0 %2183
  %2185 = vrot.lane.b32.xlu0 %v2121, 96
  %v2186 = vpop.permute.xlu0 %2185
  %2187 = vrot.lane.b32.xlu0 %v2122, 96
  %v2188 = vpop.permute.xlu0 %2187
  %2189 = vrot.lane.b32.xlu0 %v2123, 96
  %v2190 = vpop.permute.xlu0 %2189
  %2191 = vrot.lane.b32.xlu0 %v2124, 96
  %v2192 = vpop.permute.xlu0 %2191
  %2193 = vrot.lane.b32.xlu0 %v2125, 96
  %v2194 = vpop.permute.xlu0 %2193
  %2195 = vrot.lane.b32.xlu0 %v2126, 96
  %v2196 = vpop.permute.xlu0 %2195
  %2197 = vrot.lane.b32.xlu0 %v2127, 96
  %v2198 = vpop.permute.xlu0 %2197
  %2199 = vrot.lane.b32.xlu0 %v2128, 96
  %v2200 = vpop.permute.xlu0 %2199
  %vm2201 = vcmask 785408
  %v2202 = vsel %vm2201, %v2130, %v2132
  %v2203 = vsel %vm2201, %v2132, %v2134
  %v2204 = vsel %vm2201, %v2136, %v2138
  %v2205 = vsel %vm2201, %v2138, %v2140
  %v2206 = vsel %vm2201, %v2142, %v2144
  %v2207 = vsel %vm2201, %v2144, %v2146
  %v2208 = vsel %vm2201, %v2148, %v2150
  %v2209 = vsel %vm2201, %v2150, %v2152
  %v2210 = vsel %vm2201, %v2154, %v2156
  %v2211 = vsel %vm2201, %v2156, %v2158
  %v2212 = vsel %vm2201, %v2160, %v2162
  %v2213 = vsel %vm2201, %v2162, %v2164
  %v2214 = vsel %vm2201, %v2166, %v2168
  %v2215 = vsel %vm2201, %v2168, %v2170
  %v2216 = vsel %vm2201, %v2172, %v2174
  %v2217 = vsel %vm2201, %v2174, %v2176
  %v2218 = vsel %vm2201, %v2178, %v2180
  %v2219 = vsel %vm2201, %v2180, %v2182
  %v2220 = vsel %vm2201, %v2184, %v2186
  %v2221 = vsel %vm2201, %v2186, %v2188
  %v2222 = vsel %vm2201, %v2190, %v2192
  %v2223 = vsel %vm2201, %v2192, %v2194
  %v2224 = vsel %vm2201, %v2196, %v2198
  %v2225 = vsel %vm2201, %v2198, %v2200
  %2250 = vst [vmem:[#allocation2 + $0x480] sm:$0xff] %v2202
  %2251 = vst [vmem:[#allocation2 + $0x488] sm:$0xff] %v2203
  %2252 = vst [vmem:[#allocation2 + $0x490] sm:$0xff] %v2204
  %2253 = vst [vmem:[#allocation2 + $0x498] sm:$0xff] %v2205
  %2254 = vst [vmem:[#allocation2 + $0x4a0] sm:$0xff] %v2206
  %2255 = vst [vmem:[#allocation2 + $0x4a8] sm:$0xff] %v2207
  %2256 = vst [vmem:[#allocation2 + $0x4b0] sm:$0xff] %v2208
  %2257 = vst [vmem:[#allocation2 + $0x4b8] sm:$0xff] %v2209
  %2258 = vst [vmem:[#allocation2 + $0x4c0] sm:$0xff] %v2210
  %2259 = vst [vmem:[#allocation2 + $0x4c8] sm:$0xff] %v2211
  %2260 = vst [vmem:[#allocation2 + $0x4d0] sm:$0xff] %v2212
  %2261 = vst [vmem:[#allocation2 + $0x4d8] sm:$0xff] %v2213
  %2262 = vst [vmem:[#allocation2 + $0x4e0] sm:$0xff] %v2214
  %2263 = vst [vmem:[#allocation2 + $0x4e8] sm:$0xff] %v2215
  %2264 = vst [vmem:[#allocation2 + $0x4f0] sm:$0xff] %v2216
  %2265 = vst [vmem:[#allocation2 + $0x4f8] sm:$0xff] %v2217
  %2266 = vst [vmem:[#allocation2 + $0x500] sm:$0xff] %v2218
  %2267 = vst [vmem:[#allocation2 + $0x508] sm:$0xff] %v2219
  %2268 = vst [vmem:[#allocation2 + $0x510] sm:$0xff] %v2220
  %2269 = vst [vmem:[#allocation2 + $0x518] sm:$0xff] %v2221
  %2270 = vst [vmem:[#allocation2 + $0x520] sm:$0xff] %v2222
  %2271 = vst [vmem:[#allocation2 + $0x528] sm:$0xff] %v2223
  %2272 = vst [vmem:[#allocation2 + $0x530] sm:$0xff] %v2224
  %2273 = vst [vmem:[#allocation2 + $0x538] sm:$0xff] %v2225
  %v2274 = vld [vmem:[%s0] sm:$0xff]
  %v2275 = vld [vmem:[%s0 + $0x8] sm:$0xf]
  %v2276 = vld [vmem:[%s0 + $0xc] sm:$0xff]
  %v2277 = vld [vmem:[%s0 + $0x14] sm:$0xf]
  %v2278 = vld [vmem:[%s0 + $0x18] sm:$0xff]
  %v2279 = vld [vmem:[%s0 + $0x20] sm:$0xf]
  %v2280 = vld [vmem:[%s0 + $0x24] sm:$0xff]
  %v2281 = vld [vmem:[%s0 + $0x2c] sm:$0xf]
  %v2282 = vld [vmem:[%s0 + $0x30] sm:$0xff]
  %v2283 = vld [vmem:[%s0 + $0x38] sm:$0xf]
  %v2284 = vld [vmem:[%s0 + $0x3c] sm:$0xff]
  %v2285 = vld [vmem:[%s0 + $0x44] sm:$0xf]
  %v2286 = vld [vmem:[%s0 + $0x48] sm:$0xff]
  %v2287 = vld [vmem:[%s0 + $0x50] sm:$0xf]
  %v2288 = vld [vmem:[%s0 + $0x54] sm:$0xff]
  %v2289 = vld [vmem:[%s0 + $0x5c] sm:$0xf]
  %v2290 = vld [vmem:[%s0 + $0x60] sm:$0xff]
  %v2291 = vld [vmem:[%s0 + $0x68] sm:$0xf]
  %v2292 = vld [vmem:[%s0 + $0x6c] sm:$0xff]
  %v2293 = vld [vmem:[%s0 + $0x74] sm:$0xf]
  %v2294 = vld [vmem:[%s0 + $0x78] sm:$0xff]
  %v2295 = vld [vmem:[%s0 + $0x80] sm:$0xf]
  %v2296 = vld [vmem:[%s0 + $0x84] sm:$0xff]
  %v2297 = vld [vmem:[%s0 + $0x8c] sm:$0xf]
  %v2298 = vld [vmem:[%s0 + $0x90] sm:$0xff]
  %v2299 = vld [vmem:[%s0 + $0x98] sm:$0xf]
  %v2300 = vld [vmem:[%s0 + $0x9c] sm:$0xff]
  %v2301 = vld [vmem:[%s0 + $0xa4] sm:$0xf]
  %v2302 = vld [vmem:[%s0 + $0xa8] sm:$0xff]
  %v2303 = vld [vmem:[%s0 + $0xb0] sm:$0xf]
  %v2304 = vld [vmem:[%s0 + $0xb4] sm:$0xff]
  %v2305 = vld [vmem:[%s0 + $0xbc] sm:$0xf]
  %v2306 = vld [vmem:[%s0 + $0xc0] sm:$0xff]
  %v2307 = vld [vmem:[%s0 + $0xc8] sm:$0xf]
  %v2308 = vld [vmem:[%s0 + $0xcc] sm:$0xff]
  %v2309 = vld [vmem:[%s0 + $0xd4] sm:$0xf]
  %v2310 = vld [vmem:[%s0 + $0xd8] sm:$0xff]
  %v2311 = vld [vmem:[%s0 + $0xe0] sm:$0xf]
  %v2312 = vld [vmem:[%s0 + $0xe4] sm:$0xff]
  %v2313 = vld [vmem:[%s0 + $0xec] sm:$0xf]
  %v2314 = vld [vmem:[%s0 + $0xf0] sm:$0xff]
  %v2315 = vld [vmem:[%s0 + $0xf8] sm:$0xf]
  %v2316 = vld [vmem:[%s0 + $0xfc] sm:$0xff]
  %v2317 = vld [vmem:[%s0 + $0x104] sm:$0xf]
  %v2318 = vld [vmem:[%s0 + $0x108] sm:$0xff]
  %v2319 = vld [vmem:[%s0 + $0x110] sm:$0xf]
  %v2320 = vld [vmem:[%s0 + $0x114] sm:$0xff]
  %v2321 = vld [vmem:[%s0 + $0x11c] sm:$0xf]
  %v2370 = vunpack.c.l.b16 %v2274
  %v2371 = vunpack.c.h.b16 %v2274
  %v2372 = vunpack.c.l.b16 %v2275
  %v2373 = vunpack.c.l.b16 %v2276
  %v2374 = vunpack.c.h.b16 %v2276
  %v2375 = vunpack.c.l.b16 %v2277
  %v2376 = vunpack.c.l.b16 %v2278
  %v2377 = vunpack.c.h.b16 %v2278
  %v2378 = vunpack.c.l.b16 %v2279
  %v2379 = vunpack.c.l.b16 %v2280
  %v2380 = vunpack.c.h.b16 %v2280
  %v2381 = vunpack.c.l.b16 %v2281
  %v2382 = vunpack.c.l.b16 %v2282
  %v2383 = vunpack.c.h.b16 %v2282
  %v2384 = vunpack.c.l.b16 %v2283
  %v2385 = vunpack.c.l.b16 %v2284
  %v2386 = vunpack.c.h.b16 %v2284
  %v2387 = vunpack.c.l.b16 %v2285
  %v2388 = vunpack.c.l.b16 %v2286
  %v2389 = vunpack.c.h.b16 %v2286
  %v2390 = vunpack.c.l.b16 %v2287
  %v2391 = vunpack.c.l.b16 %v2288
  %v2392 = vunpack.c.h.b16 %v2288
  %v2393 = vunpack.c.l.b16 %v2289
  %v2394 = vunpack.c.l.b16 %v2290
  %v2395 = vunpack.c.h.b16 %v2290
  %v2396 = vunpack.c.l.b16 %v2291
  %v2397 = vunpack.c.l.b16 %v2292
  %v2398 = vunpack.c.h.b16 %v2292
  %v2399 = vunpack.c.l.b16 %v2293
  %v2400 = vunpack.c.l.b16 %v2294
  %v2401 = vunpack.c.h.b16 %v2294
  %v2402 = vunpack.c.l.b16 %v2295
  %v2403 = vunpack.c.l.b16 %v2296
  %v2404 = vunpack.c.h.b16 %v2296
  %v2405 = vunpack.c.l.b16 %v2297
  %v2406 = vunpack.c.l.b16 %v2298
  %v2407 = vunpack.c.h.b16 %v2298
  %v2408 = vunpack.c.l.b16 %v2299
  %v2409 = vunpack.c.l.b16 %v2300
  %v2410 = vunpack.c.h.b16 %v2300
  %v2411 = vunpack.c.l.b16 %v2301
  %v2412 = vunpack.c.l.b16 %v2302
  %v2413 = vunpack.c.h.b16 %v2302
  %v2414 = vunpack.c.l.b16 %v2303
  %v2415 = vunpack.c.l.b16 %v2304
  %v2416 = vunpack.c.h.b16 %v2304
  %v2417 = vunpack.c.l.b16 %v2305
  %v2418 = vunpack.c.l.b16 %v2306
  %v2419 = vunpack.c.h.b16 %v2306
  %v2420 = vunpack.c.l.b16 %v2307
  %v2421 = vunpack.c.l.b16 %v2308
  %v2422 = vunpack.c.h.b16 %v2308
  %v2423 = vunpack.c.l.b16 %v2309
  %v2424 = vunpack.c.l.b16 %v2310
  %v2425 = vunpack.c.h.b16 %v2310
  %v2426 = vunpack.c.l.b16 %v2311
  %v2427 = vunpack.c.l.b16 %v2312
  %v2428 = vunpack.c.h.b16 %v2312
  %v2429 = vunpack.c.l.b16 %v2313
  %v2430 = vunpack.c.l.b16 %v2314
  %v2431 = vunpack.c.h.b16 %v2314
  %v2432 = vunpack.c.l.b16 %v2315
  %v2433 = vunpack.c.l.b16 %v2316
  %v2434 = vunpack.c.h.b16 %v2316
  %v2435 = vunpack.c.l.b16 %v2317
  %v2436 = vunpack.c.l.b16 %v2318
  %v2437 = vunpack.c.h.b16 %v2318
  %v2438 = vunpack.c.l.b16 %v2319
  %v2439 = vunpack.c.l.b16 %v2320
  %v2440 = vunpack.c.h.b16 %v2320
  %v2441 = vunpack.c.l.b16 %v2321
  %v2442 = vpack.c.b16 %v2373, %v2370
  %v2443 = vpack.c.b16 %v2374, %v2371
  %v2444 = vpack.c.b16 %v2375, %v2372
  %v2445 = vpack.c.b16 %v2379, %v2376
  %v2446 = vpack.c.b16 %v2380, %v2377
  %v2447 = vpack.c.b16 %v2381, %v2378
  %v2448 = vpack.c.b16 %v2385, %v2382
  %v2449 = vpack.c.b16 %v2386, %v2383
  %v2450 = vpack.c.b16 %v2387, %v2384
  %v2451 = vpack.c.b16 %v2391, %v2388
  %v2452 = vpack.c.b16 %v2392, %v2389
  %v2453 = vpack.c.b16 %v2393, %v2390
  %v2454 = vpack.c.b16 %v2397, %v2394
  %v2455 = vpack.c.b16 %v2398, %v2395
  %v2456 = vpack.c.b16 %v2399, %v2396
  %v2457 = vpack.c.b16 %v2403, %v2400
  %v2458 = vpack.c.b16 %v2404, %v2401
  %v2459 = vpack.c.b16 %v2405, %v2402
  %v2460 = vpack.c.b16 %v2409, %v2406
  %v2461 = vpack.c.b16 %v2410, %v2407
  %v2462 = vpack.c.b16 %v2411, %v2408
  %v2463 = vpack.c.b16 %v2415, %v2412
  %v2464 = vpack.c.b16 %v2416, %v2413
  %v2465 = vpack.c.b16 %v2417, %v2414
  %v2466 = vpack.c.b16 %v2421, %v2418
  %v2467 = vpack.c.b16 %v2422, %v2419
  %v2468 = vpack.c.b16 %v2423, %v2420
  %v2469 = vpack.c.b16 %v2427, %v2424
  %v2470 = vpack.c.b16 %v2428, %v2425
  %v2471 = vpack.c.b16 %v2429, %v2426
  %v2472 = vpack.c.b16 %v2433, %v2430
  %v2473 = vpack.c.b16 %v2434, %v2431
  %v2474 = vpack.c.b16 %v2435, %v2432
  %v2475 = vpack.c.b16 %v2439, %v2436
  %v2476 = vpack.c.b16 %v2440, %v2437
  %v2477 = vpack.c.b16 %v2441, %v2438
  %2478 = vrot.lane.b32.xlu0 %v2442, 95
  %v2479 = vpop.permute.xlu0 %2478
  %2480 = vrot.lane.b32.xlu0 %v2443, 95
  %v2481 = vpop.permute.xlu0 %2480
  %2482 = vrot.lane.b32.xlu0 %v2444, 95
  %v2483 = vpop.permute.xlu0 %2482
  %2484 = vrot.lane.b32.xlu0 %v2445, 95
  %v2485 = vpop.permute.xlu0 %2484
  %2486 = vrot.lane.b32.xlu0 %v2446, 95
  %v2487 = vpop.permute.xlu0 %2486
  %2488 = vrot.lane.b32.xlu0 %v2447, 95
  %v2489 = vpop.permute.xlu0 %2488
  %2490 = vrot.lane.b32.xlu0 %v2448, 95
  %v2491 = vpop.permute.xlu0 %2490
  %2492 = vrot.lane.b32.xlu0 %v2449, 95
  %v2493 = vpop.permute.xlu0 %2492
  %2494 = vrot.lane.b32.xlu0 %v2450, 95
  %v2495 = vpop.permute.xlu0 %2494
  %2496 = vrot.lane.b32.xlu0 %v2451, 95
  %v2497 = vpop.permute.xlu0 %2496
  %2498 = vrot.lane.b32.xlu0 %v2452, 95
  %v2499 = vpop.permute.xlu0 %2498
  %2500 = vrot.lane.b32.xlu0 %v2453, 95
  %v2501 = vpop.permute.xlu0 %2500
  %2502 = vrot.lane.b32.xlu0 %v2454, 95
  %v2503 = vpop.permute.xlu0 %2502
  %2504 = vrot.lane.b32.xlu0 %v2455, 95
  %v2505 = vpop.permute.xlu0 %2504
  %2506 = vrot.lane.b32.xlu0 %v2456, 95
  %v2507 = vpop.permute.xlu0 %2506
  %2508 = vrot.lane.b32.xlu0 %v2457, 95
  %v2509 = vpop.permute.xlu0 %2508
  %2510 = vrot.lane.b32.xlu0 %v2458, 95
  %v2511 = vpop.permute.xlu0 %2510
  %2512 = vrot.lane.b32.xlu0 %v2459, 95
  %v2513 = vpop.permute.xlu0 %2512
  %2514 = vrot.lane.b32.xlu0 %v2460, 95
  %v2515 = vpop.permute.xlu0 %2514
  %2516 = vrot.lane.b32.xlu0 %v2461, 95
  %v2517 = vpop.permute.xlu0 %2516
  %2518 = vrot.lane.b32.xlu0 %v2462, 95
  %v2519 = vpop.permute.xlu0 %2518
  %2520 = vrot.lane.b32.xlu0 %v2463, 95
  %v2521 = vpop.permute.xlu0 %2520
  %2522 = vrot.lane.b32.xlu0 %v2464, 95
  %v2523 = vpop.permute.xlu0 %2522
  %2524 = vrot.lane.b32.xlu0 %v2465, 95
  %v2525 = vpop.permute.xlu0 %2524
  %2526 = vrot.lane.b32.xlu0 %v2466, 95
  %v2527 = vpop.permute.xlu0 %2526
  %2528 = vrot.lane.b32.xlu0 %v2467, 95
  %v2529 = vpop.permute.xlu0 %2528
  %2530 = vrot.lane.b32.xlu0 %v2468, 95
  %v2531 = vpop.permute.xlu0 %2530
  %2532 = vrot.lane.b32.xlu0 %v2469, 95
  %v2533 = vpop.permute.xlu0 %2532
  %2534 = vrot.lane.b32.xlu0 %v2470, 95
  %v2535 = vpop.permute.xlu0 %2534
  %2536 = vrot.lane.b32.xlu0 %v2471, 95
  %v2537 = vpop.permute.xlu0 %2536
  %2538 = vrot.lane.b32.xlu0 %v2472, 95
  %v2539 = vpop.permute.xlu0 %2538
  %2540 = vrot.lane.b32.xlu0 %v2473, 95
  %v2541 = vpop.permute.xlu0 %2540
  %2542 = vrot.lane.b32.xlu0 %v2474, 95
  %v2543 = vpop.permute.xlu0 %2542
  %2544 = vrot.lane.b32.xlu0 %v2475, 95
  %v2545 = vpop.permute.xlu0 %2544
  %2546 = vrot.lane.b32.xlu0 %v2476, 95
  %v2547 = vpop.permute.xlu0 %2546
  %2548 = vrot.lane.b32.xlu0 %v2477, 95
  %v2549 = vpop.permute.xlu0 %2548
  %vm2550 = vcmask 777216
  %v2551 = vsel %vm2550, %v2479, %v2481
  %v2552 = vsel %vm2550, %v2481, %v2483
  %v2553 = vsel %vm2550, %v2485, %v2487
  %v2554 = vsel %vm2550, %v2487, %v2489
  %v2555 = vsel %vm2550, %v2491, %v2493
  %v2556 = vsel %vm2550, %v2493, %v2495
  %v2557 = vsel %vm2550, %v2497, %v2499
  %v2558 = vsel %vm2550, %v2499, %v2501
  %v2559 = vsel %vm2550, %v2503, %v2505
  %v2560 = vsel %vm2550, %v2505, %v2507
  %v2561 = vsel %vm2550, %v2509, %v2511
  %v2562 = vsel %vm2550, %v2511, %v2513
  %v2563 = vsel %vm2550, %v2515, %v2517
  %v2564 = vsel %vm2550, %v2517, %v2519
  %v2565 = vsel %vm2550, %v2521, %v2523
  %v2566 = vsel %vm2550, %v2523, %v2525
  %v2567 = vsel %vm2550, %v2527, %v2529
  %v2568 = vsel %vm2550, %v2529, %v2531
  %v2569 = vsel %vm2550, %v2533, %v2535
  %v2570 = vsel %vm2550, %v2535, %v2537
  %v2571 = vsel %vm2550, %v2539, %v2541
  %v2572 = vsel %vm2550, %v2541, %v2543
  %v2573 = vsel %vm2550, %v2545, %v2547
  %v2574 = vsel %vm2550, %v2547, %v2549
  %2599 = vst [vmem:[#allocation2 + $0x540] sm:$0xff] %v2551
  %2600 = vst [vmem:[#allocation2 + $0x548] sm:$0xff] %v2552
  %2601 = vst [vmem:[#allocation2 + $0x550] sm:$0xff] %v2553
  %2602 = vst [vmem:[#allocation2 + $0x558] sm:$0xff] %v2554
  %2603 = vst [vmem:[#allocation2 + $0x560] sm:$0xff] %v2555
  %2604 = vst [vmem:[#allocation2 + $0x568] sm:$0xff] %v2556
  %2605 = vst [vmem:[#allocation2 + $0x570] sm:$0xff] %v2557
  %2606 = vst [vmem:[#allocation2 + $0x578] sm:$0xff] %v2558
  %2607 = vst [vmem:[#allocation2 + $0x580] sm:$0xff] %v2559
  %2608 = vst [vmem:[#allocation2 + $0x588] sm:$0xff] %v2560
  %2609 = vst [vmem:[#allocation2 + $0x590] sm:$0xff] %v2561
  %2610 = vst [vmem:[#allocation2 + $0x598] sm:$0xff] %v2562
  %2611 = vst [vmem:[#allocation2 + $0x5a0] sm:$0xff] %v2563
  %2612 = vst [vmem:[#allocation2 + $0x5a8] sm:$0xff] %v2564
  %2613 = vst [vmem:[#allocation2 + $0x5b0] sm:$0xff] %v2565
  %2614 = vst [vmem:[#allocation2 + $0x5b8] sm:$0xff] %v2566
  %2615 = vst [vmem:[#allocation2 + $0x5c0] sm:$0xff] %v2567
  %2616 = vst [vmem:[#allocation2 + $0x5c8] sm:$0xff] %v2568
  %2617 = vst [vmem:[#allocation2 + $0x5d0] sm:$0xff] %v2569
  %2618 = vst [vmem:[#allocation2 + $0x5d8] sm:$0xff] %v2570
  %2619 = vst [vmem:[#allocation2 + $0x5e0] sm:$0xff] %v2571
  %2620 = vst [vmem:[#allocation2 + $0x5e8] sm:$0xff] %v2572
  %2621 = vst [vmem:[#allocation2 + $0x5f0] sm:$0xff] %v2573
  %2622 = vst [vmem:[#allocation2 + $0x5f8] sm:$0xff] %v2574
  %v2623 = vld [vmem:[%s0] sm:$0xff]
  %v2624 = vld [vmem:[%s0 + $0x8] sm:$0xf]
  %v2625 = vld [vmem:[%s0 + $0xc] sm:$0xff]
  %v2626 = vld [vmem:[%s0 + $0x14] sm:$0xf]
  %v2627 = vld [vmem:[%s0 + $0x18] sm:$0xff]
  %v2628 = vld [vmem:[%s0 + $0x20] sm:$0xf]
  %v2629 = vld [vmem:[%s0 + $0x24] sm:$0xff]
  %v2630 = vld [vmem:[%s0 + $0x2c] sm:$0xf]
  %v2631 = vld [vmem:[%s0 + $0x30] sm:$0xff]
  %v2632 = vld [vmem:[%s0 + $0x38] sm:$0xf]
  %v2633 = vld [vmem:[%s0 + $0x3c] sm:$0xff]
  %v2634 = vld [vmem:[%s0 + $0x44] sm:$0xf]
  %v2635 = vld [vmem:[%s0 + $0x48] sm:$0xff]
  %v2636 = vld [vmem:[%s0 + $0x50] sm:$0xf]
  %v2637 = vld [vmem:[%s0 + $0x54] sm:$0xff]
  %v2638 = vld [vmem:[%s0 + $0x5c] sm:$0xf]
  %v2639 = vld [vmem:[%s0 + $0x60] sm:$0xff]
  %v2640 = vld [vmem:[%s0 + $0x68] sm:$0xf]
  %v2641 = vld [vmem:[%s0 + $0x6c] sm:$0xff]
  %v2642 = vld [vmem:[%s0 + $0x74] sm:$0xf]
  %v2643 = vld [vmem:[%s0 + $0x78] sm:$0xff]
  %v2644 = vld [vmem:[%s0 + $0x80] sm:$0xf]
  %v2645 = vld [vmem:[%s0 + $0x84] sm:$0xff]
  %v2646 = vld [vmem:[%s0 + $0x8c] sm:$0xf]
  %v2647 = vld [vmem:[%s0 + $0x90] sm:$0xff]
  %v2648 = vld [vmem:[%s0 + $0x98] sm:$0xf]
  %v2649 = vld [vmem:[%s0 + $0x9c] sm:$0xff]
  %v2650 = vld [vmem:[%s0 + $0xa4] sm:$0xf]
  %v2651 = vld [vmem:[%s0 + $0xa8] sm:$0xff]
  %v2652 = vld [vmem:[%s0 + $0xb0] sm:$0xf]
  %v2653 = vld [vmem:[%s0 + $0xb4] sm:$0xff]
  %v2654 = vld [vmem:[%s0 + $0xbc] sm:$0xf]
  %v2655 = vld [vmem:[%s0 + $0xc0] sm:$0xff]
  %v2656 = vld [vmem:[%s0 + $0xc8] sm:$0xf]
  %v2657 = vld [vmem:[%s0 + $0xcc] sm:$0xff]
  %v2658 = vld [vmem:[%s0 + $0xd4] sm:$0xf]
  %v2659 = vld [vmem:[%s0 + $0xd8] sm:$0xff]
  %v2660 = vld [vmem:[%s0 + $0xe0] sm:$0xf]
  %v2661 = vld [vmem:[%s0 + $0xe4] sm:$0xff]
  %v2662 = vld [vmem:[%s0 + $0xec] sm:$0xf]
  %v2663 = vld [vmem:[%s0 + $0xf0] sm:$0xff]
  %v2664 = vld [vmem:[%s0 + $0xf8] sm:$0xf]
  %v2665 = vld [vmem:[%s0 + $0xfc] sm:$0xff]
  %v2666 = vld [vmem:[%s0 + $0x104] sm:$0xf]
  %v2667 = vld [vmem:[%s0 + $0x108] sm:$0xff]
  %v2668 = vld [vmem:[%s0 + $0x110] sm:$0xf]
  %v2669 = vld [vmem:[%s0 + $0x114] sm:$0xff]
  %v2670 = vld [vmem:[%s0 + $0x11c] sm:$0xf]
  %v2719 = vunpack.c.l.b16 %v2623
  %v2720 = vunpack.c.h.b16 %v2623
  %v2721 = vunpack.c.l.b16 %v2624
  %v2722 = vunpack.c.l.b16 %v2625
  %v2723 = vunpack.c.h.b16 %v2625
  %v2724 = vunpack.c.l.b16 %v2626
  %v2725 = vunpack.c.l.b16 %v2627
  %v2726 = vunpack.c.h.b16 %v2627
  %v2727 = vunpack.c.l.b16 %v2628
  %v2728 = vunpack.c.l.b16 %v2629
  %v2729 = vunpack.c.h.b16 %v2629
  %v2730 = vunpack.c.l.b16 %v2630
  %v2731 = vunpack.c.l.b16 %v2631
  %v2732 = vunpack.c.h.b16 %v2631
  %v2733 = vunpack.c.l.b16 %v2632
  %v2734 = vunpack.c.l.b16 %v2633
  %v2735 = vunpack.c.h.b16 %v2633
  %v2736 = vunpack.c.l.b16 %v2634
  %v2737 = vunpack.c.l.b16 %v2635
  %v2738 = vunpack.c.h.b16 %v2635
  %v2739 = vunpack.c.l.b16 %v2636
  %v2740 = vunpack.c.l.b16 %v2637
  %v2741 = vunpack.c.h.b16 %v2637
  %v2742 = vunpack.c.l.b16 %v2638
  %v2743 = vunpack.c.l.b16 %v2639
  %v2744 = vunpack.c.h.b16 %v2639
  %v2745 = vunpack.c.l.b16 %v2640
  %v2746 = vunpack.c.l.b16 %v2641
  %v2747 = vunpack.c.h.b16 %v2641
  %v2748 = vunpack.c.l.b16 %v2642
  %v2749 = vunpack.c.l.b16 %v2643
  %v2750 = vunpack.c.h.b16 %v2643
  %v2751 = vunpack.c.l.b16 %v2644
  %v2752 = vunpack.c.l.b16 %v2645
  %v2753 = vunpack.c.h.b16 %v2645
  %v2754 = vunpack.c.l.b16 %v2646
  %v2755 = vunpack.c.l.b16 %v2647
  %v2756 = vunpack.c.h.b16 %v2647
  %v2757 = vunpack.c.l.b16 %v2648
  %v2758 = vunpack.c.l.b16 %v2649
  %v2759 = vunpack.c.h.b16 %v2649
  %v2760 = vunpack.c.l.b16 %v2650
  %v2761 = vunpack.c.l.b16 %v2651
  %v2762 = vunpack.c.h.b16 %v2651
  %v2763 = vunpack.c.l.b16 %v2652
  %v2764 = vunpack.c.l.b16 %v2653
  %v2765 = vunpack.c.h.b16 %v2653
  %v2766 = vunpack.c.l.b16 %v2654
  %v2767 = vunpack.c.l.b16 %v2655
  %v2768 = vunpack.c.h.b16 %v2655
  %v2769 = vunpack.c.l.b16 %v2656
  %v2770 = vunpack.c.l.b16 %v2657
  %v2771 = vunpack.c.h.b16 %v2657
  %v2772 = vunpack.c.l.b16 %v2658
  %v2773 = vunpack.c.l.b16 %v2659
  %v2774 = vunpack.c.h.b16 %v2659
  %v2775 = vunpack.c.l.b16 %v2660
  %v2776 = vunpack.c.l.b16 %v2661
  %v2777 = vunpack.c.h.b16 %v2661
  %v2778 = vunpack.c.l.b16 %v2662
  %v2779 = vunpack.c.l.b16 %v2663
  %v2780 = vunpack.c.h.b16 %v2663
  %v2781 = vunpack.c.l.b16 %v2664
  %v2782 = vunpack.c.l.b16 %v2665
  %v2783 = vunpack.c.h.b16 %v2665
  %v2784 = vunpack.c.l.b16 %v2666
  %v2785 = vunpack.c.l.b16 %v2667
  %v2786 = vunpack.c.h.b16 %v2667
  %v2787 = vunpack.c.l.b16 %v2668
  %v2788 = vunpack.c.l.b16 %v2669
  %v2789 = vunpack.c.h.b16 %v2669
  %v2790 = vunpack.c.l.b16 %v2670
  %v2791 = vpack.c.b16 %v2722, %v2719
  %v2792 = vpack.c.b16 %v2723, %v2720
  %v2793 = vpack.c.b16 %v2724, %v2721
  %v2794 = vpack.c.b16 %v2728, %v2725
  %v2795 = vpack.c.b16 %v2729, %v2726
  %v2796 = vpack.c.b16 %v2730, %v2727
  %v2797 = vpack.c.b16 %v2734, %v2731
  %v2798 = vpack.c.b16 %v2735, %v2732
  %v2799 = vpack.c.b16 %v2736, %v2733
  %v2800 = vpack.c.b16 %v2740, %v2737
  %v2801 = vpack.c.b16 %v2741, %v2738
  %v2802 = vpack.c.b16 %v2742, %v2739
  %v2803 = vpack.c.b16 %v2746, %v2743
  %v2804 = vpack.c.b16 %v2747, %v2744
  %v2805 = vpack.c.b16 %v2748, %v2745
  %v2806 = vpack.c.b16 %v2752, %v2749
  %v2807 = vpack.c.b16 %v2753, %v2750
  %v2808 = vpack.c.b16 %v2754, %v2751
  %v2809 = vpack.c.b16 %v2758, %v2755
  %v2810 = vpack.c.b16 %v2759, %v2756
  %v2811 = vpack.c.b16 %v2760, %v2757
  %v2812 = vpack.c.b16 %v2764, %v2761
  %v2813 = vpack.c.b16 %v2765, %v2762
  %v2814 = vpack.c.b16 %v2766, %v2763
  %v2815 = vpack.c.b16 %v2770, %v2767
  %v2816 = vpack.c.b16 %v2771, %v2768
  %v2817 = vpack.c.b16 %v2772, %v2769
  %v2818 = vpack.c.b16 %v2776, %v2773
  %v2819 = vpack.c.b16 %v2777, %v2774
  %v2820 = vpack.c.b16 %v2778, %v2775
  %v2821 = vpack.c.b16 %v2782, %v2779
  %v2822 = vpack.c.b16 %v2783, %v2780
  %v2823 = vpack.c.b16 %v2784, %v2781
  %v2824 = vpack.c.b16 %v2788, %v2785
  %v2825 = vpack.c.b16 %v2789, %v2786
  %v2826 = vpack.c.b16 %v2790, %v2787
  %2827 = vrot.lane.b32.xlu0 %v2791, 94
  %v2828 = vpop.permute.xlu0 %2827
  %2829 = vrot.lane.b32.xlu0 %v2792, 94
  %v2830 = vpop.permute.xlu0 %2829
  %2831 = vrot.lane.b32.xlu0 %v2793, 94
  %v2832 = vpop.permute.xlu0 %2831
  %2833 = vrot.lane.b32.xlu0 %v2794, 94
  %v2834 = vpop.permute.xlu0 %2833
  %2835 = vrot.lane.b32.xlu0 %v2795, 94
  %v2836 = vpop.permute.xlu0 %2835
  %2837 = vrot.lane.b32.xlu0 %v2796, 94
  %v2838 = vpop.permute.xlu0 %2837
  %2839 = vrot.lane.b32.xlu0 %v2797, 94
  %v2840 = vpop.permute.xlu0 %2839
  %2841 = vrot.lane.b32.xlu0 %v2798, 94
  %v2842 = vpop.permute.xlu0 %2841
  %2843 = vrot.lane.b32.xlu0 %v2799, 94
  %v2844 = vpop.permute.xlu0 %2843
  %2845 = vrot.lane.b32.xlu0 %v2800, 94
  %v2846 = vpop.permute.xlu0 %2845
  %2847 = vrot.lane.b32.xlu0 %v2801, 94
  %v2848 = vpop.permute.xlu0 %2847
  %2849 = vrot.lane.b32.xlu0 %v2802, 94
  %v2850 = vpop.permute.xlu0 %2849
  %2851 = vrot.lane.b32.xlu0 %v2803, 94
  %v2852 = vpop.permute.xlu0 %2851
  %2853 = vrot.lane.b32.xlu0 %v2804, 94
  %v2854 = vpop.permute.xlu0 %2853
  %2855 = vrot.lane.b32.xlu0 %v2805, 94
  %v2856 = vpop.permute.xlu0 %2855
  %2857 = vrot.lane.b32.xlu0 %v2806, 94
  %v2858 = vpop.permute.xlu0 %2857
  %2859 = vrot.lane.b32.xlu0 %v2807, 94
  %v2860 = vpop.permute.xlu0 %2859
  %2861 = vrot.lane.b32.xlu0 %v2808, 94
  %v2862 = vpop.permute.xlu0 %2861
  %2863 = vrot.lane.b32.xlu0 %v2809, 94
  %v2864 = vpop.permute.xlu0 %2863
  %2865 = vrot.lane.b32.xlu0 %v2810, 94
  %v2866 = vpop.permute.xlu0 %2865
  %2867 = vrot.lane.b32.xlu0 %v2811, 94
  %v2868 = vpop.permute.xlu0 %2867
  %2869 = vrot.lane.b32.xlu0 %v2812, 94
  %v2870 = vpop.permute.xlu0 %2869
  %2871 = vrot.lane.b32.xlu0 %v2813, 94
  %v2872 = vpop.permute.xlu0 %2871
  %2873 = vrot.lane.b32.xlu0 %v2814, 94
  %v2874 = vpop.permute.xlu0 %2873
  %2875 = vrot.lane.b32.xlu0 %v2815, 94
  %v2876 = vpop.permute.xlu0 %2875
  %2877 = vrot.lane.b32.xlu0 %v2816, 94
  %v2878 = vpop.permute.xlu0 %2877
  %2879 = vrot.lane.b32.xlu0 %v2817, 94
  %v2880 = vpop.permute.xlu0 %2879
  %2881 = vrot.lane.b32.xlu0 %v2818, 94
  %v2882 = vpop.permute.xlu0 %2881
  %2883 = vrot.lane.b32.xlu0 %v2819, 94
  %v2884 = vpop.permute.xlu0 %2883
  %2885 = vrot.lane.b32.xlu0 %v2820, 94
  %v2886 = vpop.permute.xlu0 %2885
  %2887 = vrot.lane.b32.xlu0 %v2821, 94
  %v2888 = vpop.permute.xlu0 %2887
  %2889 = vrot.lane.b32.xlu0 %v2822, 94
  %v2890 = vpop.permute.xlu0 %2889
  %2891 = vrot.lane.b32.xlu0 %v2823, 94
  %v2892 = vpop.permute.xlu0 %2891
  %2893 = vrot.lane.b32.xlu0 %v2824, 94
  %v2894 = vpop.permute.xlu0 %2893
  %2895 = vrot.lane.b32.xlu0 %v2825, 94
  %v2896 = vpop.permute.xlu0 %2895
  %2897 = vrot.lane.b32.xlu0 %v2826, 94
  %v2898 = vpop.permute.xlu0 %2897
  %vm2899 = vcmask 769024
  %v2900 = vsel %vm2899, %v2828, %v2830
  %v2901 = vsel %vm2899, %v2830, %v2832
  %v2902 = vsel %vm2899, %v2834, %v2836
  %v2903 = vsel %vm2899, %v2836, %v2838
  %v2904 = vsel %vm2899, %v2840, %v2842
  %v2905 = vsel %vm2899, %v2842, %v2844
  %v2906 = vsel %vm2899, %v2846, %v2848
  %v2907 = vsel %vm2899, %v2848, %v2850
  %v2908 = vsel %vm2899, %v2852, %v2854
  %v2909 = vsel %vm2899, %v2854, %v2856
  %v2910 = vsel %vm2899, %v2858, %v2860
  %v2911 = vsel %vm2899, %v2860, %v2862
  %v2912 = vsel %vm2899, %v2864, %v2866
  %v2913 = vsel %vm2899, %v2866, %v2868
  %v2914 = vsel %vm2899, %v2870, %v2872
  %v2915 = vsel %vm2899, %v2872, %v2874
  %v2916 = vsel %vm2899, %v2876, %v2878
  %v2917 = vsel %vm2899, %v2878, %v2880
  %v2918 = vsel %vm2899, %v2882, %v2884
  %v2919 = vsel %vm2899, %v2884, %v2886
  %v2920 = vsel %vm2899, %v2888, %v2890
  %v2921 = vsel %vm2899, %v2890, %v2892
  %v2922 = vsel %vm2899, %v2894, %v2896
  %v2923 = vsel %vm2899, %v2896, %v2898
  %2948 = vst [vmem:[#allocation2 + $0x600] sm:$0xff] %v2900
  %2949 = vst [vmem:[#allocation2 + $0x608] sm:$0xff] %v2901
  %2950 = vst [vmem:[#allocation2 + $0x610] sm:$0xff] %v2902
  %2951 = vst [vmem:[#allocation2 + $0x618] sm:$0xff] %v2903
  %2952 = vst [vmem:[#allocation2 + $0x620] sm:$0xff] %v2904
  %2953 = vst [vmem:[#allocation2 + $0x628] sm:$0xff] %v2905
  %2954 = vst [vmem:[#allocation2 + $0x630] sm:$0xff] %v2906
  %2955 = vst [vmem:[#allocation2 + $0x638] sm:$0xff] %v2907
  %2956 = vst [vmem:[#allocation2 + $0x640] sm:$0xff] %v2908
  %2957 = vst [vmem:[#allocation2 + $0x648] sm:$0xff] %v2909
  %2958 = vst [vmem:[#allocation2 + $0x650] sm:$0xff] %v2910
  %2959 = vst [vmem:[#allocation2 + $0x658] sm:$0xff] %v2911
  %2960 = vst [vmem:[#allocation2 + $0x660] sm:$0xff] %v2912
  %2961 = vst [vmem:[#allocation2 + $0x668] sm:$0xff] %v2913
  %2962 = vst [vmem:[#allocation2 + $0x670] sm:$0xff] %v2914
  %2963 = vst [vmem:[#allocation2 + $0x678] sm:$0xff] %v2915
  %2964 = vst [vmem:[#allocation2 + $0x680] sm:$0xff] %v2916
  %2965 = vst [vmem:[#allocation2 + $0x688] sm:$0xff] %v2917
  %2966 = vst [vmem:[#allocation2 + $0x690] sm:$0xff] %v2918
  %2967 = vst [vmem:[#allocation2 + $0x698] sm:$0xff] %v2919
  %2968 = vst [vmem:[#allocation2 + $0x6a0] sm:$0xff] %v2920
  %2969 = vst [vmem:[#allocation2 + $0x6a8] sm:$0xff] %v2921
  %2970 = vst [vmem:[#allocation2 + $0x6b0] sm:$0xff] %v2922
  %2971 = vst [vmem:[#allocation2 + $0x6b8] sm:$0xff] %v2923
  %v2972 = vld [vmem:[%s1] sm:$0xff]
  %v2973 = vld [vmem:[%s1 + $0x8] sm:$0xff]
  %v2974 = vld [vmem:[%s1 + $0x10] sm:$0xff]
  %v2975 = vld [vmem:[%s1 + $0x18] sm:$0xff]
  %v2976 = vld [vmem:[%s1 + $0x20] sm:$0xff]
  %v2977 = vld [vmem:[%s1 + $0x28] sm:$0xff]
  %v2978 = vld [vmem:[%s1 + $0x30] sm:$0xff]
  %v2979 = vld [vmem:[%s1 + $0x38] sm:$0xff]
  %v2980 = vld [vmem:[%s1 + $0x40] sm:$0xff]
  %v2981 = vld [vmem:[%s1 + $0x48] sm:$0xff]
  %v2982 = vld [vmem:[%s1 + $0x50] sm:$0xff]
  %v2983 = vld [vmem:[%s1 + $0x58] sm:$0xff]
  %v2984 = vld [vmem:[%s1 + $0x60] sm:$0xff]
  %v2985 = vld [vmem:[%s1 + $0x68] sm:$0xff]
  %v2986 = vld [vmem:[%s1 + $0x70] sm:$0xff]
  %v2987 = vld [vmem:[%s1 + $0x78] sm:$0xff]
  %v2988 = vld [vmem:[%s1 + $0x80] sm:$0xff]
  %v2989 = vld [vmem:[%s1 + $0x88] sm:$0xff]
  %v2990 = vld [vmem:[%s1 + $0x90] sm:$0xff]
  %v2991 = vld [vmem:[%s1 + $0x98] sm:$0xff]
  %v2992 = vld [vmem:[%s1 + $0xa0] sm:$0xff]
  %v2993 = vld [vmem:[%s1 + $0xa8] sm:$0xff]
  %v2994 = vld [vmem:[%s1 + $0xb0] sm:$0xff]
  %v2995 = vld [vmem:[%s1 + $0xb8] sm:$0xff]
  %v2996 = vld [vmem:[%s1 + $0xc0] sm:$0xff]
  %v2997 = vld [vmem:[%s1 + $0xc8] sm:$0xff]
  %v2998 = vld [vmem:[%s1 + $0xd0] sm:$0xff]
  %v2999 = vld [vmem:[%s1 + $0xd8] sm:$0xff]
  %v3000 = vld [vmem:[%s1 + $0xe0] sm:$0xff]
  %v3001 = vld [vmem:[%s1 + $0xe8] sm:$0xff]
  %v3002 = vld [vmem:[%s1 + $0xf0] sm:$0xff]
  %v3003 = vld [vmem:[%s1 + $0xf8] sm:$0xff]
  %v3004 = vld [vmem:[%s1 + $0x100] sm:$0xff]
  %v3005 = vld [vmem:[%s1 + $0x108] sm:$0xff]
  %v3006 = vld [vmem:[%s1 + $0x110] sm:$0xff]
  %v3007 = vld [vmem:[%s1 + $0x118] sm:$0xff]
  %v3008 = vld [vmem:[%s1 + $0x120] sm:$0xff]
  %v3009 = vld [vmem:[%s1 + $0x128] sm:$0xff]
  %v3010 = vld [vmem:[%s1 + $0x130] sm:$0xff]
  %v3011 = vld [vmem:[%s1 + $0x138] sm:$0xff]
  %v3012 = vld [vmem:[%s1 + $0x140] sm:$0xff]
  %v3013 = vld [vmem:[%s1 + $0x148] sm:$0xff]
  %v3014 = vld [vmem:[#allocation2] sm:$0xff]
  %v3015 = vld [vmem:[#allocation2 + $0x8] sm:$0xff]
  %v3016 = vld [vmem:[#allocation2 + $0x10] sm:$0xff]
  %v3017 = vld [vmem:[#allocation2 + $0x18] sm:$0xff]
  %v3018 = vld [vmem:[#allocation2 + $0x20] sm:$0xff]
  %v3019 = vld [vmem:[#allocation2 + $0x28] sm:$0xff]
  %v3020 = vld [vmem:[#allocation2 + $0x30] sm:$0xff]
  %v3021 = vld [vmem:[#allocation2 + $0x38] sm:$0xff]
  %v3022 = vld [vmem:[#allocation2 + $0x40] sm:$0xff]
  %v3023 = vld [vmem:[#allocation2 + $0x48] sm:$0xff]
  %v3024 = vld [vmem:[#allocation2 + $0x50] sm:$0xff]
  %v3025 = vld [vmem:[#allocation2 + $0x58] sm:$0xff]
  %v3026 = vld [vmem:[#allocation2 + $0x60] sm:$0xff]
  %v3027 = vld [vmem:[#allocation2 + $0x68] sm:$0xff]
  %v3028 = vld [vmem:[#allocation2 + $0x70] sm:$0xff]
  %v3029 = vld [vmem:[#allocation2 + $0x78] sm:$0xff]
  %v3030 = vld [vmem:[#allocation2 + $0x80] sm:$0xff]
  %v3031 = vld [vmem:[#allocation2 + $0x88] sm:$0xff]
  %v3032 = vld [vmem:[#allocation2 + $0x90] sm:$0xff]
  %v3033 = vld [vmem:[#allocation2 + $0x98] sm:$0xff]
  %v3034 = vld [vmem:[#allocation2 + $0xa0] sm:$0xff]
  %v3035 = vld [vmem:[#allocation2 + $0xa8] sm:$0xff]
  %v3036 = vld [vmem:[#allocation2 + $0xb0] sm:$0xff]
  %v3037 = vld [vmem:[#allocation2 + $0xb8] sm:$0xff]
  %v3038 = vld [vmem:[#allocation2 + $0xc0] sm:$0xff]
  %v3039 = vld [vmem:[#allocation2 + $0xc8] sm:$0xff]
  %v3040 = vld [vmem:[#allocation2 + $0xd0] sm:$0xff]
  %v3041 = vld [vmem:[#allocation2 + $0xd8] sm:$0xff]
  %v3042 = vld [vmem:[#allocation2 + $0xe0] sm:$0xff]
  %v3043 = vld [vmem:[#allocation2 + $0xe8] sm:$0xff]
  %v3044 = vld [vmem:[#allocation2 + $0xf0] sm:$0xff]
  %v3045 = vld [vmem:[#allocation2 + $0xf8] sm:$0xff]
  %v3046 = vld [vmem:[#allocation2 + $0x100] sm:$0xff]
  %v3047 = vld [vmem:[#allocation2 + $0x108] sm:$0xff]
  %v3048 = vld [vmem:[#allocation2 + $0x110] sm:$0xff]
  %v3049 = vld [vmem:[#allocation2 + $0x118] sm:$0xff]
  %v3050 = vld [vmem:[#allocation2 + $0x120] sm:$0xff]
  %v3051 = vld [vmem:[#allocation2 + $0x128] sm:$0xff]
  %v3052 = vld [vmem:[#allocation2 + $0x130] sm:$0xff]
  %v3053 = vld [vmem:[#allocation2 + $0x138] sm:$0xff]
  %v3054 = vld [vmem:[#allocation2 + $0x140] sm:$0xff]
  %v3055 = vld [vmem:[#allocation2 + $0x148] sm:$0xff]
  %v3056 = vld [vmem:[#allocation2 + $0x150] sm:$0xff]
  %v3057 = vld [vmem:[#allocation2 + $0x158] sm:$0xff]
  %v3058 = vld [vmem:[#allocation2 + $0x160] sm:$0xff]
  %v3059 = vld [vmem:[#allocation2 + $0x168] sm:$0xff]
  %v3060 = vld [vmem:[#allocation2 + $0x170] sm:$0xff]
  %v3061 = vld [vmem:[#allocation2 + $0x178] sm:$0xff]
  %v3062 = vld [vmem:[#allocation2 + $0x180] sm:$0xff]
  %v3063 = vld [vmem:[#allocation2 + $0x188] sm:$0xff]
  %v3064 = vld [vmem:[#allocation2 + $0x190] sm:$0xff]
  %v3065 = vld [vmem:[#allocation2 + $0x198] sm:$0xff]
  %v3066 = vld [vmem:[#allocation2 + $0x1a0] sm:$0xff]
  %v3067 = vld [vmem:[#allocation2 + $0x1a8] sm:$0xff]
  %v3068 = vld [vmem:[#allocation2 + $0x1b0] sm:$0xff]
  %v3069 = vld [vmem:[#allocation2 + $0x1b8] sm:$0xff]
  %v3070 = vld [vmem:[#allocation2 + $0x1c0] sm:$0xff]
  %v3071 = vld [vmem:[#allocation2 + $0x1c8] sm:$0xff]
  %v3072 = vld [vmem:[#allocation2 + $0x1d0] sm:$0xff]
  %v3073 = vld [vmem:[#allocation2 + $0x1d8] sm:$0xff]
  %v3074 = vld [vmem:[#allocation2 + $0x1e0] sm:$0xff]
  %v3075 = vld [vmem:[#allocation2 + $0x1e8] sm:$0xff]
  %v3076 = vld [vmem:[#allocation2 + $0x1f0] sm:$0xff]
  %v3077 = vld [vmem:[#allocation2 + $0x1f8] sm:$0xff]
  %v3078 = vld [vmem:[#allocation2 + $0x200] sm:$0xff]
  %v3079 = vld [vmem:[#allocation2 + $0x208] sm:$0xff]
  %v3080 = vld [vmem:[#allocation2 + $0x210] sm:$0xff]
  %v3081 = vld [vmem:[#allocation2 + $0x218] sm:$0xff]
  %v3082 = vld [vmem:[#allocation2 + $0x220] sm:$0xff]
  %v3083 = vld [vmem:[#allocation2 + $0x228] sm:$0xff]
  %v3084 = vld [vmem:[#allocation2 + $0x230] sm:$0xff]
  %v3085 = vld [vmem:[#allocation2 + $0x238] sm:$0xff]
  %v3086 = vld [vmem:[#allocation2 + $0x240] sm:$0xff]
  %v3087 = vld [vmem:[#allocation2 + $0x248] sm:$0xff]
  %v3088 = vld [vmem:[#allocation2 + $0x250] sm:$0xff]
  %v3089 = vld [vmem:[#allocation2 + $0x258] sm:$0xff]
  %v3090 = vld [vmem:[#allocation2 + $0x260] sm:$0xff]
  %v3091 = vld [vmem:[#allocation2 + $0x268] sm:$0xff]
  %v3092 = vld [vmem:[#allocation2 + $0x270] sm:$0xff]
  %v3093 = vld [vmem:[#allocation2 + $0x278] sm:$0xff]
  %v3094 = vld [vmem:[#allocation2 + $0x280] sm:$0xff]
  %v3095 = vld [vmem:[#allocation2 + $0x288] sm:$0xff]
  %v3096 = vld [vmem:[#allocation2 + $0x290] sm:$0xff]
  %v3097 = vld [vmem:[#allocation2 + $0x298] sm:$0xff]
  %v3098 = vld [vmem:[#allocation2 + $0x2a0] sm:$0xff]
  %v3099 = vld [vmem:[#allocation2 + $0x2a8] sm:$0xff]
  %v3100 = vld [vmem:[#allocation2 + $0x2b0] sm:$0xff]
  %v3101 = vld [vmem:[#allocation2 + $0x2b8] sm:$0xff]
  %v3102 = vld [vmem:[#allocation2 + $0x2c0] sm:$0xff]
  %v3103 = vld [vmem:[#allocation2 + $0x2c8] sm:$0xff]
  %v3104 = vld [vmem:[#allocation2 + $0x2d0] sm:$0xff]
  %v3105 = vld [vmem:[#allocation2 + $0x2d8] sm:$0xff]
  %v3106 = vld [vmem:[#allocation2 + $0x2e0] sm:$0xff]
  %v3107 = vld [vmem:[#allocation2 + $0x2e8] sm:$0xff]
  %v3108 = vld [vmem:[#allocation2 + $0x2f0] sm:$0xff]
  %v3109 = vld [vmem:[#allocation2 + $0x2f8] sm:$0xff]
  %v3110 = vld [vmem:[#allocation2 + $0x300] sm:$0xff]
  %v3111 = vld [vmem:[#allocation2 + $0x308] sm:$0xff]
  %v3112 = vld [vmem:[#allocation2 + $0x310] sm:$0xff]
  %v3113 = vld [vmem:[#allocation2 + $0x318] sm:$0xff]
  %v3114 = vld [vmem:[#allocation2 + $0x320] sm:$0xff]
  %v3115 = vld [vmem:[#allocation2 + $0x328] sm:$0xff]
  %v3116 = vld [vmem:[#allocation2 + $0x330] sm:$0xff]
  %v3117 = vld [vmem:[#allocation2 + $0x338] sm:$0xff]
  %v3118 = vld [vmem:[#allocation2 + $0x340] sm:$0xff]
  %v3119 = vld [vmem:[#allocation2 + $0x348] sm:$0xff]
  %v3120 = vld [vmem:[#allocation2 + $0x350] sm:$0xff]
  %v3121 = vld [vmem:[#allocation2 + $0x358] sm:$0xff]
  %v3122 = vld [vmem:[#allocation2 + $0x360] sm:$0xff]
  %v3123 = vld [vmem:[#allocation2 + $0x368] sm:$0xff]
  %v3124 = vld [vmem:[#allocation2 + $0x370] sm:$0xff]
  %v3125 = vld [vmem:[#allocation2 + $0x378] sm:$0xff]
  %v3126 = vld [vmem:[#allocation2 + $0x380] sm:$0xff]
  %v3127 = vld [vmem:[#allocation2 + $0x388] sm:$0xff]
  %v3128 = vld [vmem:[#allocation2 + $0x390] sm:$0xff]
  %v3129 = vld [vmem:[#allocation2 + $0x398] sm:$0xff]
  %v3130 = vld [vmem:[#allocation2 + $0x3a0] sm:$0xff]
  %v3131 = vld [vmem:[#allocation2 + $0x3a8] sm:$0xff]
  %v3132 = vld [vmem:[#allocation2 + $0x3b0] sm:$0xff]
  %v3133 = vld [vmem:[#allocation2 + $0x3b8] sm:$0xff]
  %v3134 = vld [vmem:[#allocation2 + $0x3c0] sm:$0xff]
  %v3135 = vld [vmem:[#allocation2 + $0x3c8] sm:$0xff]
  %v3136 = vld [vmem:[#allocation2 + $0x3d0] sm:$0xff]
  %v3137 = vld [vmem:[#allocation2 + $0x3d8] sm:$0xff]
  %v3138 = vld [vmem:[#allocation2 + $0x3e0] sm:$0xff]
  %v3139 = vld [vmem:[#allocation2 + $0x3e8] sm:$0xff]
  %v3140 = vld [vmem:[#allocation2 + $0x3f0] sm:$0xff]
  %v3141 = vld [vmem:[#allocation2 + $0x3f8] sm:$0xff]
  %v3142 = vld [vmem:[#allocation2 + $0x400] sm:$0xff]
  %v3143 = vld [vmem:[#allocation2 + $0x408] sm:$0xff]
  %v3144 = vld [vmem:[#allocation2 + $0x410] sm:$0xff]
  %v3145 = vld [vmem:[#allocation2 + $0x418] sm:$0xff]
  %v3146 = vld [vmem:[#allocation2 + $0x420] sm:$0xff]
  %v3147 = vld [vmem:[#allocation2 + $0x428] sm:$0xff]
  %v3148 = vld [vmem:[#allocation2 + $0x430] sm:$0xff]
  %v3149 = vld [vmem:[#allocation2 + $0x438] sm:$0xff]
  %v3150 = vld [vmem:[#allocation2 + $0x440] sm:$0xff]
  %v3151 = vld [vmem:[#allocation2 + $0x448] sm:$0xff]
  %v3152 = vld [vmem:[#allocation2 + $0x450] sm:$0xff]
  %v3153 = vld [vmem:[#allocation2 + $0x458] sm:$0xff]
  %v3154 = vld [vmem:[#allocation2 + $0x460] sm:$0xff]
  %v3155 = vld [vmem:[#allocation2 + $0x468] sm:$0xff]
  %v3156 = vld [vmem:[#allocation2 + $0x470] sm:$0xff]
  %v3157 = vld [vmem:[#allocation2 + $0x478] sm:$0xff]
  %v3158 = vld [vmem:[#allocation2 + $0x480] sm:$0xff]
  %v3159 = vld [vmem:[#allocation2 + $0x488] sm:$0xff]
  %v3160 = vld [vmem:[#allocation2 + $0x490] sm:$0xff]
  %v3161 = vld [vmem:[#allocation2 + $0x498] sm:$0xff]
  %v3162 = vld [vmem:[#allocation2 + $0x4a0] sm:$0xff]
  %v3163 = vld [vmem:[#allocation2 + $0x4a8] sm:$0xff]
  %v3164 = vld [vmem:[#allocation2 + $0x4b0] sm:$0xff]
  %v3165 = vld [vmem:[#allocation2 + $0x4b8] sm:$0xff]
  %v3166 = vld [vmem:[#allocation2 + $0x4c0] sm:$0xff]
  %v3167 = vld [vmem:[#allocation2 + $0x4c8] sm:$0xff]
  %v3168 = vld [vmem:[#allocation2 + $0x4d0] sm:$0xff]
  %v3169 = vld [vmem:[#allocation2 + $0x4d8] sm:$0xff]
  %v3170 = vld [vmem:[#allocation2 + $0x4e0] sm:$0xff]
  %v3171 = vld [vmem:[#allocation2 + $0x4e8] sm:$0xff]
  %v3172 = vld [vmem:[#allocation2 + $0x4f0] sm:$0xff]
  %v3173 = vld [vmem:[#allocation2 + $0x4f8] sm:$0xff]
  %v3174 = vld [vmem:[#allocation2 + $0x500] sm:$0xff]
  %v3175 = vld [vmem:[#allocation2 + $0x508] sm:$0xff]
  %v3176 = vld [vmem:[#allocation2 + $0x510] sm:$0xff]
  %v3177 = vld [vmem:[#allocation2 + $0x518] sm:$0xff]
  %v3178 = vld [vmem:[#allocation2 + $0x520] sm:$0xff]
  %v3179 = vld [vmem:[#allocation2 + $0x528] sm:$0xff]
  %v3180 = vld [vmem:[#allocation2 + $0x530] sm:$0xff]
  %v3181 = vld [vmem:[#allocation2 + $0x538] sm:$0xff]
  %v3182 = vld [vmem:[#allocation2 + $0x540] sm:$0xff]
  %v3183 = vld [vmem:[#allocation2 + $0x548] sm:$0xff]
  %v3184 = vld [vmem:[#allocation2 + $0x550] sm:$0xff]
  %v3185 = vld [vmem:[#allocation2 + $0x558] sm:$0xff]
  %v3186 = vld [vmem:[#allocation2 + $0x560] sm:$0xff]
  %v3187 = vld [vmem:[#allocation2 + $0x568] sm:$0xff]
  %v3188 = vld [vmem:[#allocation2 + $0x570] sm:$0xff]
  %v3189 = vld [vmem:[#allocation2 + $0x578] sm:$0xff]
  %v3190 = vld [vmem:[#allocation2 + $0x580] sm:$0xff]
  %v3191 = vld [vmem:[#allocation2 + $0x588] sm:$0xff]
  %v3192 = vld [vmem:[#allocation2 + $0x590] sm:$0xff]
  %v3193 = vld [vmem:[#allocation2 + $0x598] sm:$0xff]
  %v3194 = vld [vmem:[#allocation2 + $0x5a0] sm:$0xff]
  %v3195 = vld [vmem:[#allocation2 + $0x5a8] sm:$0xff]
  %v3196 = vld [vmem:[#allocation2 + $0x5b0] sm:$0xff]
  %v3197 = vld [vmem:[#allocation2 + $0x5b8] sm:$0xff]
  %v3198 = vld [vmem:[#allocation2 + $0x5c0] sm:$0xff]
  %v3199 = vld [vmem:[#allocation2 + $0x5c8] sm:$0xff]
  %v3200 = vld [vmem:[#allocation2 + $0x5d0] sm:$0xff]
  %v3201 = vld [vmem:[#allocation2 + $0x5d8] sm:$0xff]
  %v3202 = vld [vmem:[#allocation2 + $0x5e0] sm:$0xff]
  %v3203 = vld [vmem:[#allocation2 + $0x5e8] sm:$0xff]
  %v3204 = vld [vmem:[#allocation2 + $0x5f0] sm:$0xff]
  %v3205 = vld [vmem:[#allocation2 + $0x5f8] sm:$0xff]
  %v3206 = vld [vmem:[#allocation2 + $0x600] sm:$0xff]
  %v3207 = vld [vmem:[#allocation2 + $0x608] sm:$0xff]
  %v3208 = vld [vmem:[#allocation2 + $0x610] sm:$0xff]
  %v3209 = vld [vmem:[#allocation2 + $0x618] sm:$0xff]
  %v3210 = vld [vmem:[#allocation2 + $0x620] sm:$0xff]
  %v3211 = vld [vmem:[#allocation2 + $0x628] sm:$0xff]
  %v3212 = vld [vmem:[#allocation2 + $0x630] sm:$0xff]
  %v3213 = vld [vmem:[#allocation2 + $0x638] sm:$0xff]
  %v3214 = vld [vmem:[#allocation2 + $0x640] sm:$0xff]
  %v3215 = vld [vmem:[#allocation2 + $0x648] sm:$0xff]
  %v3216 = vld [vmem:[#allocation2 + $0x650] sm:$0xff]
  %v3217 = vld [vmem:[#allocation2 + $0x658] sm:$0xff]
  %v3218 = vld [vmem:[#allocation2 + $0x660] sm:$0xff]
  %v3219 = vld [vmem:[#allocation2 + $0x668] sm:$0xff]
  %v3220 = vld [vmem:[#allocation2 + $0x670] sm:$0xff]
  %v3221 = vld [vmem:[#allocation2 + $0x678] sm:$0xff]
  %v3222 = vld [vmem:[#allocation2 + $0x680] sm:$0xff]
  %v3223 = vld [vmem:[#allocation2 + $0x688] sm:$0xff]
  %v3224 = vld [vmem:[#allocation2 + $0x690] sm:$0xff]
  %v3225 = vld [vmem:[#allocation2 + $0x698] sm:$0xff]
  %v3226 = vld [vmem:[#allocation2 + $0x6a0] sm:$0xff]
  %v3227 = vld [vmem:[#allocation2 + $0x6a8] sm:$0xff]
  %v3228 = vld [vmem:[#allocation2 + $0x6b0] sm:$0xff]
  %v3229 = vld [vmem:[#allocation2 + $0x6b8] sm:$0xff]
  %v3272 = vunpack.c.l.b16 %v2972
  %v3273 = vunpack.c.h.b16 %v2972
  %v3274 = vunpack.c.l.b16 %v2973
  %v3275 = vunpack.c.h.b16 %v2973
  %v3276 = vunpack.c.l.b16 %v2974
  %v3277 = vunpack.c.h.b16 %v2974
  %v3278 = vunpack.c.l.b16 %v2975
  %v3279 = vunpack.c.h.b16 %v2975
  %v3280 = vunpack.c.l.b16 %v2976
  %v3281 = vunpack.c.h.b16 %v2976
  %v3282 = vunpack.c.l.b16 %v2977
  %v3283 = vunpack.c.h.b16 %v2977
  %v3284 = vunpack.c.l.b16 %v2978
  %v3285 = vunpack.c.h.b16 %v2978
  %v3286 = vunpack.c.l.b16 %v2979
  %v3287 = vunpack.c.h.b16 %v2979
  %v3288 = vunpack.c.l.b16 %v2980
  %v3289 = vunpack.c.h.b16 %v2980
  %v3290 = vunpack.c.l.b16 %v2981
  %v3291 = vunpack.c.h.b16 %v2981
  %v3292 = vunpack.c.l.b16 %v2982
  %v3293 = vunpack.c.h.b16 %v2982
  %v3294 = vunpack.c.l.b16 %v2983
  %v3295 = vunpack.c.h.b16 %v2983
  %v3296 = vunpack.c.l.b16 %v2984
  %v3297 = vunpack.c.h.b16 %v2984
  %v3298 = vunpack.c.l.b16 %v2985
  %v3299 = vunpack.c.h.b16 %v2985
  %v3300 = vunpack.c.l.b16 %v2986
  %v3301 = vunpack.c.h.b16 %v2986
  %v3302 = vunpack.c.l.b16 %v2987
  %v3303 = vunpack.c.h.b16 %v2987
  %v3304 = vunpack.c.l.b16 %v2988
  %v3305 = vunpack.c.h.b16 %v2988
  %v3306 = vunpack.c.l.b16 %v2989
  %v3307 = vunpack.c.h.b16 %v2989
  %v3308 = vunpack.c.l.b16 %v2990
  %v3309 = vunpack.c.h.b16 %v2990
  %v3310 = vunpack.c.l.b16 %v2991
  %v3311 = vunpack.c.h.b16 %v2991
  %v3312 = vunpack.c.l.b16 %v2992
  %v3313 = vunpack.c.h.b16 %v2992
  %v3314 = vunpack.c.l.b16 %v2993
  %v3315 = vunpack.c.h.b16 %v2993
  %v3316 = vunpack.c.l.b16 %v2994
  %v3317 = vunpack.c.h.b16 %v2994
  %v3318 = vunpack.c.l.b16 %v2995
  %v3319 = vunpack.c.h.b16 %v2995
  %v3320 = vunpack.c.l.b16 %v2996
  %v3321 = vunpack.c.h.b16 %v2996
  %v3322 = vunpack.c.l.b16 %v2997
  %v3323 = vunpack.c.h.b16 %v2997
  %v3324 = vunpack.c.l.b16 %v2998
  %v3325 = vunpack.c.h.b16 %v2998
  %v3326 = vunpack.c.l.b16 %v2999
  %v3327 = vunpack.c.h.b16 %v2999
  %v3328 = vunpack.c.l.b16 %v3000
  %v3329 = vunpack.c.h.b16 %v3000
  %v3330 = vunpack.c.l.b16 %v3001
  %v3331 = vunpack.c.h.b16 %v3001
  %v3332 = vunpack.c.l.b16 %v3002
  %v3333 = vunpack.c.h.b16 %v3002
  %v3334 = vunpack.c.l.b16 %v3003
  %v3335 = vunpack.c.h.b16 %v3003
  %v3336 = vunpack.c.l.b16 %v3004
  %v3337 = vunpack.c.h.b16 %v3004
  %v3338 = vunpack.c.l.b16 %v3005
  %v3339 = vunpack.c.h.b16 %v3005
  %v3340 = vunpack.c.l.b16 %v3006
  %v3341 = vunpack.c.h.b16 %v3006
  %v3342 = vunpack.c.l.b16 %v3007
  %v3343 = vunpack.c.h.b16 %v3007
  %v3344 = vunpack.c.l.b16 %v3008
  %v3345 = vunpack.c.h.b16 %v3008
  %v3346 = vunpack.c.l.b16 %v3009
  %v3347 = vunpack.c.h.b16 %v3009
  %v3348 = vunpack.c.l.b16 %v3010
  %v3349 = vunpack.c.h.b16 %v3010
  %v3350 = vunpack.c.l.b16 %v3011
  %v3351 = vunpack.c.h.b16 %v3011
  %v3352 = vunpack.c.l.b16 %v3012
  %v3353 = vunpack.c.h.b16 %v3012
  %v3354 = vunpack.c.l.b16 %v3013
  %v3355 = vunpack.c.h.b16 %v3013
  %v3356 = vpack.c.b16 %v3286, %v3272
  %v3357 = vpack.c.b16 %v3287, %v3273
  %v3358 = vpack.c.b16 %v3288, %v3274
  %v3359 = vpack.c.b16 %v3289, %v3275
  %v3360 = vpack.c.b16 %v3290, %v3276
  %v3361 = vpack.c.b16 %v3291, %v3277
  %v3362 = vpack.c.b16 %v3292, %v3278
  %v3363 = vpack.c.b16 %v3293, %v3279
  %v3364 = vpack.c.b16 %v3294, %v3280
  %v3365 = vpack.c.b16 %v3295, %v3281
  %v3366 = vpack.c.b16 %v3296, %v3282
  %v3367 = vpack.c.b16 %v3297, %v3283
  %v3368 = vpack.c.b16 %v3298, %v3284
  %v3369 = vpack.c.b16 %v3299, %v3285
  %v3370 = vpack.c.b16 %v3314, %v3300
  %v3371 = vpack.c.b16 %v3315, %v3301
  %v3372 = vpack.c.b16 %v3316, %v3302
  %v3373 = vpack.c.b16 %v3317, %v3303
  %v3374 = vpack.c.b16 %v3318, %v3304
  %v3375 = vpack.c.b16 %v3319, %v3305
  %v3376 = vpack.c.b16 %v3320, %v3306
  %v3377 = vpack.c.b16 %v3321, %v3307
  %v3378 = vpack.c.b16 %v3322, %v3308
  %v3379 = vpack.c.b16 %v3323, %v3309
  %v3380 = vpack.c.b16 %v3324, %v3310
  %v3381 = vpack.c.b16 %v3325, %v3311
  %v3382 = vpack.c.b16 %v3326, %v3312
  %v3383 = vpack.c.b16 %v3327, %v3313
  %v3384 = vpack.c.b16 %v3342, %v3328
  %v3385 = vpack.c.b16 %v3343, %v3329
  %v3386 = vpack.c.b16 %v3344, %v3330
  %v3387 = vpack.c.b16 %v3345, %v3331
  %v3388 = vpack.c.b16 %v3346, %v3332
  %v3389 = vpack.c.b16 %v3347, %v3333
  %v3390 = vpack.c.b16 %v3348, %v3334
  %v3391 = vpack.c.b16 %v3349, %v3335
  %v3392 = vpack.c.b16 %v3350, %v3336
  %v3393 = vpack.c.b16 %v3351, %v3337
  %v3394 = vpack.c.b16 %v3352, %v3338
  %v3395 = vpack.c.b16 %v3353, %v3339
  %v3396 = vpack.c.b16 %v3354, %v3340
  %v3397 = vpack.c.b16 %v3355, %v3341
  %vm3437 = vcmask 523264
  %v3439 = vsel %vm3437, %v3369, 0
  %v3442 = vsel %vm3437, %v3383, 0
  %v3445 = vsel %vm3437, %v3397, 0
  %3447 = vmatprep.subr.bf16.mxu0 %v3015
  %3448 = vmatpush1.bf16.msra.mxu0 %v3014
  %3449 = vmatprep.subr.bf16.mxu0 %v3017
  %3450 = vmatpush1.bf16.msra.mxu0 %v3016
  %3451 = vmatprep.subr.bf16.mxu0 %v3019
  %3452 = vmatpush1.bf16.msra.mxu0 %v3018
  %3453 = vmatprep.subr.bf16.mxu0 %v3021
  %3454 = vmatpush1.bf16.msra.mxu0 %v3020
  %3455 = vmatprep.subr.bf16.mxu0 %v3023
  %3456 = vmatpush1.bf16.msra.mxu0 %v3022
  %3457 = vmatprep.subr.bf16.mxu0 %v3025
  %3458 = vmatpush1.bf16.msra.mxu0 %v3024
  %3459 = vmatprep.subr.bf16.mxu0 %v3027
  %3460 = vmatpush1.bf16.msra.mxu0 %v3026
  %3461 = vmatprep.subr.bf16.mxu0 %v3029
  %3462 = vmatpush1.bf16.msra.mxu0 %v3028
  %3463 = vmatprep.subr.bf16.mxu0 %v3031
  %3464 = vmatpush1.bf16.msra.mxu0 %v3030
  %3465 = vmatprep.subr.bf16.mxu0 %v3033
  %3466 = vmatpush1.bf16.msra.mxu0 %v3032
  %3467 = vmatprep.subr.bf16.mxu0 %v3035
  %3468 = vmatpush1.bf16.msra.mxu0 %v3034
  %3469 = vmatprep.subr.bf16.mxu0 %v3037
  %3470 = vmatpush1.bf16.msra.mxu0 %v3036
  %3471 = vmatprep.subr.bf16.mxu0 %v3039
  %3472 = vmatpush1.bf16.msra.mxu0 %v3038
  %3473 = vmatprep.subr.bf16.mxu0 %v3041
  %3474 = vmatpush1.bf16.msra.mxu0 %v3040
  %3475 = vmatprep.subr.bf16.mxu0 %v3043
  %3476 = vmatpush1.bf16.msra.mxu0 %v3042
  %3477 = vmatprep.subr.bf16.mxu0 %v3045
  %3478 = vmatpush1.bf16.msra.mxu0 %v3044
  %3479 = vmatprep.mubr.bf16.mxu0 %v3357
  %3480 = vmatmul.mubr.bf16.gmra.mrb[0].mxu0 %v3356
  %v3481 = vpop.f32.mrb[0].mxu0
  %v3482 = vadd.f32 0.0, %v3481
  %v3483 = vpop.f32.mrb[0].mxu0
  %v3484 = vadd.f32 0.0, %v3483
  %v3485 = vpop.f32.mrb[0].mxu0
  %v3486 = vadd.f32 0.0, %v3485
  %v3487 = vpop.f32.mrb[0].mxu0
  %v3488 = vadd.f32 0.0, %v3487
  %3489 = vmatprep.mubr.bf16.mxu0 %v3371
  %3490 = vmatmul.mubr.bf16.gmra.mrb[0].mxu0 %v3370
  %v3491 = vpop.f32.mrb[0].mxu0
  %v3492 = vadd.f32 0.0, %v3491
  %v3493 = vpop.f32.mrb[0].mxu0
  %v3494 = vadd.f32 0.0, %v3493
  %v3495 = vpop.f32.mrb[0].mxu0
  %v3496 = vadd.f32 0.0, %v3495
  %v3497 = vpop.f32.mrb[0].mxu0
  %v3498 = vadd.f32 0.0, %v3497
  %3499 = vmatprep.mubr.bf16.mxu0 %v3385
  %3500 = vmatmul.mubr.bf16.gmra.mrb[0].mxu0 %v3384
  %v3501 = vpop.f32.mrb[0].mxu0
  %v3502 = vadd.f32 0.0, %v3501
  %v3503 = vpop.f32.mrb[0].mxu0
  %v3504 = vadd.f32 0.0, %v3503
  %v3505 = vpop.f32.mrb[0].mxu0
  %v3506 = vadd.f32 0.0, %v3505
  %v3507 = vpop.f32.mrb[0].mxu0
  %v3508 = vadd.f32 0.0, %v3507
  %3509 = vdwg.mxu0
  %3510 = vmatprep.subr.bf16.mxu0 %v3047
  %3511 = vmatpush1.bf16.msra.mxu0 %v3046
  %3512 = vmatprep.subr.bf16.mxu0 %v3049
  %3513 = vmatpush1.bf16.msra.mxu0 %v3048
  %3514 = vmatprep.subr.bf16.mxu0 %v3051
  %3515 = vmatpush1.bf16.msra.mxu0 %v3050
  %3516 = vmatprep.subr.bf16.mxu0 %v3053
  %3517 = vmatpush1.bf16.msra.mxu0 %v3052
  %3518 = vmatprep.subr.bf16.mxu0 %v3055
  %3519 = vmatpush1.bf16.msra.mxu0 %v3054
  %3520 = vmatprep.subr.bf16.mxu0 %v3057
  %3521 = vmatpush1.bf16.msra.mxu0 %v3056
  %3522 = vmatprep.subr.bf16.mxu0 %v3059
  %3523 = vmatpush1.bf16.msra.mxu0 %v3058
  %3524 = vmatprep.subr.bf16.mxu0 %v3061
  %3525 = vmatpush1.bf16.msra.mxu0 %v3060
  %3526 = vmatprep.subr.bf16.mxu0 %v3063
  %3527 = vmatpush1.bf16.msra.mxu0 %v3062
  %3528 = vmatprep.subr.bf16.mxu0 %v3065
  %3529 = vmatpush1.bf16.msra.mxu0 %v3064
  %3530 = vmatprep.subr.bf16.mxu0 %v3067
  %3531 = vmatpush1.bf16.msra.mxu0 %v3066
  %3532 = vmatprep.subr.bf16.mxu0 %v3069
  %3533 = vmatpush1.bf16.msra.mxu0 %v3068
  %3534 = vmatprep.subr.bf16.mxu0 %v3071
  %3535 = vmatpush1.bf16.msra.mxu0 %v3070
  %3536 = vmatprep.subr.bf16.mxu0 %v3073
  %3537 = vmatpush1.bf16.msra.mxu0 %v3072
  %3538 = vmatprep.subr.bf16.mxu0 %v3075
  %3539 = vmatpush1.bf16.msra.mxu0 %v3074
  %3540 = vmatprep.subr.bf16.mxu0 %v3077
  %3541 = vmatpush1.bf16.msra.mxu0 %v3076
  %3542 = vmatprep.mubr.bf16.mxu0 %v3359
  %3543 = vmatmul.mubr.bf16.gmra.mrb[0].mxu0 %v3358
  %v3544 = vpop.f32.mrb[0].mxu0
  %v3545 = vadd.f32 %v3482, %v3544
  %v3546 = vpop.f32.mrb[0].mxu0
  %v3547 = vadd.f32 %v3484, %v3546
  %v3548 = vpop.f32.mrb[0].mxu0
  %v3549 = vadd.f32 %v3486, %v3548
  %v3550 = vpop.f32.mrb[0].mxu0
  %v3551 = vadd.f32 %v3488, %v3550
  %3552 = vmatprep.mubr.bf16.mxu0 %v3373
  %3553 = vmatmul.mubr.bf16.gmra.mrb[0].mxu0 %v3372
  %v3554 = vpop.f32.mrb[0].mxu0
  %v3555 = vadd.f32 %v3492, %v3554
  %v3556 = vpop.f32.mrb[0].mxu0
  %v3557 = vadd.f32 %v3494, %v3556
  %v3558 = vpop.f32.mrb[0].mxu0
  %v3559 = vadd.f32 %v3496, %v3558
  %v3560 = vpop.f32.mrb[0].mxu0
  %v3561 = vadd.f32 %v3498, %v3560
  %3562 = vmatprep.mubr.bf16.mxu0 %v3387
  %3563 = vmatmul.mubr.bf16.gmra.mrb[0].mxu0 %v3386
  %v3564 = vpop.f32.mrb[0].mxu0
  %v3565 = vadd.f32 %v3502, %v3564
  %v3566 = vpop.f32.mrb[0].mxu0
  %v3567 = vadd.f32 %v3504, %v3566
  %v3568 = vpop.f32.mrb[0].mxu0
  %v3569 = vadd.f32 %v3506, %v3568
  %v3570 = vpop.f32.mrb[0].mxu0
  %v3571 = vadd.f32 %v3508, %v3570
  %3572 = vdwg.mxu0
  %3573 = vmatprep.subr.bf16.mxu0 %v3079
  %3574 = vmatpush1.bf16.msra.mxu0 %v3078
  %3575 = vmatprep.subr.bf16.mxu0 %v3081
  %3576 = vmatpush1.bf16.msra.mxu0 %v3080
  %3577 = vmatprep.subr.bf16.mxu0 %v3083
  %3578 = vmatpush1.bf16.msra.mxu0 %v3082
  %3579 = vmatprep.subr.bf16.mxu0 %v3085
  %3580 = vmatpush1.bf16.msra.mxu0 %v3084
  %3581 = vmatprep.subr.bf16.mxu0 %v3087
  %3582 = vmatpush1.bf16.msra.mxu0 %v3086
  %3583 = vmatprep.subr.bf16.mxu0 %v3089
  %3584 = vmatpush1.bf16.msra.mxu0 %v3088
  %3585 = vmatprep.subr.bf16.mxu0 %v3091
  %3586 = vmatpush1.bf16.msra.mxu0 %v3090
  %3587 = vmatprep.subr.bf16.mxu0 %v3093
  %3588 = vmatpush1.bf16.msra.mxu0 %v3092
  %3589 = vmatprep.subr.bf16.mxu0 %v3095
  %3590 = vmatpush1.bf16.msra.mxu0 %v3094
  %3591 = vmatprep.subr.bf16.mxu0 %v3097
  %3592 = vmatpush1.bf16.msra.mxu0 %v3096
  %3593 = vmatprep.subr.bf16.mxu0 %v3099
  %3594 = vmatpush1.bf16.msra.mxu0 %v3098
  %3595 = vmatprep.subr.bf16.mxu0 %v3101
  %3596 = vmatpush1.bf16.msra.mxu0 %v3100
  %3597 = vmatprep.subr.bf16.mxu0 %v3103
  %3598 = vmatpush1.bf16.msra.mxu0 %v3102
  %3599 = vmatprep.subr.bf16.mxu0 %v3105
  %3600 = vmatpush1.bf16.msra.mxu0 %v3104
  %3601 = vmatprep.subr.bf16.mxu0 %v3107
  %3602 = vmatpush1.bf16.msra.mxu0 %v3106
  %3603 = vmatprep.subr.bf16.mxu0 %v3109
  %3604 = vmatpush1.bf16.msra.mxu0 %v3108
  %3605 = vmatprep.mubr.bf16.mxu0 %v3361
  %3606 = vmatmul.mubr.bf16.gmra.mrb[0].mxu0 %v3360
  %v3607 = vpop.f32.mrb[0].mxu0
  %v3608 = vadd.f32 %v3545, %v3607
  %v3609 = vpop.f32.mrb[0].mxu0
  %v3610 = vadd.f32 %v3547, %v3609
  %v3611 = vpop.f32.mrb[0].mxu0
  %v3612 = vadd.f32 %v3549, %v3611
  %v3613 = vpop.f32.mrb[0].mxu0
  %v3614 = vadd.f32 %v3551, %v3613
  %3615 = vmatprep.mubr.bf16.mxu0 %v3375
  %3616 = vmatmul.mubr.bf16.gmra.mrb[0].mxu0 %v3374
  %v3617 = vpop.f32.mrb[0].mxu0
  %v3618 = vadd.f32 %v3555, %v3617
  %v3619 = vpop.f32.mrb[0].mxu0
  %v3620 = vadd.f32 %v3557, %v3619
  %v3621 = vpop.f32.mrb[0].mxu0
  %v3622 = vadd.f32 %v3559, %v3621
  %v3623 = vpop.f32.mrb[0].mxu0
  %v3624 = vadd.f32 %v3561, %v3623
  %3625 = vmatprep.mubr.bf16.mxu0 %v3389
  %3626 = vmatmul.mubr.bf16.gmra.mrb[0].mxu0 %v3388
  %v3627 = vpop.f32.mrb[0].mxu0
  %v3628 = vadd.f32 %v3565, %v3627
  %v3629 = vpop.f32.mrb[0].mxu0
  %v3630 = vadd.f32 %v3567, %v3629
  %v3631 = vpop.f32.mrb[0].mxu0
  %v3632 = vadd.f32 %v3569, %v3631
  %v3633 = vpop.f32.mrb[0].mxu0
  %v3634 = vadd.f32 %v3571, %v3633
  %3635 = vdwg.mxu0
  %3636 = vmatprep.subr.bf16.mxu0 %v3111
  %3637 = vmatpush1.bf16.msra.mxu0 %v3110
  %3638 = vmatprep.subr.bf16.mxu0 %v3113
  %3639 = vmatpush1.bf16.msra.mxu0 %v3112
  %3640 = vmatprep.subr.bf16.mxu0 %v3115
  %3641 = vmatpush1.bf16.msra.mxu0 %v3114
  %3642 = vmatprep.subr.bf16.mxu0 %v3117
  %3643 = vmatpush1.bf16.msra.mxu0 %v3116
  %3644 = vmatprep.subr.bf16.mxu0 %v3119
  %3645 = vmatpush1.bf16.msra.mxu0 %v3118
  %3646 = vmatprep.subr.bf16.mxu0 %v3121
  %3647 = vmatpush1.bf16.msra.mxu0 %v3120
  %3648 = vmatprep.subr.bf16.mxu0 %v3123
  %3649 = vmatpush1.bf16.msra.mxu0 %v3122
  %3650 = vmatprep.subr.bf16.mxu0 %v3125
  %3651 = vmatpush1.bf16.msra.mxu0 %v3124
  %3652 = vmatprep.subr.bf16.mxu0 %v3127
  %3653 = vmatpush1.bf16.msra.mxu0 %v3126
  %3654 = vmatprep.subr.bf16.mxu0 %v3129
  %3655 = vmatpush1.bf16.msra.mxu0 %v3128
  %3656 = vmatprep.subr.bf16.mxu0 %v3131
  %3657 = vmatpush1.bf16.msra.mxu0 %v3130
  %3658 = vmatprep.subr.bf16.mxu0 %v3133
  %3659 = vmatpush1.bf16.msra.mxu0 %v3132
  %3660 = vmatprep.subr.bf16.mxu0 %v3135
  %3661 = vmatpush1.bf16.msra.mxu0 %v3134
  %3662 = vmatprep.subr.bf16.mxu0 %v3137
  %3663 = vmatpush1.bf16.msra.mxu0 %v3136
  %3664 = vmatprep.subr.bf16.mxu0 %v3139
  %3665 = vmatpush1.bf16.msra.mxu0 %v3138
  %3666 = vmatprep.subr.bf16.mxu0 %v3141
  %3667 = vmatpush1.bf16.msra.mxu0 %v3140
  %3668 = vmatprep.mubr.bf16.mxu0 %v3363
  %3669 = vmatmul.mubr.bf16.gmra.mrb[0].mxu0 %v3362
  %v3670 = vpop.f32.mrb[0].mxu0
  %v3671 = vadd.f32 %v3608, %v3670
  %v3672 = vpop.f32.mrb[0].mxu0
  %v3673 = vadd.f32 %v3610, %v3672
  %v3674 = vpop.f32.mrb[0].mxu0
  %v3675 = vadd.f32 %v3612, %v3674
  %v3676 = vpop.f32.mrb[0].mxu0
  %v3677 = vadd.f32 %v3614, %v3676
  %3678 = vmatprep.mubr.bf16.mxu0 %v3377
  %3679 = vmatmul.mubr.bf16.gmra.mrb[0].mxu0 %v3376
  %v3680 = vpop.f32.mrb[0].mxu0
  %v3681 = vadd.f32 %v3618, %v3680
  %v3682 = vpop.f32.mrb[0].mxu0
  %v3683 = vadd.f32 %v3620, %v3682
  %v3684 = vpop.f32.mrb[0].mxu0
  %v3685 = vadd.f32 %v3622, %v3684
  %v3686 = vpop.f32.mrb[0].mxu0
  %v3687 = vadd.f32 %v3624, %v3686
  %3688 = vmatprep.mubr.bf16.mxu0 %v3391
  %3689 = vmatmul.mubr.bf16.gmra.mrb[0].mxu0 %v3390
  %v3690 = vpop.f32.mrb[0].mxu0
  %v3691 = vadd.f32 %v3628, %v3690
  %v3692 = vpop.f32.mrb[0].mxu0
  %v3693 = vadd.f32 %v3630, %v3692
  %v3694 = vpop.f32.mrb[0].mxu0
  %v3695 = vadd.f32 %v3632, %v3694
  %v3696 = vpop.f32.mrb[0].mxu0
  %v3697 = vadd.f32 %v3634, %v3696
  %3698 = vdwg.mxu0
  %3699 = vmatprep.subr.bf16.mxu0 %v3143
  %3700 = vmatpush1.bf16.msra.mxu0 %v3142
  %3701 = vmatprep.subr.bf16.mxu0 %v3145
  %3702 = vmatpush1.bf16.msra.mxu0 %v3144
  %3703 = vmatprep.subr.bf16.mxu0 %v3147
  %3704 = vmatpush1.bf16.msra.mxu0 %v3146
  %3705 = vmatprep.subr.bf16.mxu0 %v3149
  %3706 = vmatpush1.bf16.msra.mxu0 %v3148
  %3707 = vmatprep.subr.bf16.mxu0 %v3151
  %3708 = vmatpush1.bf16.msra.mxu0 %v3150
  %3709 = vmatprep.subr.bf16.mxu0 %v3153
  %3710 = vmatpush1.bf16.msra.mxu0 %v3152
  %3711 = vmatprep.subr.bf16.mxu0 %v3155
  %3712 = vmatpush1.bf16.msra.mxu0 %v3154
  %3713 = vmatprep.subr.bf16.mxu0 %v3157
  %3714 = vmatpush1.bf16.msra.mxu0 %v3156
  %3715 = vmatprep.subr.bf16.mxu0 %v3159
  %3716 = vmatpush1.bf16.msra.mxu0 %v3158
  %3717 = vmatprep.subr.bf16.mxu0 %v3161
  %3718 = vmatpush1.bf16.msra.mxu0 %v3160
  %3719 = vmatprep.subr.bf16.mxu0 %v3163
  %3720 = vmatpush1.bf16.msra.mxu0 %v3162
  %3721 = vmatprep.subr.bf16.mxu0 %v3165
  %3722 = vmatpush1.bf16.msra.mxu0 %v3164
  %3723 = vmatprep.subr.bf16.mxu0 %v3167
  %3724 = vmatpush1.bf16.msra.mxu0 %v3166
  %3725 = vmatprep.subr.bf16.mxu0 %v3169
  %3726 = vmatpush1.bf16.msra.mxu0 %v3168
  %3727 = vmatprep.subr.bf16.mxu0 %v3171
  %3728 = vmatpush1.bf16.msra.mxu0 %v3170
  %3729 = vmatprep.subr.bf16.mxu0 %v3173
  %3730 = vmatpush1.bf16.msra.mxu0 %v3172
  %3731 = vmatprep.mubr.bf16.mxu0 %v3365
  %3732 = vmatmul.mubr.bf16.gmra.mrb[0].mxu0 %v3364
  %v3733 = vpop.f32.mrb[0].mxu0
  %v3734 = vadd.f32 %v3671, %v3733
  %v3735 = vpop.f32.mrb[0].mxu0
  %v3736 = vadd.f32 %v3673, %v3735
  %v3737 = vpop.f32.mrb[0].mxu0
  %v3738 = vadd.f32 %v3675, %v3737
  %v3739 = vpop.f32.mrb[0].mxu0
  %v3740 = vadd.f32 %v3677, %v3739
  %3741 = vmatprep.mubr.bf16.mxu0 %v3379
  %3742 = vmatmul.mubr.bf16.gmra.mrb[0].mxu0 %v3378
  %v3743 = vpop.f32.mrb[0].mxu0
  %v3744 = vadd.f32 %v3681, %v3743
  %v3745 = vpop.f32.mrb[0].mxu0
  %v3746 = vadd.f32 %v3683, %v3745
  %v3747 = vpop.f32.mrb[0].mxu0
  %v3748 = vadd.f32 %v3685, %v3747
  %v3749 = vpop.f32.mrb[0].mxu0
  %v3750 = vadd.f32 %v3687, %v3749
  %3751 = vmatprep.mubr.bf16.mxu0 %v3393
  %3752 = vmatmul.mubr.bf16.gmra.mrb[0].mxu0 %v3392
  %v3753 = vpop.f32.mrb[0].mxu0
  %v3754 = vadd.f32 %v3691, %v3753
  %v3755 = vpop.f32.mrb[0].mxu0
  %v3756 = vadd.f32 %v3693, %v3755
  %v3757 = vpop.f32.mrb[0].mxu0
  %v3758 = vadd.f32 %v3695, %v3757
  %v3759 = vpop.f32.mrb[0].mxu0
  %v3760 = vadd.f32 %v3697, %v3759
  %3761 = vdwg.mxu0
  %3762 = vmatprep.subr.bf16.mxu0 %v3175
  %3763 = vmatpush1.bf16.msra.mxu0 %v3174
  %3764 = vmatprep.subr.bf16.mxu0 %v3177
  %3765 = vmatpush1.bf16.msra.mxu0 %v3176
  %3766 = vmatprep.subr.bf16.mxu0 %v3179
  %3767 = vmatpush1.bf16.msra.mxu0 %v3178
  %3768 = vmatprep.subr.bf16.mxu0 %v3181
  %3769 = vmatpush1.bf16.msra.mxu0 %v3180
  %3770 = vmatprep.subr.bf16.mxu0 %v3183
  %3771 = vmatpush1.bf16.msra.mxu0 %v3182
  %3772 = vmatprep.subr.bf16.mxu0 %v3185
  %3773 = vmatpush1.bf16.msra.mxu0 %v3184
  %3774 = vmatprep.subr.bf16.mxu0 %v3187
  %3775 = vmatpush1.bf16.msra.mxu0 %v3186
  %3776 = vmatprep.subr.bf16.mxu0 %v3189
  %3777 = vmatpush1.bf16.msra.mxu0 %v3188
  %3778 = vmatprep.subr.bf16.mxu0 %v3191
  %3779 = vmatpush1.bf16.msra.mxu0 %v3190
  %3780 = vmatprep.subr.bf16.mxu0 %v3193
  %3781 = vmatpush1.bf16.msra.mxu0 %v3192
  %3782 = vmatprep.subr.bf16.mxu0 %v3195
  %3783 = vmatpush1.bf16.msra.mxu0 %v3194
  %3784 = vmatprep.subr.bf16.mxu0 %v3197
  %3785 = vmatpush1.bf16.msra.mxu0 %v3196
  %3786 = vmatprep.subr.bf16.mxu0 %v3199
  %3787 = vmatpush1.bf16.msra.mxu0 %v3198
  %3788 = vmatprep.subr.bf16.mxu0 %v3201
  %3789 = vmatpush1.bf16.msra.mxu0 %v3200
  %3790 = vmatprep.subr.bf16.mxu0 %v3203
  %3791 = vmatpush1.bf16.msra.mxu0 %v3202
  %3792 = vmatprep.subr.bf16.mxu0 %v3205
  %3793 = vmatpush1.bf16.msra.mxu0 %v3204
  %3794 = vmatprep.mubr.bf16.mxu0 %v3367
  %3795 = vmatmul.mubr.bf16.gmra.mrb[0].mxu0 %v3366
  %v3796 = vpop.f32.mrb[0].mxu0
  %v3797 = vadd.f32 %v3734, %v3796
  %v3798 = vpop.f32.mrb[0].mxu0
  %v3799 = vadd.f32 %v3736, %v3798
  %v3800 = vpop.f32.mrb[0].mxu0
  %v3801 = vadd.f32 %v3738, %v3800
  %v3802 = vpop.f32.mrb[0].mxu0
  %v3803 = vadd.f32 %v3740, %v3802
  %3804 = vmatprep.mubr.bf16.mxu0 %v3381
  %3805 = vmatmul.mubr.bf16.gmra.mrb[0].mxu0 %v3380
  %v3806 = vpop.f32.mrb[0].mxu0
  %v3807 = vadd.f32 %v3744, %v3806
  %v3808 = vpop.f32.mrb[0].mxu0
  %v3809 = vadd.f32 %v3746, %v3808
  %v3810 = vpop.f32.mrb[0].mxu0
  %v3811 = vadd.f32 %v3748, %v3810
  %v3812 = vpop.f32.mrb[0].mxu0
  %v3813 = vadd.f32 %v3750, %v3812
  %3814 = vmatprep.mubr.bf16.mxu0 %v3395
  %3815 = vmatmul.mubr.bf16.gmra.mrb[0].mxu0 %v3394
  %v3816 = vpop.f32.mrb[0].mxu0
  %v3817 = vadd.f32 %v3754, %v3816
  %v3818 = vpop.f32.mrb[0].mxu0
  %v3819 = vadd.f32 %v3756, %v3818
  %v3820 = vpop.f32.mrb[0].mxu0
  %v3821 = vadd.f32 %v3758, %v3820
  %v3822 = vpop.f32.mrb[0].mxu0
  %v3823 = vadd.f32 %v3760, %v3822
  %3824 = vdwg.mxu0
  %3825 = vmatprep.subr.bf16.mxu0 %v3207
  %3826 = vmatpush1.bf16.msra.mxu0 %v3206
  %3827 = vmatprep.subr.bf16.mxu0 %v3209
  %3828 = vmatpush1.bf16.msra.mxu0 %v3208
  %3829 = vmatprep.subr.bf16.mxu0 %v3211
  %3830 = vmatpush1.bf16.msra.mxu0 %v3210
  %3831 = vmatprep.subr.bf16.mxu0 %v3213
  %3832 = vmatpush1.bf16.msra.mxu0 %v3212
  %3833 = vmatprep.subr.bf16.mxu0 %v3215
  %3834 = vmatpush1.bf16.msra.mxu0 %v3214
  %3835 = vmatprep.subr.bf16.mxu0 %v3217
  %3836 = vmatpush1.bf16.msra.mxu0 %v3216
  %3837 = vmatprep.subr.bf16.mxu0 %v3219
  %3838 = vmatpush1.bf16.msra.mxu0 %v3218
  %3839 = vmatprep.subr.bf16.mxu0 %v3221
  %3840 = vmatpush1.bf16.msra.mxu0 %v3220
  %3841 = vmatprep.subr.bf16.mxu0 %v3223
  %3842 = vmatpush1.bf16.msra.mxu0 %v3222
  %3843 = vmatprep.subr.bf16.mxu0 %v3225
  %3844 = vmatpush1.bf16.msra.mxu0 %v3224
  %3845 = vmatprep.subr.bf16.mxu0 %v3227
  %3846 = vmatpush1.bf16.msra.mxu0 %v3226
  %3847 = vmatprep.subr.bf16.mxu0 %v3229
  %3848 = vmatpush1.bf16.msra.mxu0 %v3228
  %3849 = vmatprep.subr.bf16.mxu0 0
  %3850 = vmatpush1.bf16.msra.mxu0 0
  %3851 = vmatprep.subr.bf16.mxu0 0
  %3852 = vmatpush1.bf16.msra.mxu0 0
  %3853 = vmatprep.subr.bf16.mxu0 0
  %3854 = vmatpush1.bf16.msra.mxu0 0
  %3855 = vmatprep.subr.bf16.mxu0 0
  %3856 = vmatpush1.bf16.msra.mxu0 0
  %3857 = vmatprep.mubr.bf16.mxu0 %v3439
  %3858 = vmatmul.mubr.bf16.gmra.mrb[0].mxu0 %v3368
  %v3859 = vpop.f32.mrb[0].mxu0
  %v3860 = vadd.f32 %v3797, %v3859
  %v3861 = vpop.f32.mrb[0].mxu0
  %v3862 = vadd.f32 %v3799, %v3861
  %v3863 = vpop.f32.mrb[0].mxu0
  %v3864 = vadd.f32 %v3801, %v3863
  %v3865 = vpop.f32.mrb[0].mxu0
  %v3866 = vadd.f32 %v3803, %v3865
  %3867 = vmatprep.mubr.bf16.mxu0 %v3442
  %3868 = vmatmul.mubr.bf16.gmra.mrb[0].mxu0 %v3382
  %v3869 = vpop.f32.mrb[0].mxu0
  %v3870 = vadd.f32 %v3807, %v3869
  %v3871 = vpop.f32.mrb[0].mxu0
  %v3872 = vadd.f32 %v3809, %v3871
  %v3873 = vpop.f32.mrb[0].mxu0
  %v3874 = vadd.f32 %v3811, %v3873
  %v3875 = vpop.f32.mrb[0].mxu0
  %v3876 = vadd.f32 %v3813, %v3875
  %3877 = vmatprep.mubr.bf16.mxu0 %v3445
  %3878 = vmatmul.mubr.bf16.gmra.mrb[0].mxu0 %v3396
  %v3879 = vpop.f32.mrb[0].mxu0
  %v3880 = vadd.f32 %v3817, %v3879
  %v3881 = vpop.f32.mrb[0].mxu0
  %v3882 = vadd.f32 %v3819, %v3881
  %v3883 = vpop.f32.mrb[0].mxu0
  %v3884 = vadd.f32 %v3821, %v3883
  %v3885 = vpop.f32.mrb[0].mxu0
  %v3886 = vadd.f32 %v3823, %v3885
  %3887 = vdwg.mxu0
  %3888 = vst [vmem:[%s2] sm:$0xff] %v3860
  %3889 = vst [vmem:[%s2 + $0x8] sm:$0xff] %v3862
  %3890 = vst [vmem:[%s2 + $0x10] sm:$0xff] %v3864
  %3891 = vst [vmem:[%s2 + $0x18] sm:$0xff] %v3866
  %3892 = vst [vmem:[%s2 + $0x20] sm:$0xff] %v3870
  %3893 = vst [vmem:[%s2 + $0x28] sm:$0xff] %v3872
  %3894 = vst [vmem:[%s2 + $0x30] sm:$0xff] %v3874
  %3895 = vst [vmem:[%s2 + $0x38] sm:$0xff] %v3876
  %3896 = vst [vmem:[%s2 + $0x40] sm:$0xff] %v3880
  %3897 = vst [vmem:[%s2 + $0x48] sm:$0xff] %v3882
  %3898 = vst [vmem:[%s2 + $0x50] sm:$0xff] %v3884
  %3899 = vst [vmem:[%s2 + $0x58] sm:$0xff] %v3886
  // Predicated region
  $region10: #{conv2d_3x3.1} parent=0 // pred_check
    _
  $region11: #{conv2d_3x3.1} parent=0 // pred_check_branch
    %3901 = sbr.rel (0) target = $region13
  $region12: #{conv2d_3x3.1} parent=0 // pred_region
    _
  $region13: #{conv2d_3x3.1} parent=0 // pred_fallthru
    _
  // Predicated region
  $region14: #{conv2d_3x3.1} parent=0 // pred_check
    _
  $region15: #{conv2d_3x3.1} parent=0 // pred_check_branch
    %3903 = sbr.rel (0) target = $region17
  $region16: #{conv2d_3x3.1} parent=0 // pred_region
    _
  $region17: #{conv2d_3x3.1} parent=0 // pred_fallthru
    _

</llo_original>
